<compile_context>
chip_gen: v6e
topology: v6e:2x2x1
jax: 0.10.0
libtpu: 0.0.40
codegen_flags: <defaults>
</compile_context>

<pallas_src>
import functools
import numpy as np
import jax
import jax.numpy as jnp
from jax import lax
from jax.experimental import pallas as pl
from jax.experimental.pallas import tpu as pltpu

KSIZE = 5
PAD = 2


def _round_up(v, m):
    return ((v + m - 1) // m) * m


# ----------------------------------------------------------------------------
# elementwise helpers (exp/abs/mul/add/where/tanh only -> lower cleanly)
# ----------------------------------------------------------------------------
def _erf(x):
    # Abramowitz & Stegun 7.1.26, |err| < 1.5e-7
    a1, a2, a3, a4, a5 = (0.254829592, -0.284496736, 1.421413741,
                          -1.453152027, 1.061405429)
    p = 0.3275911
    s = jnp.where(x >= 0.0, 1.0, -1.0)
    ax = jnp.abs(x)
    t = 1.0 / (1.0 + p * ax)
    poly = ((((a5 * t + a4) * t + a3) * t + a2) * t + a1) * t
    return s * (1.0 - poly * jnp.exp(-ax * ax))


def _gelu(x):
    # matches nn.GELU() default (exact / erf formulation)
    return 0.5 * x * (1.0 + _erf(x * (1.0 / np.sqrt(2.0))))


def _sigmoid(x):
    # tanh-based logistic (EUP tanh unit), numerically stable
    return 0.5 * (jnp.tanh(0.5 * x) + 1.0)


def _gate_act(gates, h):   # PyTorch gate order: i, f, g, o
    i = _sigmoid(gates[:, 0:h])
    f = _sigmoid(gates[:, h:2 * h])
    g = jnp.tanh(gates[:, 2 * h:3 * h])
    o = _sigmoid(gates[:, 3 * h:4 * h])
    return i, f, g, o


# ----------------------------------------------------------------------------
# Pallas kernel: one batch block (bt elements) per grid step
# ----------------------------------------------------------------------------
def asset_encoder_kernel(x_ref, w1_ref, b1_ref, w2_ref, b2_ref,
                         wihf_ref, whhf_ref, bf_ref,
                         wihb_ref, bb_ref,
                         wout_ref, bout_ref,
                         out_ref,
                         pad2, y2_s, p2_s, gih_s,
                         *, bt, t_len, hidden):
    T2, T4, H = t_len // 2, t_len // 4, hidden
    m2, m4 = bt * T2, bt * T4
    mm_dtype = w2_ref.dtype            # matmul operand dtype (f32 or bf16)

    # ---- Conv1d(Cin->H, k=5, p=2) + GELU + MaxPool(2) as ONE matmul ----
    # the wrapper packed [even | odd] receptive fields along lanes and the
    # weight is block-diagonal, so rows are already pooled indices (b*T2 + s).
    y1p = jnp.dot(x_ref[...], w1_ref[...],
                  preferred_element_type=jnp.float32) + b1_ref[...]
    y1p = _gelu(y1p)                                           # (m2, 2H)
    p1 = jnp.maximum(y1p[:, 0:H], y1p[:, H:2 * H])             # (m2, H) pooled

    # ---- Conv1d(H->H, k=5, p=2) + GELU: padded scratch + 5 tap matmuls ----
    # halo / cross-batch-element taps are zeroed with iota masks computed
    # in-kernel (true select, so the never-initialized halo cannot propagate).
    p1_mm = p1.astype(mm_dtype)
    pad2[pl.ds(PAD, m2), :] = p1_mm
    pos = lax.broadcasted_iota(jnp.int32, (m2, 1), 0) % T2     # time idx in element
    acc = jnp.dot(p1_mm, w2_ref[PAD], preferred_element_type=jnp.float32)
    for k in range(KSIZE):
        if k == PAD:
            continue
        shift = k - PAD
        valid = jnp.logical_and(pos + shift >= 0, pos + shift < T2)
        tap = pad2[pl.ds(k, m2), :]
        tap = jnp.where(valid, tap, jnp.zeros_like(tap))
        acc = acc + jnp.dot(tap, w2_ref[k], preferred_element_type=jnp.float32)
    y2_s[...] = _gelu(acc + b2_ref[...])                       # (m2, H)

    # ---- MaxPool(2): stride-2 row max -> batch-major LSTM input ----
    p2 = jnp.maximum(y2_s[pl.ds(0, m4, 2), :],
                     y2_s[pl.ds(1, m4, 2), :])                 # (m4, H), row = b*T4 + t
    p2_mm = p2.astype(mm_dtype)
    p2_s[...] = p2_mm

    # ---- forward LSTM: ih gates for ALL timesteps hoisted into one matmul ----
    gih_s[...] = jnp.dot(p2_mm, wihf_ref[...],
                         preferred_element_type=jnp.float32) + bf_ref[...]

    whh = whhf_ref[...]
    h = jnp.zeros((bt, H), jnp.float32)
    c = jnp.zeros((bt, H), jnp.float32)
    for t in range(T4):                      # static trip count -> fully unrolled
        gates = gih_s[pl.ds(t, bt, T4), :]   # rows b*T4 + t for all b
        if t > 0:                            # h == 0 at t == 0, hh matmul skipped
            gates = gates + jnp.dot(h.astype(mm_dtype), whh,
                                    preferred_element_type=jnp.float32)
        i, f, g, o = _gate_act(gates, H)
        c = f * c + i * g
        h = o * jnp.tanh(c)

    # ---- backward LSTM: lstm_out[:, -1, H:] of a BiLSTM == ONE cell step on
    # the last input with zero initial state (valid only for last-step readout).
    x_last = p2_s[pl.ds(T4 - 1, bt, T4), :]
    gates_b = jnp.dot(x_last, wihb_ref[...],
                      preferred_element_type=jnp.float32) + bb_ref[...]
    ib, _fb, gb, ob = _gate_act(gates_b, H)
    h_b = ob * jnp.tanh(ib * gb)             # c0 = 0  =>  c = i*g

    # ---- fused output projection: concat(h_fwd, h_bwd) @ (2H, H) + b ----
    hc = jnp.concatenate([h, h_b], axis=1).astype(mm_dtype)    # (bt, 2H)
    out_ref[...] = (jnp.dot(hc, wout_ref[...],
                            preferred_element_type=jnp.float32)
                    + bout_ref[...]).astype(out_ref.dtype)


# ----------------------------------------------------------------------------
# wrapper
# ----------------------------------------------------------------------------
def asset_encoder_forward(x, kp, *, block_batch=32, matmul_dtype=jnp.float32):
    """block_batch: batch elements per grid step (sweep 32..64; vreg pressure of
    the unrolled LSTM grows with it).  matmul_dtype=jnp.bfloat16 is the
    recommended production setting on v6e/v7x (elementwise math stays f32)."""
    B, T, Cin = x.shape
    assert T % 4 == 0, "window_size must be divisible by 4"
    H = kp["b2"].shape[-1]
    T2, T4 = T // 2, T // 4

    bt = max(8, min(_round_up(block_batch, 8), _round_up(B, 8)))
    B_pad = _round_up(B, bt)
    x = x.astype(jnp.float32)
    if B_pad != B:
        x = jnp.concatenate(
            [x, jnp.zeros((B_pad - B, T, Cin), jnp.float32)], axis=0)

    # conv1 im2col (layout plumbing, done once by XLA) with the two MaxPool
    # partners (even/odd time) packed along lanes -> conv1+pool1 become one
    # lane-dense matmul inside the kernel.
    xp = jnp.pad(x, ((0, 0), (PAD, PAD), (0, 0)))
    cols = jnp.concatenate([xp[:, k:k + T, :] for k in range(KSIZE)],
                           axis=-1)                               # (B_pad, T, K*Cin)
    x2d = cols.reshape(B_pad * T2, 2 * KSIZE * Cin).astype(matmul_dtype)

    def mm(a):
        return a.astype(matmul_dtype)

    weights = (mm(kp["w1p"]), kp["b1p"], mm(kp["w2"]), kp["b2"],
               mm(kp["wih_f"]), mm(kp["whh_f"]), kp["b_f"],
               mm(kp["wih_b"]), kp["b_b"],
               mm(kp["wout"]), kp["bout"])

    kernel = functools.partial(asset_encoder_kernel, bt=bt, t_len=T, hidden=H)

    def wspec(shape):
        nd = len(shape)

        def imap(b):
            return (0,) * nd

        return pl.BlockSpec(shape, imap)

    in_specs = [
        pl.BlockSpec((bt * T2, 2 * KSIZE * Cin), lambda b: (b, 0)),   # x (im2col)
        wspec((2 * KSIZE * Cin, 2 * H)), wspec((1, 2 * H)),           # conv1 (pool-packed)
        wspec((KSIZE, H, H)), wspec((1, H)),                          # conv2
        wspec((H, 4 * H)), wspec((H, 4 * H)), wspec((1, 4 * H)),      # lstm fwd (fused gates)
        wspec((H, 4 * H)), wspec((1, 4 * H)),                         # lstm bwd (ih only)
        wspec((2 * H, H)), wspec((1, H)),                             # output proj (fused)
    ]
    scratch_shapes = [
        pltpu.VMEM((bt * T2 + 2 * PAD, H), matmul_dtype),  # pad2 (halo masked, never zeroed)
        pltpu.VMEM((bt * T2, H), jnp.float32),             # conv2 output (pool-2 reads)
        pltpu.VMEM((bt * T4, H), matmul_dtype),            # pooled LSTM input
        pltpu.VMEM((bt * T4, 4 * H), jnp.float32),         # hoisted ih gates (fwd)
    ]
    grid_spec = pltpu.PrefetchScalarGridSpec(
        num_scalar_prefetch=0,
        grid=(B_pad // bt,),
        in_specs=in_specs,
        out_specs=pl.BlockSpec((bt, H), lambda b: (b, 0)),
        scratch_shapes=scratch_shapes,
    )

    # advisory cost estimate + explicit VMEM budget (cheap insurance)
    mm_bytes = np.dtype(matmul_dtype).itemsize
    flops = 2 * B_pad * (
        T2 * (2 * KSIZE * Cin) * (2 * H)            # conv1 (pool-packed)
        + T2 * KSIZE * H * H                        # conv2
        + T4 * H * 4 * H + (T4 - 1) * H * 4 * H     # lstm ih (hoisted) + hh
        + H * 4 * H                                 # backward single step
        + 2 * H * H)                                # output projection
    transcendentals = B_pad * (3 * T2 * H + 5 * (T4 + 1) * H + 2 * T4 * H)
    bytes_accessed = (B_pad * T2 * 2 * KSIZE * Cin * mm_bytes + B_pad * H * 4
                      + sum(int(np.prod(w.shape)) * np.dtype(w.dtype).itemsize
                            for w in weights))
    cost = pl.CostEstimate(flops=int(flops),
                           transcendentals=int(transcendentals),
                           bytes_accessed=int(bytes_accessed))

    def lane_padded_bytes(rows, lanes, itemsize):
        return _round_up(rows, 8) * _round_up(lanes, 128) * itemsize

    vmem_est = (
        2 * lane_padded_bytes(bt * T2, 2 * KSIZE * Cin, mm_bytes)   # x (double-buffered)
        + 2 * lane_padded_bytes(bt, H, 4)                           # out block
        + lane_padded_bytes(bt * T2 + 2 * PAD, H, mm_bytes)
        + lane_padded_bytes(bt * T2, H, 4)
        + lane_padded_bytes(bt * T4, H, mm_bytes)
        + lane_padded_bytes(bt * T4, 4 * H, 4)
        + 2 * 1024 * 1024)                                          # weights + headroom
    vmem_limit = int(min(max(2 * vmem_est, 16 * 2 ** 20), 64 * 2 ** 20))

    out = pl.pallas_call(
        kernel,
        out_shape=jax.ShapeDtypeStruct((B_pad, H), jnp.float32),
        grid_spec=grid_spec,
        compiler_params=pltpu.CompilerParams(
            dimension_semantics=("parallel",),      # batch blocks are independent
            vmem_limit_bytes=vmem_limit),
        cost_estimate=cost,
    )(x2d, *weights)
    return out[:B]


# ----------------------------------------------------------------------------
# deterministic parameter init (PyTorch layouts -> kernel layouts)
# ----------------------------------------------------------------------------
def init_params(key, input_dim, hidden_dim):
    H, Cin = hidden_dim, input_dim
    keys = jax.random.split(key, 14)

    def rnd(k, shape, scale=0.2):
        return scale * jax.random.normal(k, shape, jnp.float32)

    pt = {
        "conv1_w": rnd(keys[0], (H, Cin, KSIZE)),
        "conv1_b": rnd(keys[1], (H,)),
        "conv2_w": rnd(keys[2], (H, H, KSIZE)),
        "conv2_b": rnd(keys[3], (H,)),
        "wih_f": rnd(keys[4], (4 * H, H)),
        "whh_f": rnd(keys[5], (4 * H, H)),
        "bih_f": rnd(keys[6], (4 * H,)),
        "bhh_f": rnd(keys[7], (4 * H,)),
        "wih_b": rnd(keys[8], (4 * H, H)),
        "whh_b": rnd(keys[9], (4 * H, H)),   # unused by kernel (last-step readout only)
        "bih_b": rnd(keys[10], (4 * H,)),
        "bhh_b": rnd(keys[11], (4 * H,)),
        "lin_w": rnd(keys[12], (H, 2 * H)),
        "lin_b": rnd(keys[13], (H,)),
    }

    # conv1 weight in im2col layout (row = k*Cin + c), block-diagonal so the
    # [even | odd] MaxPool partners come out packed along lanes.
    w1_km = jnp.transpose(pt["conv1_w"], (2, 1, 0)).reshape(KSIZE * Cin, H)
    z = jnp.zeros_like(w1_km)
    w1p = jnp.concatenate([jnp.concatenate([w1_km, z], axis=1),
                           jnp.concatenate([z, w1_km], axis=1)], axis=0)

    kp = {
        "w1p": w1p,                                              # (2*K*Cin, 2H)
        "b1p": jnp.concatenate([pt["conv1_b"], pt["conv1_b"]])[None, :],
        "w2": jnp.transpose(pt["conv2_w"], (2, 1, 0)),           # (K, H, H)
        "b2": pt["conv2_b"][None, :],
        "wih_f": jnp.transpose(pt["wih_f"]),                     # (H, 4H), gates i,f,g,o
        "whh_f": jnp.transpose(pt["whh_f"]),
        "b_f": (pt["bih_f"] + pt["bhh_f"])[None, :],
        "wih_b": jnp.transpose(pt["wih_b"]),
        "b_b": (pt["bih_b"] + pt["bhh_b"])[None, :],
        "wout": jnp.transpose(pt["lin_w"]),                      # (2H, H)
        "bout": pt["lin_b"][None, :],
    }
    return pt, kp


# ----------------------------------------------------------------------------
# pure-JAX reference (mirrors the PyTorch forward exactly)
# ----------------------------------------------------------------------------
def reference_forward(x, pt):
    H = pt["conv1_b"].shape[0]

    def conv1d(xs, w, b):  # xs (B,T,C) ; w (D,C,K) PyTorch layout
        K = w.shape[2]
        Tt = xs.shape[1]
        xpad = jnp.pad(xs, ((0, 0), (PAD, PAD), (0, 0)))
        acc = jnp.zeros((xs.shape[0], Tt, w.shape[0]), jnp.float32)
        for k in range(K):
            acc = acc + jnp.einsum("btc,dc->btd", xpad[:, k:k + Tt, :], w[:, :, k])
        return acc + b[None, None, :]

    def gelu(v):
        return 0.5 * v * (1.0 + jax.scipy.special.erf(v / jnp.sqrt(2.0)))

    def pool(v):
        Bb, Tt, D = v.shape
        return v.reshape(Bb, Tt // 2, 2, D).max(axis=2)

    y = pool(gelu(conv1d(x, pt["conv1_w"], pt["conv1_b"])))
    y = pool(gelu(conv1d(y, pt["conv2_w"], pt["conv2_b"])))

    def lstm_dir(seq, wih, whh, bih, bhh):
        Bb, Tt, _ = seq.shape
        h = jnp.zeros((Bb, H), jnp.float32)
        c = jnp.zeros((Bb, H), jnp.float32)
        outs = []
        for t in range(Tt):
            gates = seq[:, t] @ wih.T + h @ whh.T + bih + bhh
            i, f, g, o = jnp.split(gates, 4, axis=1)
            i, f, o = jax.nn.sigmoid(i), jax.nn.sigmoid(f), jax.nn.sigmoid(o)
            g = jnp.tanh(g)
            c = f * c + i * g
            h = o * jnp.tanh(c)
            outs.append(h)
        return jnp.stack(outs, axis=1)

    fwd = lstm_dir(y, pt["wih_f"], pt["whh_f"], pt["bih_f"], pt["bhh_f"])
    bwd = lstm_dir(y[:, ::-1], pt["wih_b"], pt["whh_b"],
                   pt["bih_b"], pt["bhh_b"])[:, ::-1]
    last = jnp.concatenate([fwd, bwd], axis=-1)[:, -1, :]
    return last @ pt["lin_w"].T + pt["lin_b"]


if __name__ == "__main__":
    B, T, Cin, H = 2, 16, 4, 32          # batch, window_size, input_dim, hidden_dim
    key = jax.random.PRNGKey(0)
    kx, kp_key = jax.random.split(key)
    x = jax.random.normal(kx, (B, T, Cin), jnp.float32)
    pt_params, kernel_params = init_params(kp_key, Cin, H)

    ref = np.asarray(reference_forward(x, pt_params))

    # exact-semantics path (f32 matmul operands)
    fwd_f32 = jax.jit(functools.partial(asset_encoder_forward,
                                        matmul_dtype=jnp.float32))
    out_f32 = np.asarray(jax.block_until_ready(fwd_f32(x, kernel_params)))
    if not np.allclose(out_f32, ref, atol=2e-4, rtol=2e-4):
        raise AssertionError("f32 path mismatch vs reference, max abs diff = "
                             f"{np.max(np.abs(out_f32 - ref))}")

    # bf16 matmul-operand path (recommended perf config on v6e/v7x); looser
    # tolerance because matmul operands are rounded to bf16.
    fwd_bf16 = jax.jit(functools.partial(asset_encoder_forward,
                                         matmul_dtype=jnp.bfloat16))
    out_bf16 = np.asarray(jax.block_until_ready(fwd_bf16(x, kernel_params)))
    if not np.allclose(out_bf16, ref, atol=1e-1, rtol=1e-1):
        raise AssertionError("bf16 path mismatch vs reference, max abs diff = "
                             f"{np.max(np.abs(out_bf16 - ref))}")

    print("KERNEL_OK")
</pallas_src>

<mosaic_0001>
module attributes {stable_mosaic.version = 11 : i64} {
  func.func @asset_encoder_kernel(%arg0: i32, %arg1: memref<64x40xf32, #tpu.memory_space<vmem>>, %arg2: memref<40x64xf32, #tpu.memory_space<vmem>>, %arg3: memref<1x64xf32, #tpu.memory_space<vmem>>, %arg4: memref<5x32x32xf32, #tpu.memory_space<vmem>>, %arg5: memref<1x32xf32, #tpu.memory_space<vmem>>, %arg6: memref<32x128xf32, #tpu.memory_space<vmem>>, %arg7: memref<32x128xf32, #tpu.memory_space<vmem>>, %arg8: memref<1x128xf32, #tpu.memory_space<vmem>>, %arg9: memref<32x128xf32, #tpu.memory_space<vmem>>, %arg10: memref<1x128xf32, #tpu.memory_space<vmem>>, %arg11: memref<64x32xf32, #tpu.memory_space<vmem>>, %arg12: memref<1x32xf32, #tpu.memory_space<vmem>>, %arg13: memref<8x32xf32, #tpu.memory_space<vmem>>, %arg14: memref<68x32xf32, #tpu.memory_space<vmem>>, %arg15: memref<64x32xf32, #tpu.memory_space<vmem>>, %arg16: memref<32x32xf32, #tpu.memory_space<vmem>>, %arg17: memref<32x128xf32, #tpu.memory_space<vmem>>) attributes {dimension_semantics = [#tpu.dimension_semantics<parallel>], iteration_bounds = array<i64: 1>, scalar_prefetch = 0 : i64, scratch_operands = 4 : i64, tpu.core_type = #tpu.core_type<tc>, window_params = [{transform_indices = @transform_0, window_bounds = array<i64: 64, 40>}, {pipeline_mode = #tpu.pipeline_mode<synchronous>, transform_indices = @transform_1, window_bounds = array<i64: 40, 64>}, {pipeline_mode = #tpu.pipeline_mode<synchronous>, transform_indices = @transform_2, window_bounds = array<i64: 1, 64>}, {pipeline_mode = #tpu.pipeline_mode<synchronous>, transform_indices = @transform_3, window_bounds = array<i64: 5, 32, 32>}, {pipeline_mode = #tpu.pipeline_mode<synchronous>, transform_indices = @transform_4, window_bounds = array<i64: 1, 32>}, {pipeline_mode = #tpu.pipeline_mode<synchronous>, transform_indices = @transform_5, window_bounds = array<i64: 32, 128>}, {pipeline_mode = #tpu.pipeline_mode<synchronous>, transform_indices = @transform_6, window_bounds = array<i64: 32, 128>}, {pipeline_mode = #tpu.pipeline_mode<synchronous>, transform_indices = @transform_7, window_bounds = array<i64: 1, 128>}, {pipeline_mode = #tpu.pipeline_mode<synchronous>, transform_indices = @transform_8, window_bounds = array<i64: 32, 128>}, {pipeline_mode = #tpu.pipeline_mode<synchronous>, transform_indices = @transform_9, window_bounds = array<i64: 1, 128>}, {pipeline_mode = #tpu.pipeline_mode<synchronous>, transform_indices = @transform_10, window_bounds = array<i64: 64, 32>}, {pipeline_mode = #tpu.pipeline_mode<synchronous>, transform_indices = @transform_11, window_bounds = array<i64: 1, 32>}, {transform_indices = @transform_12, window_bounds = array<i64: 8, 32>}]} {
    %c0 = arith.constant 0 : index
    %c0_0 = arith.constant 0 : index
    %0 = vector.load %arg1[%c0, %c0_0] : memref<64x40xf32, #tpu.memory_space<vmem>>, vector<64x40xf32>
    %c0_1 = arith.constant 0 : index
    %c0_2 = arith.constant 0 : index
    %1 = vector.load %arg2[%c0_1, %c0_2] : memref<40x64xf32, #tpu.memory_space<vmem>>, vector<40x64xf32>
    %cst = arith.constant dense<0.000000e+00> : vector<64x64xf32>
    %2 = tpu.matmul %0, %1, %cst {dimension_numbers = #tpu.dot_dimension_numbers<[1], [0], [0], [1], [0, 0, 1, 1], [], []>} : vector<64x40xf32>, vector<40x64xf32>, vector<64x64xf32> -> vector<64x64xf32>
    %c0_3 = arith.constant 0 : index
    %c0_4 = arith.constant 0 : index
    %3 = vector.load %arg3[%c0_3, %c0_4] : memref<1x64xf32, #tpu.memory_space<vmem>>, vector<1x64xf32>
    %4 = vector.broadcast %3 : vector<1x64xf32> to vector<64x64xf32>
    %5 = arith.addf %2, %4 : vector<64x64xf32>
    %cst_5 = arith.constant 5.000000e-01 : f32
    %6 = vector.broadcast %cst_5 : f32 to vector<64x64xf32>
    %7 = arith.mulf %6, %5 : vector<64x64xf32>
    %cst_6 = arith.constant 0.707106769 : f32
    %8 = vector.broadcast %cst_6 : f32 to vector<64x64xf32>
    %9 = arith.mulf %5, %8 : vector<64x64xf32>
    %cst_7 = arith.constant 0.000000e+00 : f32
    %10 = vector.broadcast %cst_7 : f32 to vector<64x64xf32>
    %11 = arith.cmpf oge, %9, %10 : vector<64x64xf32>
    %cst_8 = arith.constant 1.000000e+00 : f32
    %cst_9 = arith.constant -1.000000e+00 : f32
    %12 = vector.broadcast %cst_8 : f32 to vector<64x64xf32>
    %13 = vector.broadcast %cst_9 : f32 to vector<64x64xf32>
    %14 = arith.select %11, %12, %13 : vector<64x64xi1>, vector<64x64xf32>
    %15 = math.absf %9 : vector<64x64xf32>
    %cst_10 = arith.constant 0.327591091 : f32
    %16 = vector.broadcast %cst_10 : f32 to vector<64x64xf32>
    %17 = arith.mulf %16, %15 : vector<64x64xf32>
    %cst_11 = arith.constant 1.000000e+00 : f32
    %18 = vector.broadcast %cst_11 : f32 to vector<64x64xf32>
    %19 = arith.addf %18, %17 : vector<64x64xf32>
    %cst_12 = arith.constant 1.000000e+00 : f32
    %20 = vector.broadcast %cst_12 : f32 to vector<64x64xf32>
    %21 = arith.divf %20, %19 : vector<64x64xf32>
    %cst_13 = arith.constant 1.06140542 : f32
    %22 = vector.broadcast %cst_13 : f32 to vector<64x64xf32>
    %23 = arith.mulf %22, %21 : vector<64x64xf32>
    %cst_14 = arith.constant -1.45315206 : f32
    %24 = vector.broadcast %cst_14 : f32 to vector<64x64xf32>
    %25 = arith.addf %23, %24 : vector<64x64xf32>
    %26 = arith.mulf %25, %21 : vector<64x64xf32>
    %cst_15 = arith.constant 1.42141378 : f32
    %27 = vector.broadcast %cst_15 : f32 to vector<64x64xf32>
    %28 = arith.addf %26, %27 : vector<64x64xf32>
    %29 = arith.mulf %28, %21 : vector<64x64xf32>
    %cst_16 = arith.constant -0.284496725 : f32
    %30 = vector.broadcast %cst_16 : f32 to vector<64x64xf32>
    %31 = arith.addf %29, %30 : vector<64x64xf32>
    %32 = arith.mulf %31, %21 : vector<64x64xf32>
    %cst_17 = arith.constant 0.254829586 : f32
    %33 = vector.broadcast %cst_17 : f32 to vector<64x64xf32>
    %34 = arith.addf %32, %33 : vector<64x64xf32>
    %35 = arith.mulf %34, %21 : vector<64x64xf32>
    %cst_18 = arith.constant 0.000000e+00 : f32
    %36 = vector.broadcast %cst_18 : f32 to vector<64x64xf32>
    %37 = arith.subf %36, %15 : vector<64x64xf32>
    %38 = arith.mulf %37, %15 : vector<64x64xf32>
    %39 = math.exp %38 : vector<64x64xf32>
    %40 = arith.mulf %35, %39 : vector<64x64xf32>
    %cst_19 = arith.constant 1.000000e+00 : f32
    %41 = vector.broadcast %cst_19 : f32 to vector<64x64xf32>
    %42 = arith.subf %41, %40 : vector<64x64xf32>
    %43 = arith.mulf %14, %42 : vector<64x64xf32>
    %cst_20 = arith.constant 1.000000e+00 : f32
    %44 = vector.broadcast %cst_20 : f32 to vector<64x64xf32>
    %45 = arith.addf %44, %43 : vector<64x64xf32>
    %46 = arith.mulf %7, %45 : vector<64x64xf32>
    %47 = vector.extract_strided_slice %46 {offsets = [0, 0], sizes = [64, 32], strides = [1, 1]} : vector<64x64xf32> to vector<64x32xf32>
    %48 = vector.extract_strided_slice %46 {offsets = [0, 32], sizes = [64, 32], strides = [1, 1]} : vector<64x64xf32> to vector<64x32xf32>
    %49 = arith.maximumf %47, %48 : vector<64x32xf32>
    %c2 = arith.constant 2 : index
    %c0_21 = arith.constant 0 : index
    %50 = vector.load %arg14[%c2, %c0_21] : memref<68x32xf32, #tpu.memory_space<vmem>>, vector<64x32xf32>
    tpu.vector_store %arg14[%c2, %c0_21], %49 {strides = array<i32>} : memref<68x32xf32, #tpu.memory_space<vmem>>, vector<64x32xf32>,
    %51 = tpu.iota {dimensions = array<i32: 0>} : vector<64x1xi32>
    %c8_i32 = arith.constant 8 : i32
    %c0_i32 = arith.constant 0 : i32
    %52 = arith.cmpi eq, %c8_i32, %c0_i32 : i32
    %c1_i32 = arith.constant 1 : i32
    %53 = arith.select %52, %c1_i32, %c8_i32 : i32
    %54 = vector.broadcast %53 : i32 to vector<64x1xi32>
    %55 = arith.remsi %51, %54 : vector<64x1xi32>
    %c0_i32_22 = arith.constant 0 : i32
    %56 = vector.broadcast %c0_i32_22 : i32 to vector<64x1xi32>
    %57 = arith.cmpi ne, %55, %56 : vector<64x1xi32>
    %c0_i32_23 = arith.constant 0 : i32
    %58 = vector.broadcast %c0_i32_23 : i32 to vector<64x1xi32>
    %59 = arith.cmpi slt, %55, %58 : vector<64x1xi32>
    %c0_i32_24 = arith.constant 0 : i32
    %60 = arith.cmpi slt, %53, %c0_i32_24 : i32
    %61 = vector.broadcast %60 : i1 to vector<64x1xi1>
    %62 = vector.broadcast %61 : vector<64x1xi1> to vector<64x1xi1>
    %63 = arith.xori %59, %62 : vector<64x1xi1>
    %64 = arith.andi %63, %57 : vector<64x1xi1>
    %65 = vector.broadcast %53 : i32 to vector<64x1xi32>
    %66 = arith.addi %55, %65 : vector<64x1xi32>
    %67 = arith.select %64, %66, %55 : vector<64x1xi1>, vector<64x1xi32>
    %c2_25 = arith.constant 2 : index
    %c0_26 = arith.constant 0 : index
    %c0_27 = arith.constant 0 : index
    %68 = vector.load %arg4[%c2_25, %c0_26, %c0_27] : memref<5x32x32xf32, #tpu.memory_space<vmem>>, vector<1x32x32xf32>
    %69 = vector.shape_cast %68 : vector<1x32x32xf32> to vector<32x32xf32>
    %cst_28 = arith.constant dense<0.000000e+00> : vector<64x32xf32>
    %70 = tpu.matmul %49, %69, %cst_28 {dimension_numbers = #tpu.dot_dimension_numbers<[1], [0], [0], [1], [0, 0, 1, 1], [], []>} : vector<64x32xf32>, vector<32x32xf32>, vector<64x32xf32> -> vector<64x32xf32>
    %c-2_i32 = arith.constant -2 : i32
    %71 = vector.broadcast %c-2_i32 : i32 to vector<64x1xi32>
    %72 = arith.addi %67, %71 : vector<64x1xi32>
    %c0_i32_29 = arith.constant 0 : i32
    %73 = vector.broadcast %c0_i32_29 : i32 to vector<64x1xi32>
    %74 = arith.cmpi sge, %72, %73 : vector<64x1xi32>
    %c-2_i32_30 = arith.constant -2 : i32
    %75 = vector.broadcast %c-2_i32_30 : i32 to vector<64x1xi32>
    %76 = arith.addi %67, %75 : vector<64x1xi32>
    %c8_i32_31 = arith.constant 8 : i32
    %77 = vector.broadcast %c8_i32_31 : i32 to vector<64x1xi32>
    %78 = arith.cmpi slt, %76, %77 : vector<64x1xi32>
    %79 = arith.andi %74, %78 : vector<64x1xi1>
    %c0_32 = arith.constant 0 : index
    %c0_33 = arith.constant 0 : index
    %80 = vector.load %arg14[%c0_32, %c0_33] : memref<68x32xf32, #tpu.memory_space<vmem>>, vector<64x32xf32>
    %cst_34 = arith.constant 0.000000e+00 : f32
    %81 = vector.broadcast %cst_34 : f32 to vector<64x32xf32>
    %82 = vector.shape_cast %79 : vector<64x1xi1> to vector<64x1xi1>
    %83 = vector.broadcast %82 : vector<64x1xi1> to vector<64x32xi1>
    %84 = arith.select %83, %80, %81 : vector<64x32xi1>, vector<64x32xf32>
    %c0_35 = arith.constant 0 : index
    %c0_36 = arith.constant 0 : index
    %c0_37 = arith.constant 0 : index
    %85 = vector.load %arg4[%c0_35, %c0_36, %c0_37] : memref<5x32x32xf32, #tpu.memory_space<vmem>>, vector<1x32x32xf32>
    %86 = vector.shape_cast %85 : vector<1x32x32xf32> to vector<32x32xf32>
    %cst_38 = arith.constant dense<0.000000e+00> : vector<64x32xf32>
    %87 = tpu.matmul %84, %86, %cst_38 {dimension_numbers = #tpu.dot_dimension_numbers<[1], [0], [0], [1], [0, 0, 1, 1], [], []>} : vector<64x32xf32>, vector<32x32xf32>, vector<64x32xf32> -> vector<64x32xf32>
    %88 = arith.addf %70, %87 : vector<64x32xf32>
    %c-1_i32 = arith.constant -1 : i32
    %89 = vector.broadcast %c-1_i32 : i32 to vector<64x1xi32>
    %90 = arith.addi %67, %89 : vector<64x1xi32>
    %c0_i32_39 = arith.constant 0 : i32
    %91 = vector.broadcast %c0_i32_39 : i32 to vector<64x1xi32>
    %92 = arith.cmpi sge, %90, %91 : vector<64x1xi32>
    %c-1_i32_40 = arith.constant -1 : i32
    %93 = vector.broadcast %c-1_i32_40 : i32 to vector<64x1xi32>
    %94 = arith.addi %67, %93 : vector<64x1xi32>
    %c8_i32_41 = arith.constant 8 : i32
    %95 = vector.broadcast %c8_i32_41 : i32 to vector<64x1xi32>
    %96 = arith.cmpi slt, %94, %95 : vector<64x1xi32>
    %97 = arith.andi %92, %96 : vector<64x1xi1>
    %c1 = arith.constant 1 : index
    %c0_42 = arith.constant 0 : index
    %98 = vector.load %arg14[%c1, %c0_42] : memref<68x32xf32, #tpu.memory_space<vmem>>, vector<64x32xf32>
    %cst_43 = arith.constant 0.000000e+00 : f32
    %99 = vector.broadcast %cst_43 : f32 to vector<64x32xf32>
    %100 = vector.shape_cast %97 : vector<64x1xi1> to vector<64x1xi1>
    %101 = vector.broadcast %100 : vector<64x1xi1> to vector<64x32xi1>
    %102 = arith.select %101, %98, %99 : vector<64x32xi1>, vector<64x32xf32>
    %c1_44 = arith.constant 1 : index
    %c0_45 = arith.constant 0 : index
    %c0_46 = arith.constant 0 : index
    %103 = vector.load %arg4[%c1_44, %c0_45, %c0_46] : memref<5x32x32xf32, #tpu.memory_space<vmem>>, vector<1x32x32xf32>
    %104 = vector.shape_cast %103 : vector<1x32x32xf32> to vector<32x32xf32>
    %cst_47 = arith.constant dense<0.000000e+00> : vector<64x32xf32>
    %105 = tpu.matmul %102, %104, %cst_47 {dimension_numbers = #tpu.dot_dimension_numbers<[1], [0], [0], [1], [0, 0, 1, 1], [], []>} : vector<64x32xf32>, vector<32x32xf32>, vector<64x32xf32> -> vector<64x32xf32>
    %106 = arith.addf %88, %105 : vector<64x32xf32>
    %c1_i32_48 = arith.constant 1 : i32
    %107 = vector.broadcast %c1_i32_48 : i32 to vector<64x1xi32>
    %108 = arith.addi %67, %107 : vector<64x1xi32>
    %c0_i32_49 = arith.constant 0 : i32
    %109 = vector.broadcast %c0_i32_49 : i32 to vector<64x1xi32>
    %110 = arith.cmpi sge, %108, %109 : vector<64x1xi32>
    %c1_i32_50 = arith.constant 1 : i32
    %111 = vector.broadcast %c1_i32_50 : i32 to vector<64x1xi32>
    %112 = arith.addi %67, %111 : vector<64x1xi32>
    %c8_i32_51 = arith.constant 8 : i32
    %113 = vector.broadcast %c8_i32_51 : i32 to vector<64x1xi32>
    %114 = arith.cmpi slt, %112, %113 : vector<64x1xi32>
    %115 = arith.andi %110, %114 : vector<64x1xi1>
    %c3 = arith.constant 3 : index
    %c0_52 = arith.constant 0 : index
    %116 = vector.load %arg14[%c3, %c0_52] : memref<68x32xf32, #tpu.memory_space<vmem>>, vector<64x32xf32>
    %cst_53 = arith.constant 0.000000e+00 : f32
    %117 = vector.broadcast %cst_53 : f32 to vector<64x32xf32>
    %118 = vector.shape_cast %115 : vector<64x1xi1> to vector<64x1xi1>
    %119 = vector.broadcast %118 : vector<64x1xi1> to vector<64x32xi1>
    %120 = arith.select %119, %116, %117 : vector<64x32xi1>, vector<64x32xf32>
    %c3_54 = arith.constant 3 : index
    %c0_55 = arith.constant 0 : index
    %c0_56 = arith.constant 0 : index
    %121 = vector.load %arg4[%c3_54, %c0_55, %c0_56] : memref<5x32x32xf32, #tpu.memory_space<vmem>>, vector<1x32x32xf32>
    %122 = vector.shape_cast %121 : vector<1x32x32xf32> to vector<32x32xf32>
    %cst_57 = arith.constant dense<0.000000e+00> : vector<64x32xf32>
    %123 = tpu.matmul %120, %122, %cst_57 {dimension_numbers = #tpu.dot_dimension_numbers<[1], [0], [0], [1], [0, 0, 1, 1], [], []>} : vector<64x32xf32>, vector<32x32xf32>, vector<64x32xf32> -> vector<64x32xf32>
    %124 = arith.addf %106, %123 : vector<64x32xf32>
    %c2_i32 = arith.constant 2 : i32
    %125 = vector.broadcast %c2_i32 : i32 to vector<64x1xi32>
    %126 = arith.addi %67, %125 : vector<64x1xi32>
    %c0_i32_58 = arith.constant 0 : i32
    %127 = vector.broadcast %c0_i32_58 : i32 to vector<64x1xi32>
    %128 = arith.cmpi sge, %126, %127 : vector<64x1xi32>
    %c2_i32_59 = arith.constant 2 : i32
    %129 = vector.broadcast %c2_i32_59 : i32 to vector<64x1xi32>
    %130 = arith.addi %67, %129 : vector<64x1xi32>
    %c8_i32_60 = arith.constant 8 : i32
    %131 = vector.broadcast %c8_i32_60 : i32 to vector<64x1xi32>
    %132 = arith.cmpi slt, %130, %131 : vector<64x1xi32>
    %133 = arith.andi %128, %132 : vector<64x1xi1>
    %c4 = arith.constant 4 : index
    %c0_61 = arith.constant 0 : index
    %134 = vector.load %arg14[%c4, %c0_61] : memref<68x32xf32, #tpu.memory_space<vmem>>, vector<64x32xf32>
    %cst_62 = arith.constant 0.000000e+00 : f32
    %135 = vector.broadcast %cst_62 : f32 to vector<64x32xf32>
    %136 = vector.shape_cast %133 : vector<64x1xi1> to vector<64x1xi1>
    %137 = vector.broadcast %136 : vector<64x1xi1> to vector<64x32xi1>
    %138 = arith.select %137, %134, %135 : vector<64x32xi1>, vector<64x32xf32>
    %c4_63 = arith.constant 4 : index
    %c0_64 = arith.constant 0 : index
    %c0_65 = arith.constant 0 : index
    %139 = vector.load %arg4[%c4_63, %c0_64, %c0_65] : memref<5x32x32xf32, #tpu.memory_space<vmem>>, vector<1x32x32xf32>
    %140 = vector.shape_cast %139 : vector<1x32x32xf32> to vector<32x32xf32>
    %cst_66 = arith.constant dense<0.000000e+00> : vector<64x32xf32>
    %141 = tpu.matmul %138, %140, %cst_66 {dimension_numbers = #tpu.dot_dimension_numbers<[1], [0], [0], [1], [0, 0, 1, 1], [], []>} : vector<64x32xf32>, vector<32x32xf32>, vector<64x32xf32> -> vector<64x32xf32>
    %142 = arith.addf %124, %141 : vector<64x32xf32>
    %c0_67 = arith.constant 0 : index
    %c0_68 = arith.constant 0 : index
    %143 = vector.load %arg5[%c0_67, %c0_68] : memref<1x32xf32, #tpu.memory_space<vmem>>, vector<1x32xf32>
    %144 = vector.broadcast %143 : vector<1x32xf32> to vector<64x32xf32>
    %145 = arith.addf %142, %144 : vector<64x32xf32>
    %cst_69 = arith.constant 5.000000e-01 : f32
    %146 = vector.broadcast %cst_69 : f32 to vector<64x32xf32>
    %147 = arith.mulf %146, %145 : vector<64x32xf32>
    %cst_70 = arith.constant 0.707106769 : f32
    %148 = vector.broadcast %cst_70 : f32 to vector<64x32xf32>
    %149 = arith.mulf %145, %148 : vector<64x32xf32>
    %cst_71 = arith.constant 0.000000e+00 : f32
    %150 = vector.broadcast %cst_71 : f32 to vector<64x32xf32>
    %151 = arith.cmpf oge, %149, %150 : vector<64x32xf32>
    %cst_72 = arith.constant 1.000000e+00 : f32
    %cst_73 = arith.constant -1.000000e+00 : f32
    %152 = vector.broadcast %cst_72 : f32 to vector<64x32xf32>
    %153 = vector.broadcast %cst_73 : f32 to vector<64x32xf32>
    %154 = arith.select %151, %152, %153 : vector<64x32xi1>, vector<64x32xf32>
    %155 = math.absf %149 : vector<64x32xf32>
    %cst_74 = arith.constant 0.327591091 : f32
    %156 = vector.broadcast %cst_74 : f32 to vector<64x32xf32>
    %157 = arith.mulf %156, %155 : vector<64x32xf32>
    %cst_75 = arith.constant 1.000000e+00 : f32
    %158 = vector.broadcast %cst_75 : f32 to vector<64x32xf32>
    %159 = arith.addf %158, %157 : vector<64x32xf32>
    %cst_76 = arith.constant 1.000000e+00 : f32
    %160 = vector.broadcast %cst_76 : f32 to vector<64x32xf32>
    %161 = arith.divf %160, %159 : vector<64x32xf32>
    %cst_77 = arith.constant 1.06140542 : f32
    %162 = vector.broadcast %cst_77 : f32 to vector<64x32xf32>
    %163 = arith.mulf %162, %161 : vector<64x32xf32>
    %cst_78 = arith.constant -1.45315206 : f32
    %164 = vector.broadcast %cst_78 : f32 to vector<64x32xf32>
    %165 = arith.addf %163, %164 : vector<64x32xf32>
    %166 = arith.mulf %165, %161 : vector<64x32xf32>
    %cst_79 = arith.constant 1.42141378 : f32
    %167 = vector.broadcast %cst_79 : f32 to vector<64x32xf32>
    %168 = arith.addf %166, %167 : vector<64x32xf32>
    %169 = arith.mulf %168, %161 : vector<64x32xf32>
    %cst_80 = arith.constant -0.284496725 : f32
    %170 = vector.broadcast %cst_80 : f32 to vector<64x32xf32>
    %171 = arith.addf %169, %170 : vector<64x32xf32>
    %172 = arith.mulf %171, %161 : vector<64x32xf32>
    %cst_81 = arith.constant 0.254829586 : f32
    %173 = vector.broadcast %cst_81 : f32 to vector<64x32xf32>
    %174 = arith.addf %172, %173 : vector<64x32xf32>
    %175 = arith.mulf %174, %161 : vector<64x32xf32>
    %cst_82 = arith.constant 0.000000e+00 : f32
    %176 = vector.broadcast %cst_82 : f32 to vector<64x32xf32>
    %177 = arith.subf %176, %155 : vector<64x32xf32>
    %178 = arith.mulf %177, %155 : vector<64x32xf32>
    %179 = math.exp %178 : vector<64x32xf32>
    %180 = arith.mulf %175, %179 : vector<64x32xf32>
    %cst_83 = arith.constant 1.000000e+00 : f32
    %181 = vector.broadcast %cst_83 : f32 to vector<64x32xf32>
    %182 = arith.subf %181, %180 : vector<64x32xf32>
    %183 = arith.mulf %154, %182 : vector<64x32xf32>
    %cst_84 = arith.constant 1.000000e+00 : f32
    %184 = vector.broadcast %cst_84 : f32 to vector<64x32xf32>
    %185 = arith.addf %184, %183 : vector<64x32xf32>
    %186 = arith.mulf %147, %185 : vector<64x32xf32>
    %c0_85 = arith.constant 0 : index
    %c0_86 = arith.constant 0 : index
    %187 = vector.load %arg15[%c0_85, %c0_86] : memref<64x32xf32, #tpu.memory_space<vmem>>, vector<64x32xf32>
    tpu.vector_store %arg15[%c0_85, %c0_86], %186 {strides = array<i32>} : memref<64x32xf32, #tpu.memory_space<vmem>>, vector<64x32xf32>,
    %c0_87 = arith.constant 0 : index
    %c0_88 = arith.constant 0 : index
    %188 = tpu.strided_load %arg15[%c0_87, %c0_88] {strides = array<i32: 2, 1>} : memref<64x32xf32, #tpu.memory_space<vmem>>, vector<32x32xf32>
    %c1_89 = arith.constant 1 : index
    %c0_90 = arith.constant 0 : index
    %189 = tpu.strided_load %arg15[%c1_89, %c0_90] {strides = array<i32: 2, 1>} : memref<64x32xf32, #tpu.memory_space<vmem>>, vector<32x32xf32>
    %190 = arith.maximumf %188, %189 : vector<32x32xf32>
    %c0_91 = arith.constant 0 : index
    %c0_92 = arith.constant 0 : index
    %191 = vector.load %arg16[%c0_91, %c0_92] : memref<32x32xf32, #tpu.memory_space<vmem>>, vector<32x32xf32>
    tpu.vector_store %arg16[%c0_91, %c0_92], %190 {strides = array<i32>} : memref<32x32xf32, #tpu.memory_space<vmem>>, vector<32x32xf32>,
    %c0_93 = arith.constant 0 : index
    %c0_94 = arith.constant 0 : index
    %192 = vector.load %arg6[%c0_93, %c0_94] : memref<32x128xf32, #tpu.memory_space<vmem>>, vector<32x128xf32>
    %cst_95 = arith.constant dense<0.000000e+00> : vector<32x128xf32>
    %193 = tpu.matmul %190, %192, %cst_95 {dimension_numbers = #tpu.dot_dimension_numbers<[1], [0], [0], [1], [0, 0, 1, 1], [], []>} : vector<32x32xf32>, vector<32x128xf32>, vector<32x128xf32> -> vector<32x128xf32>
    %c0_96 = arith.constant 0 : index
    %c0_97 = arith.constant 0 : index
    %194 = vector.load %arg8[%c0_96, %c0_97] : memref<1x128xf32, #tpu.memory_space<vmem>>, vector<1x128xf32>
    %195 = vector.broadcast %194 : vector<1x128xf32> to vector<32x128xf32>
    %196 = arith.addf %193, %195 : vector<32x128xf32>
    %c0_98 = arith.constant 0 : index
    %c0_99 = arith.constant 0 : index
    %197 = vector.load %arg17[%c0_98, %c0_99] : memref<32x128xf32, #tpu.memory_space<vmem>>, vector<32x128xf32>
    tpu.vector_store %arg17[%c0_98, %c0_99], %196 {strides = array<i32>} : memref<32x128xf32, #tpu.memory_space<vmem>>, vector<32x128xf32>,
    %c0_100 = arith.constant 0 : index
    %c0_101 = arith.constant 0 : index
    %198 = vector.load %arg7[%c0_100, %c0_101] : memref<32x128xf32, #tpu.memory_space<vmem>>, vector<32x128xf32>
    %cst_102 = arith.constant 0.000000e+00 : f32
    %199 = vector.broadcast %cst_102 : f32 to vector<8x32xf32>
    %c0_103 = arith.constant 0 : index
    %c0_104 = arith.constant 0 : index
    %200 = tpu.strided_load %arg17[%c0_103, %c0_104] {strides = array<i32: 4, 1>} : memref<32x128xf32, #tpu.memory_space<vmem>>, vector<8x128xf32>
    %201 = vector.extract_strided_slice %200 {offsets = [0, 0], sizes = [8, 32], strides = [1, 1]} : vector<8x128xf32> to vector<8x32xf32>
    %cst_105 = arith.constant 5.000000e-01 : f32
    %202 = vector.broadcast %cst_105 : f32 to vector<8x32xf32>
    %203 = arith.mulf %202, %201 : vector<8x32xf32>
    %204 = math.tanh %203 : vector<8x32xf32>
    %cst_106 = arith.constant 1.000000e+00 : f32
    %205 = vector.broadcast %cst_106 : f32 to vector<8x32xf32>
    %206 = arith.addf %204, %205 : vector<8x32xf32>
    %cst_107 = arith.constant 5.000000e-01 : f32
    %207 = vector.broadcast %cst_107 : f32 to vector<8x32xf32>
    %208 = arith.mulf %207, %206 : vector<8x32xf32>
    %209 = vector.extract_strided_slice %200 {offsets = [0, 32], sizes = [8, 32], strides = [1, 1]} : vector<8x128xf32> to vector<8x32xf32>
    %cst_108 = arith.constant 5.000000e-01 : f32
    %210 = vector.broadcast %cst_108 : f32 to vector<8x32xf32>
    %211 = arith.mulf %210, %209 : vector<8x32xf32>
    %212 = math.tanh %211 : vector<8x32xf32>
    %cst_109 = arith.constant 1.000000e+00 : f32
    %213 = vector.broadcast %cst_109 : f32 to vector<8x32xf32>
    %214 = arith.addf %212, %213 : vector<8x32xf32>
    %cst_110 = arith.constant 5.000000e-01 : f32
    %215 = vector.broadcast %cst_110 : f32 to vector<8x32xf32>
    %216 = arith.mulf %215, %214 : vector<8x32xf32>
    %217 = vector.extract_strided_slice %200 {offsets = [0, 64], sizes = [8, 32], strides = [1, 1]} : vector<8x128xf32> to vector<8x32xf32>
    %218 = math.tanh %217 : vector<8x32xf32>
    %219 = vector.extract_strided_slice %200 {offsets = [0, 96], sizes = [8, 32], strides = [1, 1]} : vector<8x128xf32> to vector<8x32xf32>
    %cst_111 = arith.constant 5.000000e-01 : f32
    %220 = vector.broadcast %cst_111 : f32 to vector<8x32xf32>
    %221 = arith.mulf %220, %219 : vector<8x32xf32>
    %222 = math.tanh %221 : vector<8x32xf32>
    %cst_112 = arith.constant 1.000000e+00 : f32
    %223 = vector.broadcast %cst_112 : f32 to vector<8x32xf32>
    %224 = arith.addf %222, %223 : vector<8x32xf32>
    %cst_113 = arith.constant 5.000000e-01 : f32
    %225 = vector.broadcast %cst_113 : f32 to vector<8x32xf32>
    %226 = arith.mulf %225, %224 : vector<8x32xf32>
    %227 = arith.mulf %216, %199 : vector<8x32xf32>
    %228 = arith.mulf %208, %218 : vector<8x32xf32>
    %229 = arith.addf %227, %228 : vector<8x32xf32>
    %230 = math.tanh %229 : vector<8x32xf32>
    %231 = arith.mulf %226, %230 : vector<8x32xf32>
    %c1_114 = arith.constant 1 : index
    %c0_115 = arith.constant 0 : index
    %232 = tpu.strided_load %arg17[%c1_114, %c0_115] {strides = array<i32: 4, 1>} : memref<32x128xf32, #tpu.memory_space<vmem>>, vector<8x128xf32>
    %cst_116 = arith.constant dense<0.000000e+00> : vector<8x128xf32>
    %233 = tpu.matmul %231, %198, %cst_116 {dimension_numbers = #tpu.dot_dimension_numbers<[1], [0], [0], [1], [0, 0, 1, 1], [], []>} : vector<8x32xf32>, vector<32x128xf32>, vector<8x128xf32> -> vector<8x128xf32>
    %234 = arith.addf %232, %233 : vector<8x128xf32>
    %235 = vector.extract_strided_slice %234 {offsets = [0, 0], sizes = [8, 32], strides = [1, 1]} : vector<8x128xf32> to vector<8x32xf32>
    %cst_117 = arith.constant 5.000000e-01 : f32
    %236 = vector.broadcast %cst_117 : f32 to vector<8x32xf32>
    %237 = arith.mulf %236, %235 : vector<8x32xf32>
    %238 = math.tanh %237 : vector<8x32xf32>
    %cst_118 = arith.constant 1.000000e+00 : f32
    %239 = vector.broadcast %cst_118 : f32 to vector<8x32xf32>
    %240 = arith.addf %238, %239 : vector<8x32xf32>
    %cst_119 = arith.constant 5.000000e-01 : f32
    %241 = vector.broadcast %cst_119 : f32 to vector<8x32xf32>
    %242 = arith.mulf %241, %240 : vector<8x32xf32>
    %243 = vector.extract_strided_slice %234 {offsets = [0, 32], sizes = [8, 32], strides = [1, 1]} : vector<8x128xf32> to vector<8x32xf32>
    %cst_120 = arith.constant 5.000000e-01 : f32
    %244 = vector.broadcast %cst_120 : f32 to vector<8x32xf32>
    %245 = arith.mulf %244, %243 : vector<8x32xf32>
    %246 = math.tanh %245 : vector<8x32xf32>
    %cst_121 = arith.constant 1.000000e+00 : f32
    %247 = vector.broadcast %cst_121 : f32 to vector<8x32xf32>
    %248 = arith.addf %246, %247 : vector<8x32xf32>
    %cst_122 = arith.constant 5.000000e-01 : f32
    %249 = vector.broadcast %cst_122 : f32 to vector<8x32xf32>
    %250 = arith.mulf %249, %248 : vector<8x32xf32>
    %251 = vector.extract_strided_slice %234 {offsets = [0, 64], sizes = [8, 32], strides = [1, 1]} : vector<8x128xf32> to vector<8x32xf32>
    %252 = math.tanh %251 : vector<8x32xf32>
    %253 = vector.extract_strided_slice %234 {offsets = [0, 96], sizes = [8, 32], strides = [1, 1]} : vector<8x128xf32> to vector<8x32xf32>
    %cst_123 = arith.constant 5.000000e-01 : f32
    %254 = vector.broadcast %cst_123 : f32 to vector<8x32xf32>
    %255 = arith.mulf %254, %253 : vector<8x32xf32>
    %256 = math.tanh %255 : vector<8x32xf32>
    %cst_124 = arith.constant 1.000000e+00 : f32
    %257 = vector.broadcast %cst_124 : f32 to vector<8x32xf32>
    %258 = arith.addf %256, %257 : vector<8x32xf32>
    %cst_125 = arith.constant 5.000000e-01 : f32
    %259 = vector.broadcast %cst_125 : f32 to vector<8x32xf32>
    %260 = arith.mulf %259, %258 : vector<8x32xf32>
    %261 = arith.mulf %250, %229 : vector<8x32xf32>
    %262 = arith.mulf %242, %252 : vector<8x32xf32>
    %263 = arith.addf %261, %262 : vector<8x32xf32>
    %264 = math.tanh %263 : vector<8x32xf32>
    %265 = arith.mulf %260, %264 : vector<8x32xf32>
    %c2_126 = arith.constant 2 : index
    %c0_127 = arith.constant 0 : index
    %266 = tpu.strided_load %arg17[%c2_126, %c0_127] {strides = array<i32: 4, 1>} : memref<32x128xf32, #tpu.memory_space<vmem>>, vector<8x128xf32>
    %cst_128 = arith.constant dense<0.000000e+00> : vector<8x128xf32>
    %267 = tpu.matmul %265, %198, %cst_128 {dimension_numbers = #tpu.dot_dimension_numbers<[1], [0], [0], [1], [0, 0, 1, 1], [], []>} : vector<8x32xf32>, vector<32x128xf32>, vector<8x128xf32> -> vector<8x128xf32>
    %268 = arith.addf %266, %267 : vector<8x128xf32>
    %269 = vector.extract_strided_slice %268 {offsets = [0, 0], sizes = [8, 32], strides = [1, 1]} : vector<8x128xf32> to vector<8x32xf32>
    %cst_129 = arith.constant 5.000000e-01 : f32
    %270 = vector.broadcast %cst_129 : f32 to vector<8x32xf32>
    %271 = arith.mulf %270, %269 : vector<8x32xf32>
    %272 = math.tanh %271 : vector<8x32xf32>
    %cst_130 = arith.constant 1.000000e+00 : f32
    %273 = vector.broadcast %cst_130 : f32 to vector<8x32xf32>
    %274 = arith.addf %272, %273 : vector<8x32xf32>
    %cst_131 = arith.constant 5.000000e-01 : f32
    %275 = vector.broadcast %cst_131 : f32 to vector<8x32xf32>
    %276 = arith.mulf %275, %274 : vector<8x32xf32>
    %277 = vector.extract_strided_slice %268 {offsets = [0, 32], sizes = [8, 32], strides = [1, 1]} : vector<8x128xf32> to vector<8x32xf32>
    %cst_132 = arith.constant 5.000000e-01 : f32
    %278 = vector.broadcast %cst_132 : f32 to vector<8x32xf32>
    %279 = arith.mulf %278, %277 : vector<8x32xf32>
    %280 = math.tanh %279 : vector<8x32xf32>
    %cst_133 = arith.constant 1.000000e+00 : f32
    %281 = vector.broadcast %cst_133 : f32 to vector<8x32xf32>
    %282 = arith.addf %280, %281 : vector<8x32xf32>
    %cst_134 = arith.constant 5.000000e-01 : f32
    %283 = vector.broadcast %cst_134 : f32 to vector<8x32xf32>
    %284 = arith.mulf %283, %282 : vector<8x32xf32>
    %285 = vector.extract_strided_slice %268 {offsets = [0, 64], sizes = [8, 32], strides = [1, 1]} : vector<8x128xf32> to vector<8x32xf32>
    %286 = math.tanh %285 : vector<8x32xf32>
    %287 = vector.extract_strided_slice %268 {offsets = [0, 96], sizes = [8, 32], strides = [1, 1]} : vector<8x128xf32> to vector<8x32xf32>
    %cst_135 = arith.constant 5.000000e-01 : f32
    %288 = vector.broadcast %cst_135 : f32 to vector<8x32xf32>
    %289 = arith.mulf %288, %287 : vector<8x32xf32>
    %290 = math.tanh %289 : vector<8x32xf32>
    %cst_136 = arith.constant 1.000000e+00 : f32
    %291 = vector.broadcast %cst_136 : f32 to vector<8x32xf32>
    %292 = arith.addf %290, %291 : vector<8x32xf32>
    %cst_137 = arith.constant 5.000000e-01 : f32
    %293 = vector.broadcast %cst_137 : f32 to vector<8x32xf32>
    %294 = arith.mulf %293, %292 : vector<8x32xf32>
    %295 = arith.mulf %284, %263 : vector<8x32xf32>
    %296 = arith.mulf %276, %286 : vector<8x32xf32>
    %297 = arith.addf %295, %296 : vector<8x32xf32>
    %298 = math.tanh %297 : vector<8x32xf32>
    %299 = arith.mulf %294, %298 : vector<8x32xf32>
    %c3_138 = arith.constant 3 : index
    %c0_139 = arith.constant 0 : index
    %300 = tpu.strided_load %arg17[%c3_138, %c0_139] {strides = array<i32: 4, 1>} : memref<32x128xf32, #tpu.memory_space<vmem>>, vector<8x128xf32>
    %cst_140 = arith.constant dense<0.000000e+00> : vector<8x128xf32>
    %301 = tpu.matmul %299, %198, %cst_140 {dimension_numbers = #tpu.dot_dimension_numbers<[1], [0], [0], [1], [0, 0, 1, 1], [], []>} : vector<8x32xf32>, vector<32x128xf32>, vector<8x128xf32> -> vector<8x128xf32>
    %302 = arith.addf %300, %301 : vector<8x128xf32>
    %303 = vector.extract_strided_slice %302 {offsets = [0, 0], sizes = [8, 32], strides = [1, 1]} : vector<8x128xf32> to vector<8x32xf32>
    %cst_141 = arith.constant 5.000000e-01 : f32
    %304 = vector.broadcast %cst_141 : f32 to vector<8x32xf32>
    %305 = arith.mulf %304, %303 : vector<8x32xf32>
    %306 = math.tanh %305 : vector<8x32xf32>
    %cst_142 = arith.constant 1.000000e+00 : f32
    %307 = vector.broadcast %cst_142 : f32 to vector<8x32xf32>
    %308 = arith.addf %306, %307 : vector<8x32xf32>
    %cst_143 = arith.constant 5.000000e-01 : f32
    %309 = vector.broadcast %cst_143 : f32 to vector<8x32xf32>
    %310 = arith.mulf %309, %308 : vector<8x32xf32>
    %311 = vector.extract_strided_slice %302 {offsets = [0, 32], sizes = [8, 32], strides = [1, 1]} : vector<8x128xf32> to vector<8x32xf32>
    %cst_144 = arith.constant 5.000000e-01 : f32
    %312 = vector.broadcast %cst_144 : f32 to vector<8x32xf32>
    %313 = arith.mulf %312, %311 : vector<8x32xf32>
    %314 = math.tanh %313 : vector<8x32xf32>
    %cst_145 = arith.constant 1.000000e+00 : f32
    %315 = vector.broadcast %cst_145 : f32 to vector<8x32xf32>
    %316 = arith.addf %314, %315 : vector<8x32xf32>
    %cst_146 = arith.constant 5.000000e-01 : f32
    %317 = vector.broadcast %cst_146 : f32 to vector<8x32xf32>
    %318 = arith.mulf %317, %316 : vector<8x32xf32>
    %319 = vector.extract_strided_slice %302 {offsets = [0, 64], sizes = [8, 32], strides = [1, 1]} : vector<8x128xf32> to vector<8x32xf32>
    %320 = math.tanh %319 : vector<8x32xf32>
    %321 = vector.extract_strided_slice %302 {offsets = [0, 96], sizes = [8, 32], strides = [1, 1]} : vector<8x128xf32> to vector<8x32xf32>
    %cst_147 = arith.constant 5.000000e-01 : f32
    %322 = vector.broadcast %cst_147 : f32 to vector<8x32xf32>
    %323 = arith.mulf %322, %321 : vector<8x32xf32>
    %324 = math.tanh %323 : vector<8x32xf32>
    %cst_148 = arith.constant 1.000000e+00 : f32
    %325 = vector.broadcast %cst_148 : f32 to vector<8x32xf32>
    %326 = arith.addf %324, %325 : vector<8x32xf32>
    %cst_149 = arith.constant 5.000000e-01 : f32
    %327 = vector.broadcast %cst_149 : f32 to vector<8x32xf32>
    %328 = arith.mulf %327, %326 : vector<8x32xf32>
    %329 = arith.mulf %318, %297 : vector<8x32xf32>
    %330 = arith.mulf %310, %320 : vector<8x32xf32>
    %331 = arith.addf %329, %330 : vector<8x32xf32>
    %332 = math.tanh %331 : vector<8x32xf32>
    %333 = arith.mulf %328, %332 : vector<8x32xf32>
    %c3_150 = arith.constant 3 : index
    %c0_151 = arith.constant 0 : index
    %334 = tpu.strided_load %arg16[%c3_150, %c0_151] {strides = array<i32: 4, 1>} : memref<32x32xf32, #tpu.memory_space<vmem>>, vector<8x32xf32>
    %c0_152 = arith.constant 0 : index
    %c0_153 = arith.constant 0 : index
    %335 = vector.load %arg9[%c0_152, %c0_153] : memref<32x128xf32, #tpu.memory_space<vmem>>, vector<32x128xf32>
    %cst_154 = arith.constant dense<0.000000e+00> : vector<8x128xf32>
    %336 = tpu.matmul %334, %335, %cst_154 {dimension_numbers = #tpu.dot_dimension_numbers<[1], [0], [0], [1], [0, 0, 1, 1], [], []>} : vector<8x32xf32>, vector<32x128xf32>, vector<8x128xf32> -> vector<8x128xf32>
    %c0_155 = arith.constant 0 : index
    %c0_156 = arith.constant 0 : index
    %337 = vector.load %arg10[%c0_155, %c0_156] : memref<1x128xf32, #tpu.memory_space<vmem>>, vector<1x128xf32>
    %338 = vector.broadcast %337 : vector<1x128xf32> to vector<8x128xf32>
    %339 = arith.addf %336, %338 : vector<8x128xf32>
    %340 = vector.extract_strided_slice %339 {offsets = [0, 0], sizes = [8, 32], strides = [1, 1]} : vector<8x128xf32> to vector<8x32xf32>
    %cst_157 = arith.constant 5.000000e-01 : f32
    %341 = vector.broadcast %cst_157 : f32 to vector<8x32xf32>
    %342 = arith.mulf %341, %340 : vector<8x32xf32>
    %343 = math.tanh %342 : vector<8x32xf32>
    %cst_158 = arith.constant 1.000000e+00 : f32
    %344 = vector.broadcast %cst_158 : f32 to vector<8x32xf32>
    %345 = arith.addf %343, %344 : vector<8x32xf32>
    %cst_159 = arith.constant 5.000000e-01 : f32
    %346 = vector.broadcast %cst_159 : f32 to vector<8x32xf32>
    %347 = arith.mulf %346, %345 : vector<8x32xf32>
    %348 = vector.extract_strided_slice %339 {offsets = [0, 64], sizes = [8, 32], strides = [1, 1]} : vector<8x128xf32> to vector<8x32xf32>
    %349 = math.tanh %348 : vector<8x32xf32>
    %350 = vector.extract_strided_slice %339 {offsets = [0, 96], sizes = [8, 32], strides = [1, 1]} : vector<8x128xf32> to vector<8x32xf32>
    %cst_160 = arith.constant 5.000000e-01 : f32
    %351 = vector.broadcast %cst_160 : f32 to vector<8x32xf32>
    %352 = arith.mulf %351, %350 : vector<8x32xf32>
    %353 = math.tanh %352 : vector<8x32xf32>
    %cst_161 = arith.constant 1.000000e+00 : f32
    %354 = vector.broadcast %cst_161 : f32 to vector<8x32xf32>
    %355 = arith.addf %353, %354 : vector<8x32xf32>
    %cst_162 = arith.constant 5.000000e-01 : f32
    %356 = vector.broadcast %cst_162 : f32 to vector<8x32xf32>
    %357 = arith.mulf %356, %355 : vector<8x32xf32>
    %358 = arith.mulf %347, %349 : vector<8x32xf32>
    %359 = math.tanh %358 : vector<8x32xf32>
    %360 = arith.mulf %357, %359 : vector<8x32xf32>
    %361 = tpu.concatenate %333, %360 in 1 : vector<8x32xf32>, vector<8x32xf32> -> vector<8x64xf32>
    %c0_163 = arith.constant 0 : index
    %c0_164 = arith.constant 0 : index
    %362 = vector.load %arg11[%c0_163, %c0_164] : memref<64x32xf32, #tpu.memory_space<vmem>>, vector<64x32xf32>
    %cst_165 = arith.constant dense<0.000000e+00> : vector<8x32xf32>
    %363 = tpu.matmul %361, %362, %cst_165 {dimension_numbers = #tpu.dot_dimension_numbers<[1], [0], [0], [1], [0, 0, 1, 1], [], []>} : vector<8x64xf32>, vector<64x32xf32>, vector<8x32xf32> -> vector<8x32xf32>
    %c0_166 = arith.constant 0 : index
    %c0_167 = arith.constant 0 : index
    %364 = vector.load %arg12[%c0_166, %c0_167] : memref<1x32xf32, #tpu.memory_space<vmem>>, vector<1x32xf32>
    %365 = vector.broadcast %364 : vector<1x32xf32> to vector<8x32xf32>
    %366 = arith.addf %363, %365 : vector<8x32xf32>
    %c0_168 = arith.constant 0 : index
    %c0_169 = arith.constant 0 : index
    %367 = vector.load %arg13[%c0_168, %c0_169] : memref<8x32xf32, #tpu.memory_space<vmem>>, vector<8x32xf32>
    tpu.vector_store %arg13[%c0_168, %c0_169], %366 {strides = array<i32>} : memref<8x32xf32, #tpu.memory_space<vmem>>, vector<8x32xf32>,
    return
  }
  func.func @transform_0(%arg0: i32) -> (i32, i32) {
    %c0_i32 = arith.constant 0 : i32
    %c0_i32_0 = arith.constant 0 : i32
    return %arg0, %c0_i32 : i32, i32
  }
  func.func @transform_1(%arg0: i32) -> (i32, i32) {
    %c0_i32 = arith.constant 0 : i32
    %c0_i32_0 = arith.constant 0 : i32
    %c0_i32_1 = arith.constant 0 : i32
    return %c0_i32, %c0_i32_0 : i32, i32
  }
  func.func @transform_2(%arg0: i32) -> (i32, i32) {
    %c0_i32 = arith.constant 0 : i32
    %c0_i32_0 = arith.constant 0 : i32
    %c0_i32_1 = arith.constant 0 : i32
    return %c0_i32, %c0_i32_0 : i32, i32
  }
  func.func @transform_3(%arg0: i32) -> (i32, i32, i32) {
    %c0_i32 = arith.constant 0 : i32
    %c0_i32_0 = arith.constant 0 : i32
    %c0_i32_1 = arith.constant 0 : i32
    %c0_i32_2 = arith.constant 0 : i32
    return %c0_i32, %c0_i32_0, %c0_i32_1 : i32, i32, i32
  }
  func.func @transform_4(%arg0: i32) -> (i32, i32) {
    %c0_i32 = arith.constant 0 : i32
    %c0_i32_0 = arith.constant 0 : i32
    %c0_i32_1 = arith.constant 0 : i32
    return %c0_i32, %c0_i32_0 : i32, i32
  }
  func.func @transform_5(%arg0: i32) -> (i32, i32) {
    %c0_i32 = arith.constant 0 : i32
    %c0_i32_0 = arith.constant 0 : i32
    %c0_i32_1 = arith.constant 0 : i32
    return %c0_i32, %c0_i32_0 : i32, i32
  }
  func.func @transform_6(%arg0: i32) -> (i32, i32) {
    %c0_i32 = arith.constant 0 : i32
    %c0_i32_0 = arith.constant 0 : i32
    %c0_i32_1 = arith.constant 0 : i32
    return %c0_i32, %c0_i32_0 : i32, i32
  }
  func.func @transform_7(%arg0: i32) -> (i32, i32) {
    %c0_i32 = arith.constant 0 : i32
    %c0_i32_0 = arith.constant 0 : i32
    %c0_i32_1 = arith.constant 0 : i32
    return %c0_i32, %c0_i32_0 : i32, i32
  }
  func.func @transform_8(%arg0: i32) -> (i32, i32) {
    %c0_i32 = arith.constant 0 : i32
    %c0_i32_0 = arith.constant 0 : i32
    %c0_i32_1 = arith.constant 0 : i32
    return %c0_i32, %c0_i32_0 : i32, i32
  }
  func.func @transform_9(%arg0: i32) -> (i32, i32) {
    %c0_i32 = arith.constant 0 : i32
    %c0_i32_0 = arith.constant 0 : i32
    %c0_i32_1 = arith.constant 0 : i32
    return %c0_i32, %c0_i32_0 : i32, i32
  }
  func.func @transform_10(%arg0: i32) -> (i32, i32) {
    %c0_i32 = arith.constant 0 : i32
    %c0_i32_0 = arith.constant 0 : i32
    %c0_i32_1 = arith.constant 0 : i32
    return %c0_i32, %c0_i32_0 : i32, i32
  }
  func.func @transform_11(%arg0: i32) -> (i32, i32) {
    %c0_i32 = arith.constant 0 : i32
    %c0_i32_0 = arith.constant 0 : i32
    %c0_i32_1 = arith.constant 0 : i32
    return %c0_i32, %c0_i32_0 : i32, i32
  }
  func.func @transform_12(%arg0: i32) -> (i32, i32) {
    %c0_i32 = arith.constant 0 : i32
    %c0_i32_0 = arith.constant 0 : i32
    return %arg0, %c0_i32 : i32, i32
  }
}

</mosaic_0001>

<llo_original>
// kernel: asset_encoder_forward.1
$region0: #{asset_encoder_forward.1}
  #allocation0 [shape = 'u32[]', space=smem, size = 0x4, offset = 0x4, fixed_abs, tag = 'smem constant byte address 0x4 - core index']
  #allocation1 [shape = 'u32[144,128]{1,0:T(1,128)}', space=vmem, size = 0x12000, scoped, tag = 'internal scratch']
  #allocation2 [shape = 'f32[68,32]{1,0:T(8,128)}', space=vmem, size = 0x9000, scoped, tag = 'scratch operand']
  #allocation3 [shape = 'f32[64,32]{1,0:T(8,128)}', space=vmem, size = 0x8000, scoped, tag = 'scratch operand']
  #allocation4 [shape = 'f32[32,32]{1,0:T(8,128)}', space=vmem, size = 0x4000, scoped, tag = 'scratch operand']
  #allocation5 [shape = 'f32[32,128]{1,0:T(8,128)}', space=vmem, size = 0x4000, scoped, tag = 'scratch operand']
  %s0 = inlined_call_operand.vmem [shape: f32[64,40], index: 0, kind: input, shape index: {}]
  %s1 = inlined_call_operand.vmem [shape: f32[40,64], index: 1, kind: input, shape index: {}]
  %s2 = inlined_call_operand.vmem [shape: f32[1,64], index: 2, kind: input, shape index: {}]
  %s3 = inlined_call_operand.vmem [shape: f32[5,32,32], index: 3, kind: input, shape index: {}]
  %s4 = inlined_call_operand.vmem [shape: f32[1,32], index: 4, kind: input, shape index: {}]
  %s5 = inlined_call_operand.vmem [shape: f32[32,128], index: 5, kind: input, shape index: {}]
  %s6 = inlined_call_operand.vmem [shape: f32[32,128], index: 6, kind: input, shape index: {}]
  %s7 = inlined_call_operand.vmem [shape: f32[1,128], index: 7, kind: input, shape index: {}]
  %s8 = inlined_call_operand.vmem [shape: f32[32,128], index: 8, kind: input, shape index: {}]
  %s9 = inlined_call_operand.vmem [shape: f32[1,128], index: 9, kind: input, shape index: {}]
  %s10 = inlined_call_operand.vmem [shape: f32[64,32], index: 10, kind: input, shape index: {}]
  %s11 = inlined_call_operand.vmem [shape: f32[1,32], index: 11, kind: input, shape index: {}]
  %s12 = inlined_call_operand.vmem [shape: f32[8,32], index: 12, kind: output, shape index: {}]
  %s13 = sld [smem:[#allocation0]]
  $region58: #{asset_encoder_forward.1} parent=0
    _
  %s15 = ssub.s32 1, %s13
  %s16 = scalar_select 0, %s15, %s13
  // Predicated region
  $region2: #{asset_encoder_forward.1} parent=0 // pred_check
    _
  $region3: #{asset_encoder_forward.1} parent=0 // pred_check_branch
    %18 = sbr.rel (0) target = $region5
  $region4: #{asset_encoder_forward.1} parent=0 // pred_region
    _
  $region5: #{asset_encoder_forward.1} parent=0 // pred_fallthru
    _
  // Predicated region
  $region6: #{asset_encoder_forward.1} parent=0 // pred_check
    _
  $region7: #{asset_encoder_forward.1} parent=0 // pred_check_branch
    %20 = sbr.rel (0) target = $region9
  $region8: #{asset_encoder_forward.1} parent=0 // pred_region
    _
  $region9: #{asset_encoder_forward.1} parent=0 // pred_fallthru
    _
  // Predicated region
  $region10: #{asset_encoder_forward.1} parent=0 // pred_check
    _
  $region11: #{asset_encoder_forward.1} parent=0 // pred_check_branch
    %22 = sbr.rel (0) target = $region13
  $region12: #{asset_encoder_forward.1} parent=0 // pred_region
    _
  $region13: #{asset_encoder_forward.1} parent=0 // pred_fallthru
    _
  // Predicated region
  $region14: #{asset_encoder_forward.1} parent=0 // pred_check
    _
  $region15: #{asset_encoder_forward.1} parent=0 // pred_check_branch
    %24 = sbr.rel (0) target = $region17
  $region16: #{asset_encoder_forward.1} parent=0 // pred_region
    _
  $region17: #{asset_encoder_forward.1} parent=0 // pred_fallthru
    _
  // Predicated region
  $region18: #{asset_encoder_forward.1} parent=0 // pred_check
    _
  $region19: #{asset_encoder_forward.1} parent=0 // pred_check_branch
    %26 = sbr.rel (0) target = $region21
  $region20: #{asset_encoder_forward.1} parent=0 // pred_region
    _
  $region21: #{asset_encoder_forward.1} parent=0 // pred_fallthru
    _
  // Predicated region
  $region22: #{asset_encoder_forward.1} parent=0 // pred_check
    _
  $region23: #{asset_encoder_forward.1} parent=0 // pred_check_branch
    %28 = sbr.rel (0) target = $region25
  $region24: #{asset_encoder_forward.1} parent=0 // pred_region
    _
  $region25: #{asset_encoder_forward.1} parent=0 // pred_fallthru
    _
  // Predicated region
  $region26: #{asset_encoder_forward.1} parent=0 // pred_check
    _
  $region27: #{asset_encoder_forward.1} parent=0 // pred_check_branch
    %30 = sbr.rel (0) target = $region29
  $region28: #{asset_encoder_forward.1} parent=0 // pred_region
    _
  $region29: #{asset_encoder_forward.1} parent=0 // pred_fallthru
    _
  // Predicated region
  $region30: #{asset_encoder_forward.1} parent=0 // pred_check
    _
  $region31: #{asset_encoder_forward.1} parent=0 // pred_check_branch
    %32 = sbr.rel (0) target = $region33
  $region32: #{asset_encoder_forward.1} parent=0 // pred_region
    _
  $region33: #{asset_encoder_forward.1} parent=0 // pred_fallthru
    _
  // Predicated region
  $region34: #{asset_encoder_forward.1} parent=0 // pred_check
    _
  $region35: #{asset_encoder_forward.1} parent=0 // pred_check_branch
    %34 = sbr.rel (0) target = $region37
  $region36: #{asset_encoder_forward.1} parent=0 // pred_region
    _
  $region37: #{asset_encoder_forward.1} parent=0 // pred_fallthru
    _
  // Predicated region
  $region38: #{asset_encoder_forward.1} parent=0 // pred_check
    _
  $region39: #{asset_encoder_forward.1} parent=0 // pred_check_branch
    %36 = sbr.rel (0) target = $region41
  $region40: #{asset_encoder_forward.1} parent=0 // pred_region
    _
  $region41: #{asset_encoder_forward.1} parent=0 // pred_fallthru
    _
  // Predicated region
  $region42: #{asset_encoder_forward.1} parent=0 // pred_check
    _
  $region43: #{asset_encoder_forward.1} parent=0 // pred_check_branch
    %38 = sbr.rel (0) target = $region45
  $region44: #{asset_encoder_forward.1} parent=0 // pred_region
    _
  $region45: #{asset_encoder_forward.1} parent=0 // pred_fallthru
    _
  // Predicated region
  $region46: #{asset_encoder_forward.1} parent=0 // pred_check
    _
  $region47: #{asset_encoder_forward.1} parent=0 // pred_check_branch
    %40 = sbr.rel (0) target = $region49
  $region48: #{asset_encoder_forward.1} parent=0 // pred_region
    _
  $region49: #{asset_encoder_forward.1} parent=0 // pred_fallthru
    _
  %v41 = vld [vmem:[%s0] sm:$0xff]
  %v42 = vld [vmem:[%s0 + $0x8] sm:$0xff]
  %v43 = vld [vmem:[%s0 + $0x10] sm:$0xff]
  %v44 = vld [vmem:[%s0 + $0x18] sm:$0xff]
  %v45 = vld [vmem:[%s0 + $0x20] sm:$0xff]
  %v46 = vld [vmem:[%s0 + $0x28] sm:$0xff]
  %v47 = vld [vmem:[%s0 + $0x30] sm:$0xff]
  %v48 = vld [vmem:[%s0 + $0x38] sm:$0xff]
  %v49 = vld [vmem:[%s1] sm:$0xff]
  %v50 = vld [vmem:[%s1 + $0x8] sm:$0xff]
  %v51 = vld [vmem:[%s1 + $0x10] sm:$0xff]
  %v52 = vld [vmem:[%s1 + $0x18] sm:$0xff]
  %v53 = vld [vmem:[%s1 + $0x20] sm:$0xff]
  %v54 = vld [vmem:[%s2] sm:$0x1]
  %v56 = vlaneseq
  %v57 = vshrl.u32 %v56, 7
  %v58 = vsub.s32 0, %v57
  %v59 = vrot.slane %v54, %v58
  %vm61 = vcmask 326656
  %v63 = vsel %vm61, %v41, 0
  %v66 = vsel %vm61, %v42, 0
  %v69 = vsel %vm61, %v43, 0
  %v72 = vsel %vm61, %v44, 0
  %v75 = vsel %vm61, %v45, 0
  %v78 = vsel %vm61, %v46, 0
  %v81 = vsel %vm61, %v47, 0
  %v84 = vsel %vm61, %v48, 0
  %86 = vmatprep.subr.mxu0 0.0
  %87 = vmatpush1.msra.mxu0 0.0
  %88 = vmatprep.subr.mxu0 0.0
  %89 = vmatpush1.msra.mxu0 0.0
  %90 = vmatprep.subr.mxu0 0.0
  %91 = vmatpush1.msra.mxu0 0.0
  %92 = vmatprep.subr.mxu0 0.0
  %93 = vmatpush1.msra.mxu0 0.0
  %94 = vmatprep.subr.mxu0 0.0
  %95 = vmatpush1.msra.mxu0 0.0
  %96 = vmatprep.subr.mxu0 0.0
  %97 = vmatpush1.msra.mxu0 0.0
  %98 = vmatprep.subr.mxu0 0.0
  %99 = vmatpush1.msra.mxu0 0.0
  %100 = vmatprep.subr.mxu0 0.0
  %101 = vmatpush1.msra.mxu0 0.0
  %102 = vmatprep.subr.mxu0 0.0
  %103 = vmatpush1.msra.mxu0 0.0
  %104 = vmatprep.subr.mxu0 0.0
  %105 = vmatpush1.msra.mxu0 0.0
  %106 = vmatprep.subr.mxu0 0.0
  %107 = vmatpush1.msra.mxu0 0.0
  %108 = vmatprep.subr.mxu0 0.0
  %109 = vmatpush1.msra.mxu0 %v53
  %110 = vmatprep.subr.mxu0 0.0
  %111 = vmatpush1.msra.mxu0 %v52
  %112 = vmatprep.subr.mxu0 0.0
  %113 = vmatpush1.msra.mxu0 %v51
  %114 = vmatprep.subr.mxu0 0.0
  %115 = vmatpush1.msra.mxu0 %v50
  %116 = vmatprep.subr.mxu0 0.0
  %117 = vmatpush1.msra.mxu0 %v49
  %118 = vmatprep.subr.mxu0 0.0
  %119 = vmatpush2.msra.mxu0 0.0
  %120 = vmatprep.subr.mxu0 0.0
  %121 = vmatpush2.msra.mxu0 0.0
  %122 = vmatprep.subr.mxu0 0.0
  %123 = vmatpush2.msra.mxu0 0.0
  %124 = vmatprep.subr.mxu0 0.0
  %125 = vmatpush2.msra.mxu0 0.0
  %126 = vmatprep.subr.mxu0 0.0
  %127 = vmatpush2.msra.mxu0 0.0
  %128 = vmatprep.subr.mxu0 0.0
  %129 = vmatpush2.msra.mxu0 0.0
  %130 = vmatprep.subr.mxu0 0.0
  %131 = vmatpush2.msra.mxu0 0.0
  %132 = vmatprep.subr.mxu0 0.0
  %133 = vmatpush2.msra.mxu0 0.0
  %134 = vmatprep.subr.mxu0 0.0
  %135 = vmatpush2.msra.mxu0 0.0
  %136 = vmatprep.subr.mxu0 0.0
  %137 = vmatpush2.msra.mxu0 0.0
  %138 = vmatprep.subr.mxu0 0.0
  %139 = vmatpush2.msra.mxu0 0.0
  %140 = vmatprep.subr.mxu0 0.0
  %141 = vmatpush2.msra.mxu0 0.0
  %142 = vmatprep.subr.mxu0 0.0
  %143 = vmatpush2.msra.mxu0 0.0
  %144 = vmatprep.subr.mxu0 0.0
  %145 = vmatpush2.msra.mxu0 0.0
  %146 = vmatprep.subr.mxu0 0.0
  %147 = vmatpush2.msra.mxu0 0.0
  %148 = vmatprep.subr.mxu0 0.0
  %149 = vmatpush2.msra.mxu0 0.0
  %150 = vmatprep.mubr.f32.mxu0 0.0
  %151 = vmatmul.mubr.f32.gmra.mxu0 %v63
  %v152 = vpop.f32.mrf.mxu0
  %v153 = vadd.f32 %v59, %v152
  %v154 = vpop.f32.mrf.mxu0
  %155 = vmatprep.mubr.f32.mxu0 0.0
  %156 = vmatmul.mubr.f32.gmra.mxu0 %v66
  %v157 = vpop.f32.mrf.mxu0
  %v158 = vadd.f32 %v59, %v157
  %v159 = vpop.f32.mrf.mxu0
  %160 = vmatprep.mubr.f32.mxu0 0.0
  %161 = vmatmul.mubr.f32.gmra.mxu0 %v69
  %v162 = vpop.f32.mrf.mxu0
  %v163 = vadd.f32 %v59, %v162
  %v164 = vpop.f32.mrf.mxu0
  %165 = vmatprep.mubr.f32.mxu0 0.0
  %166 = vmatmul.mubr.f32.gmra.mxu0 %v72
  %v167 = vpop.f32.mrf.mxu0
  %v168 = vadd.f32 %v59, %v167
  %v169 = vpop.f32.mrf.mxu0
  %170 = vmatprep.mubr.f32.mxu0 0.0
  %171 = vmatmul.mubr.f32.gmra.mxu0 %v75
  %v172 = vpop.f32.mrf.mxu0
  %v173 = vadd.f32 %v59, %v172
  %v174 = vpop.f32.mrf.mxu0
  %175 = vmatprep.mubr.f32.mxu0 0.0
  %176 = vmatmul.mubr.f32.gmra.mxu0 %v78
  %v177 = vpop.f32.mrf.mxu0
  %v178 = vadd.f32 %v59, %v177
  %v179 = vpop.f32.mrf.mxu0
  %180 = vmatprep.mubr.f32.mxu0 0.0
  %181 = vmatmul.mubr.f32.gmra.mxu0 %v81
  %v182 = vpop.f32.mrf.mxu0
  %v183 = vadd.f32 %v59, %v182
  %v184 = vpop.f32.mrf.mxu0
  %185 = vmatprep.mubr.f32.mxu0 0.0
  %186 = vmatmul.mubr.f32.gmra.mxu0 %v84
  %v187 = vpop.f32.mrf.mxu0
  %v188 = vadd.f32 %v59, %v187
  %v189 = vpop.f32.mrf.mxu0
  %190 = vdwg.mxu0
  %v191 = vmul.f32 %v153, 0.5
  %v192 = vmul.f32 %v158, 0.5
  %v193 = vmul.f32 %v163, 0.5
  %v194 = vmul.f32 %v168, 0.5
  %v195 = vmul.f32 %v173, 0.5
  %v196 = vmul.f32 %v178, 0.5
  %v197 = vmul.f32 %v183, 0.5
  %v198 = vmul.f32 %v188, 0.5
  %v199 = vmul.f32 %v153, 0.70710677
  %v200 = vmul.f32 %v158, 0.70710677
  %v201 = vmul.f32 %v163, 0.70710677
  %v202 = vmul.f32 %v168, 0.70710677
  %v203 = vmul.f32 %v173, 0.70710677
  %v204 = vmul.f32 %v178, 0.70710677
  %v205 = vmul.f32 %v183, 0.70710677
  %v206 = vmul.f32 %v188, 0.70710677
  %vm207 = vcmp.ge.f32.partialorder %v199, 0.0
  %vm208 = vcmp.ge.f32.partialorder %v200, 0.0
  %vm209 = vcmp.ge.f32.partialorder %v201, 0.0
  %vm210 = vcmp.ge.f32.partialorder %v202, 0.0
  %vm211 = vcmp.ge.f32.partialorder %v203, 0.0
  %vm212 = vcmp.ge.f32.partialorder %v204, 0.0
  %vm213 = vcmp.ge.f32.partialorder %v205, 0.0
  %vm214 = vcmp.ge.f32.partialorder %v206, 0.0
  %v215 = vsel %vm207, 1.0, -1.0
  %v216 = vsel %vm208, 1.0, -1.0
  %v217 = vsel %vm209, 1.0, -1.0
  %v218 = vsel %vm210, 1.0, -1.0
  %v219 = vsel %vm211, 1.0, -1.0
  %v220 = vsel %vm212, 1.0, -1.0
  %v221 = vsel %vm213, 1.0, -1.0
  %v222 = vsel %vm214, 1.0, -1.0
  %v223 = vand.u32 2147483647, %v199
  %v224 = vand.u32 2147483647, %v200
  %v225 = vand.u32 2147483647, %v201
  %v226 = vand.u32 2147483647, %v202
  %v227 = vand.u32 2147483647, %v203
  %v228 = vand.u32 2147483647, %v204
  %v229 = vand.u32 2147483647, %v205
  %v230 = vand.u32 2147483647, %v206
  %v231 = vmul.f32 %v223, 0.3275911
  %v232 = vmul.f32 %v224, 0.3275911
  %v233 = vmul.f32 %v225, 0.3275911
  %v234 = vmul.f32 %v226, 0.3275911
  %v235 = vmul.f32 %v227, 0.3275911
  %v236 = vmul.f32 %v228, 0.3275911
  %v237 = vmul.f32 %v229, 0.3275911
  %v238 = vmul.f32 %v230, 0.3275911
  %v239 = vadd.f32 %v231, 1.0
  %v240 = vadd.f32 %v232, 1.0
  %v241 = vadd.f32 %v233, 1.0
  %v242 = vadd.f32 %v234, 1.0
  %v243 = vadd.f32 %v235, 1.0
  %v244 = vadd.f32 %v236, 1.0
  %v245 = vadd.f32 %v237, 1.0
  %v246 = vadd.f32 %v238, 1.0
  %v247 = vrcp.pop %v239
  %v248 = vmul.f32 1.0, %v247
  %v249 = vrcp.pop %v240
  %v250 = vmul.f32 1.0, %v249
  %v251 = vrcp.pop %v241
  %v252 = vmul.f32 1.0, %v251
  %v253 = vrcp.pop %v242
  %v254 = vmul.f32 1.0, %v253
  %v255 = vrcp.pop %v243
  %v256 = vmul.f32 1.0, %v255
  %v257 = vrcp.pop %v244
  %v258 = vmul.f32 1.0, %v257
  %v259 = vrcp.pop %v245
  %v260 = vmul.f32 1.0, %v259
  %v261 = vrcp.pop %v246
  %v262 = vmul.f32 1.0, %v261
  %v263 = vmul.f32 %v248, 1.0614054
  %v264 = vmul.f32 %v250, 1.0614054
  %v265 = vmul.f32 %v252, 1.0614054
  %v266 = vmul.f32 %v254, 1.0614054
  %v267 = vmul.f32 %v256, 1.0614054
  %v268 = vmul.f32 %v258, 1.0614054
  %v269 = vmul.f32 %v260, 1.0614054
  %v270 = vmul.f32 %v262, 1.0614054
  %v271 = vadd.f32 %v263, -1.4531521
  %v272 = vadd.f32 %v264, -1.4531521
  %v273 = vadd.f32 %v265, -1.4531521
  %v274 = vadd.f32 %v266, -1.4531521
  %v275 = vadd.f32 %v267, -1.4531521
  %v276 = vadd.f32 %v268, -1.4531521
  %v277 = vadd.f32 %v269, -1.4531521
  %v278 = vadd.f32 %v270, -1.4531521
  %v279 = vmul.f32 %v271, %v248
  %v280 = vmul.f32 %v272, %v250
  %v281 = vmul.f32 %v273, %v252
  %v282 = vmul.f32 %v274, %v254
  %v283 = vmul.f32 %v275, %v256
  %v284 = vmul.f32 %v276, %v258
  %v285 = vmul.f32 %v277, %v260
  %v286 = vmul.f32 %v278, %v262
  %v287 = vadd.f32 %v279, 1.4214138
  %v288 = vadd.f32 %v280, 1.4214138
  %v289 = vadd.f32 %v281, 1.4214138
  %v290 = vadd.f32 %v282, 1.4214138
  %v291 = vadd.f32 %v283, 1.4214138
  %v292 = vadd.f32 %v284, 1.4214138
  %v293 = vadd.f32 %v285, 1.4214138
  %v294 = vadd.f32 %v286, 1.4214138
  %v295 = vmul.f32 %v287, %v248
  %v296 = vmul.f32 %v288, %v250
  %v297 = vmul.f32 %v289, %v252
  %v298 = vmul.f32 %v290, %v254
  %v299 = vmul.f32 %v291, %v256
  %v300 = vmul.f32 %v292, %v258
  %v301 = vmul.f32 %v293, %v260
  %v302 = vmul.f32 %v294, %v262
  %v303 = vadd.f32 %v295, -0.28449672
  %v304 = vadd.f32 %v296, -0.28449672
  %v305 = vadd.f32 %v297, -0.28449672
  %v306 = vadd.f32 %v298, -0.28449672
  %v307 = vadd.f32 %v299, -0.28449672
  %v308 = vadd.f32 %v300, -0.28449672
  %v309 = vadd.f32 %v301, -0.28449672
  %v310 = vadd.f32 %v302, -0.28449672
  %v311 = vmul.f32 %v303, %v248
  %v312 = vmul.f32 %v304, %v250
  %v313 = vmul.f32 %v305, %v252
  %v314 = vmul.f32 %v306, %v254
  %v315 = vmul.f32 %v307, %v256
  %v316 = vmul.f32 %v308, %v258
  %v317 = vmul.f32 %v309, %v260
  %v318 = vmul.f32 %v310, %v262
  %v319 = vadd.f32 %v311, 0.2548296
  %v320 = vadd.f32 %v312, 0.2548296
  %v321 = vadd.f32 %v313, 0.2548296
  %v322 = vadd.f32 %v314, 0.2548296
  %v323 = vadd.f32 %v315, 0.2548296
  %v324 = vadd.f32 %v316, 0.2548296
  %v325 = vadd.f32 %v317, 0.2548296
  %v326 = vadd.f32 %v318, 0.2548296
  %v327 = vmul.f32 %v319, %v248
  %v328 = vmul.f32 %v320, %v250
  %v329 = vmul.f32 %v321, %v252
  %v330 = vmul.f32 %v322, %v254
  %v331 = vmul.f32 %v323, %v256
  %v332 = vmul.f32 %v324, %v258
  %v333 = vmul.f32 %v325, %v260
  %v334 = vmul.f32 %v326, %v262
  %v335 = vsub.f32 0.0, %v223
  %v336 = vsub.f32 0.0, %v224
  %v337 = vsub.f32 0.0, %v225
  %v338 = vsub.f32 0.0, %v226
  %v339 = vsub.f32 0.0, %v227
  %v340 = vsub.f32 0.0, %v228
  %v341 = vsub.f32 0.0, %v229
  %v342 = vsub.f32 0.0, %v230
  %v343 = vmul.f32 %v335, %v223
  %v344 = vmul.f32 %v336, %v224
  %v345 = vmul.f32 %v337, %v225
  %v346 = vmul.f32 %v338, %v226
  %v347 = vmul.f32 %v339, %v227
  %v348 = vmul.f32 %v340, %v228
  %v349 = vmul.f32 %v341, %v229
  %v350 = vmul.f32 %v342, %v230
  %v351 = vmul.f32 %v343, 1.442695
  %v352 = vpow.pop %v351
  %v353 = vmul.f32 %v344, 1.442695
  %v354 = vpow.pop %v353
  %v355 = vmul.f32 %v345, 1.442695
  %v356 = vpow.pop %v355
  %v357 = vmul.f32 %v346, 1.442695
  %v358 = vpow.pop %v357
  %v359 = vmul.f32 %v347, 1.442695
  %v360 = vpow.pop %v359
  %v361 = vmul.f32 %v348, 1.442695
  %v362 = vpow.pop %v361
  %v363 = vmul.f32 %v349, 1.442695
  %v364 = vpow.pop %v363
  %v365 = vmul.f32 %v350, 1.442695
  %v366 = vpow.pop %v365
  %v367 = vmul.f32 %v327, %v352
  %v368 = vmul.f32 %v328, %v354
  %v369 = vmul.f32 %v329, %v356
  %v370 = vmul.f32 %v330, %v358
  %v371 = vmul.f32 %v331, %v360
  %v372 = vmul.f32 %v332, %v362
  %v373 = vmul.f32 %v333, %v364
  %v374 = vmul.f32 %v334, %v366
  %v375 = vsub.f32 1.0, %v367
  %v376 = vsub.f32 1.0, %v368
  %v377 = vsub.f32 1.0, %v369
  %v378 = vsub.f32 1.0, %v370
  %v379 = vsub.f32 1.0, %v371
  %v380 = vsub.f32 1.0, %v372
  %v381 = vsub.f32 1.0, %v373
  %v382 = vsub.f32 1.0, %v374
  %v383 = vmul.f32 %v215, %v375
  %v384 = vmul.f32 %v216, %v376
  %v385 = vmul.f32 %v217, %v377
  %v386 = vmul.f32 %v218, %v378
  %v387 = vmul.f32 %v219, %v379
  %v388 = vmul.f32 %v220, %v380
  %v389 = vmul.f32 %v221, %v381
  %v390 = vmul.f32 %v222, %v382
  %v391 = vadd.f32 %v383, 1.0
  %v392 = vadd.f32 %v384, 1.0
  %v393 = vadd.f32 %v385, 1.0
  %v394 = vadd.f32 %v386, 1.0
  %v395 = vadd.f32 %v387, 1.0
  %v396 = vadd.f32 %v388, 1.0
  %v397 = vadd.f32 %v389, 1.0
  %v398 = vadd.f32 %v390, 1.0
  %v399 = vmul.f32 %v191, %v391
  %v400 = vmul.f32 %v192, %v392
  %v401 = vmul.f32 %v193, %v393
  %v402 = vmul.f32 %v194, %v394
  %v403 = vmul.f32 %v195, %v395
  %v404 = vmul.f32 %v196, %v396
  %v405 = vmul.f32 %v197, %v397
  %v406 = vmul.f32 %v198, %v398
  %415 = vrot.lane.b32.xlu0 %v399, 96
  %v416 = vpop.permute.xlu0 %415
  %417 = vrot.lane.b32.xlu0 %v400, 96
  %v418 = vpop.permute.xlu0 %417
  %419 = vrot.lane.b32.xlu0 %v401, 96
  %v420 = vpop.permute.xlu0 %419
  %421 = vrot.lane.b32.xlu0 %v402, 96
  %v422 = vpop.permute.xlu0 %421
  %423 = vrot.lane.b32.xlu0 %v403, 96
  %v424 = vpop.permute.xlu0 %423
  %425 = vrot.lane.b32.xlu0 %v404, 96
  %v426 = vpop.permute.xlu0 %425
  %427 = vrot.lane.b32.xlu0 %v405, 96
  %v428 = vpop.permute.xlu0 %427
  %429 = vrot.lane.b32.xlu0 %v406, 96
  %v430 = vpop.permute.xlu0 %429
  %v439 = vmax.f32 %v399, %v416
  %v440 = vmax.f32 %v400, %v418
  %v441 = vmax.f32 %v401, %v420
  %v442 = vmax.f32 %v402, %v422
  %v443 = vmax.f32 %v403, %v424
  %v444 = vmax.f32 %v404, %v426
  %v445 = vmax.f32 %v405, %v428
  %v446 = vmax.f32 %v406, %v430
  %vm447 = vcmask 261120
  %448 = vst.msk [vmem:[#allocation2 + $0x2] sm:$0xff] %vm447, %v439
  %449 = vst.msk [vmem:[#allocation2 + $0xa] sm:$0xff] %vm447, %v440
  %450 = vst.msk [vmem:[#allocation2 + $0x12] sm:$0xff] %vm447, %v441
  %451 = vst.msk [vmem:[#allocation2 + $0x1a] sm:$0xff] %vm447, %v442
  %452 = vst.msk [vmem:[#allocation2 + $0x22] sm:$0xff] %vm447, %v443
  %453 = vst.msk [vmem:[#allocation2 + $0x2a] sm:$0xff] %vm447, %v444
  %454 = vst.msk [vmem:[#allocation2 + $0x32] sm:$0xff] %vm447, %v445
  %455 = vst.msk [vmem:[#allocation2 + $0x3a] sm:$0xff] %vm447, %v446
  %v456 = vlaneseq
  %v457 = vshrl.u32 %v456, 7
  %v458 = vadd.s32 %v457, 8
  %v459 = vadd.s32 %v457, 16
  %v460 = vadd.s32 %v457, 24
  %v461 = vadd.s32 %v457, 32
  %v462 = vadd.s32 %v457, 40
  %v463 = vadd.s32 %v457, 48
  %v464 = vadd.s32 %v457, 56
  %vm465 = vcmp.lt.s32.totalorder %v457, 0
  %v466 = vsub.s32 0, %v457
  %v467 = vsel %vm465, %v466, %v457
  %v468 = vshrl.u32 %v467, 3
  %v469 = vand.u32 %v467, 7
  %v470 = vsub.s32 0, %v469
  %v471 = vsel %vm465, %v470, %v469
  %vm472 = vcmp.lt.s32.totalorder %v458, 0
  %v473 = vsub.s32 0, %v458
  %v474 = vsel %vm472, %v473, %v458
  %v475 = vshrl.u32 %v474, 3
  %v476 = vand.u32 %v474, 7
  %v477 = vsub.s32 0, %v476
  %v478 = vsel %vm472, %v477, %v476
  %vm479 = vcmp.lt.s32.totalorder %v459, 0
  %v480 = vsub.s32 0, %v459
  %v481 = vsel %vm479, %v480, %v459
  %v482 = vshrl.u32 %v481, 3
  %v483 = vand.u32 %v481, 7
  %v484 = vsub.s32 0, %v483
  %v485 = vsel %vm479, %v484, %v483
  %vm486 = vcmp.lt.s32.totalorder %v460, 0
  %v487 = vsub.s32 0, %v460
  %v488 = vsel %vm486, %v487, %v460
  %v489 = vshrl.u32 %v488, 3
  %v490 = vand.u32 %v488, 7
  %v491 = vsub.s32 0, %v490
  %v492 = vsel %vm486, %v491, %v490
  %vm493 = vcmp.lt.s32.totalorder %v461, 0
  %v494 = vsub.s32 0, %v461
  %v495 = vsel %vm493, %v494, %v461
  %v496 = vshrl.u32 %v495, 3
  %v497 = vand.u32 %v495, 7
  %v498 = vsub.s32 0, %v497
  %v499 = vsel %vm493, %v498, %v497
  %vm500 = vcmp.lt.s32.totalorder %v462, 0
  %v501 = vsub.s32 0, %v462
  %v502 = vsel %vm500, %v501, %v462
  %v503 = vshrl.u32 %v502, 3
  %v504 = vand.u32 %v502, 7
  %v505 = vsub.s32 0, %v504
  %v506 = vsel %vm500, %v505, %v504
  %vm507 = vcmp.lt.s32.totalorder %v463, 0
  %v508 = vsub.s32 0, %v463
  %v509 = vsel %vm507, %v508, %v463
  %v510 = vshrl.u32 %v509, 3
  %v511 = vand.u32 %v509, 7
  %v512 = vsub.s32 0, %v511
  %v513 = vsel %vm507, %v512, %v511
  %vm514 = vcmp.lt.s32.totalorder %v464, 0
  %v515 = vsub.s32 0, %v464
  %v516 = vsel %vm514, %v515, %v464
  %v517 = vshrl.u32 %v516, 3
  %v518 = vand.u32 %v516, 7
  %v519 = vsub.s32 0, %v518
  %v520 = vsel %vm514, %v519, %v518
  %vm521 = vcmp.ne.s32.totalorder %v471, 0
  %vm522 = vcmp.ne.s32.totalorder %v478, 0
  %vm523 = vcmp.ne.s32.totalorder %v485, 0
  %vm524 = vcmp.ne.s32.totalorder %v492, 0
  %vm525 = vcmp.ne.s32.totalorder %v499, 0
  %vm526 = vcmp.ne.s32.totalorder %v506, 0
  %vm527 = vcmp.ne.s32.totalorder %v513, 0
  %vm528 = vcmp.ne.s32.totalorder %v520, 0
  %vm529 = vcmp.lt.s32.totalorder %v471, 0
  %vm530 = vcmp.lt.s32.totalorder %v478, 0
  %vm531 = vcmp.lt.s32.totalorder %v485, 0
  %vm532 = vcmp.lt.s32.totalorder %v492, 0
  %vm533 = vcmp.lt.s32.totalorder %v499, 0
  %vm534 = vcmp.lt.s32.totalorder %v506, 0
  %vm535 = vcmp.lt.s32.totalorder %v513, 0
  %vm536 = vcmp.lt.s32.totalorder %v520, 0
  %vm537 = vmand %vm529, %vm521
  %vm538 = vmand %vm530, %vm522
  %vm539 = vmand %vm531, %vm523
  %vm540 = vmand %vm532, %vm524
  %vm541 = vmand %vm533, %vm525
  %vm542 = vmand %vm534, %vm526
  %vm543 = vmand %vm535, %vm527
  %vm544 = vmand %vm536, %vm528
  %v545 = vadd.s32 %v471, 8
  %v546 = vadd.s32 %v478, 8
  %v547 = vadd.s32 %v485, 8
  %v548 = vadd.s32 %v492, 8
  %v549 = vadd.s32 %v499, 8
  %v550 = vadd.s32 %v506, 8
  %v551 = vadd.s32 %v513, 8
  %v552 = vadd.s32 %v520, 8
  %v553 = vsel %vm537, %v545, %v471
  %v554 = vsel %vm538, %v546, %v478
  %v555 = vsel %vm539, %v547, %v485
  %v556 = vsel %vm540, %v548, %v492
  %v557 = vsel %vm541, %v549, %v499
  %v558 = vsel %vm542, %v550, %v506
  %v559 = vsel %vm543, %v551, %v513
  %v560 = vsel %vm544, %v552, %v520
  %s561 = scalar_lea.vmem %s3, 64
  %v562 = vld [vmem:[%s561] sm:$0xff]
  %v563 = vld [vmem:[%s561 + $0x8] sm:$0xff]
  %v564 = vld [vmem:[%s561 + $0x10] sm:$0xff]
  %v565 = vld [vmem:[%s561 + $0x18] sm:$0xff]
  %v566 = vadd.s32 %v553, 4294967294
  %v567 = vadd.s32 %v554, 4294967294
  %v568 = vadd.s32 %v555, 4294967294
  %v569 = vadd.s32 %v556, 4294967294
  %v570 = vadd.s32 %v557, 4294967294
  %v571 = vadd.s32 %v558, 4294967294
  %v572 = vadd.s32 %v559, 4294967294
  %v573 = vadd.s32 %v560, 4294967294
  %vm574 = vcmp.ge.s32.totalorder %v566, 0
  %vm575 = vcmp.ge.s32.totalorder %v567, 0
  %vm576 = vcmp.ge.s32.totalorder %v568, 0
  %vm577 = vcmp.ge.s32.totalorder %v569, 0
  %vm578 = vcmp.ge.s32.totalorder %v570, 0
  %vm579 = vcmp.ge.s32.totalorder %v571, 0
  %vm580 = vcmp.ge.s32.totalorder %v572, 0
  %vm581 = vcmp.ge.s32.totalorder %v573, 0
  %vm582 = vcmp.lt.s32.totalorder %v566, 8
  %vm583 = vcmp.lt.s32.totalorder %v567, 8
  %vm584 = vcmp.lt.s32.totalorder %v568, 8
  %vm585 = vcmp.lt.s32.totalorder %v569, 8
  %vm586 = vcmp.lt.s32.totalorder %v570, 8
  %vm587 = vcmp.lt.s32.totalorder %v571, 8
  %vm588 = vcmp.lt.s32.totalorder %v572, 8
  %vm589 = vcmp.lt.s32.totalorder %v573, 8
  %vm590 = vmand %vm574, %vm582
  %vm591 = vmand %vm575, %vm583
  %vm592 = vmand %vm576, %vm584
  %vm593 = vmand %vm577, %vm585
  %vm594 = vmand %vm578, %vm586
  %vm595 = vmand %vm579, %vm587
  %vm596 = vmand %vm580, %vm588
  %vm597 = vmand %vm581, %vm589
  %v598 = vld [vmem:[#allocation2] sm:$0xff]
  %v599 = vld [vmem:[#allocation2 + $0x8] sm:$0xff]
  %v600 = vld [vmem:[#allocation2 + $0x10] sm:$0xff]
  %v601 = vld [vmem:[#allocation2 + $0x18] sm:$0xff]
  %v602 = vld [vmem:[#allocation2 + $0x20] sm:$0xff]
  %v603 = vld [vmem:[#allocation2 + $0x28] sm:$0xff]
  %v604 = vld [vmem:[#allocation2 + $0x30] sm:$0xff]
  %v605 = vld [vmem:[#allocation2 + $0x38] sm:$0xff]
  %v606 = vsel %vm590, 1, 0
  %v607 = vsel %vm591, 1, 0
  %v608 = vsel %vm592, 1, 0
  %v609 = vsel %vm593, 1, 0
  %v610 = vsel %vm594, 1, 0
  %v611 = vsel %vm595, 1, 0
  %v612 = vsel %vm596, 1, 0
  %v613 = vsel %vm597, 1, 0
  %vm614 = vcmp.eq.s32.totalorder %v606, 1
  %vm615 = vcmp.eq.s32.totalorder %v607, 1
  %vm616 = vcmp.eq.s32.totalorder %v608, 1
  %vm617 = vcmp.eq.s32.totalorder %v609, 1
  %vm618 = vcmp.eq.s32.totalorder %v610, 1
  %vm619 = vcmp.eq.s32.totalorder %v611, 1
  %vm620 = vcmp.eq.s32.totalorder %v612, 1
  %vm621 = vcmp.eq.s32.totalorder %v613, 1
  %v622 = vsel %vm614, %v598, 0.0
  %v623 = vsel %vm615, %v599, 0.0
  %v624 = vsel %vm616, %v600, 0.0
  %v625 = vsel %vm617, %v601, 0.0
  %v626 = vsel %vm618, %v602, 0.0
  %v627 = vsel %vm619, %v603, 0.0
  %v628 = vsel %vm620, %v604, 0.0
  %v629 = vsel %vm621, %v605, 0.0
  %v630 = vld [vmem:[%s3] sm:$0xff]
  %v631 = vld [vmem:[%s3 + $0x8] sm:$0xff]
  %v632 = vld [vmem:[%s3 + $0x10] sm:$0xff]
  %v633 = vld [vmem:[%s3 + $0x18] sm:$0xff]
  %v635 = vsel %vm447, %v622, 0
  %v638 = vsel %vm447, %v623, 0
  %v641 = vsel %vm447, %v624, 0
  %v644 = vsel %vm447, %v625, 0
  %v647 = vsel %vm447, %v626, 0
  %v650 = vsel %vm447, %v627, 0
  %v653 = vsel %vm447, %v628, 0
  %v656 = vsel %vm447, %v629, 0
  %658 = vmatprep.subr.mxu0 0.0
  %659 = vmatpush1.msra.mxu0 0.0
  %660 = vmatprep.subr.mxu0 0.0
  %661 = vmatpush1.msra.mxu0 0.0
  %662 = vmatprep.subr.mxu0 0.0
  %663 = vmatpush1.msra.mxu0 0.0
  %664 = vmatprep.subr.mxu0 0.0
  %665 = vmatpush1.msra.mxu0 0.0
  %666 = vmatprep.subr.mxu0 0.0
  %667 = vmatpush1.msra.mxu0 0.0
  %668 = vmatprep.subr.mxu0 0.0
  %669 = vmatpush1.msra.mxu0 0.0
  %670 = vmatprep.subr.mxu0 0.0
  %671 = vmatpush1.msra.mxu0 0.0
  %672 = vmatprep.subr.mxu0 0.0
  %673 = vmatpush1.msra.mxu0 0.0
  %674 = vmatprep.subr.mxu0 0.0
  %675 = vmatpush1.msra.mxu0 0.0
  %676 = vmatprep.subr.mxu0 0.0
  %677 = vmatpush1.msra.mxu0 0.0
  %678 = vmatprep.subr.mxu0 0.0
  %679 = vmatpush1.msra.mxu0 0.0
  %680 = vmatprep.subr.mxu0 0.0
  %681 = vmatpush1.msra.mxu0 0.0
  %682 = vmatprep.subr.mxu0 0.0
  %683 = vmatpush1.msra.mxu0 %v633
  %684 = vmatprep.subr.mxu0 0.0
  %685 = vmatpush1.msra.mxu0 %v632
  %686 = vmatprep.subr.mxu0 0.0
  %687 = vmatpush1.msra.mxu0 %v631
  %688 = vmatprep.subr.mxu0 0.0
  %689 = vmatpush1.msra.mxu0 %v630
  %690 = vmatprep.subr.mxu0 0.0
  %691 = vmatpush2.msra.mxu0 0.0
  %692 = vmatprep.subr.mxu0 0.0
  %693 = vmatpush2.msra.mxu0 0.0
  %694 = vmatprep.subr.mxu0 0.0
  %695 = vmatpush2.msra.mxu0 0.0
  %696 = vmatprep.subr.mxu0 0.0
  %697 = vmatpush2.msra.mxu0 0.0
  %698 = vmatprep.subr.mxu0 0.0
  %699 = vmatpush2.msra.mxu0 0.0
  %700 = vmatprep.subr.mxu0 0.0
  %701 = vmatpush2.msra.mxu0 0.0
  %702 = vmatprep.subr.mxu0 0.0
  %703 = vmatpush2.msra.mxu0 0.0
  %704 = vmatprep.subr.mxu0 0.0
  %705 = vmatpush2.msra.mxu0 0.0
  %706 = vmatprep.subr.mxu0 0.0
  %707 = vmatpush2.msra.mxu0 0.0
  %708 = vmatprep.subr.mxu0 0.0
  %709 = vmatpush2.msra.mxu0 0.0
  %710 = vmatprep.subr.mxu0 0.0
  %711 = vmatpush2.msra.mxu0 0.0
  %712 = vmatprep.subr.mxu0 0.0
  %713 = vmatpush2.msra.mxu0 0.0
  %714 = vmatprep.subr.mxu0 0.0
  %715 = vmatpush2.msra.mxu0 0.0
  %716 = vmatprep.subr.mxu0 0.0
  %717 = vmatpush2.msra.mxu0 0.0
  %718 = vmatprep.subr.mxu0 0.0
  %719 = vmatpush2.msra.mxu0 0.0
  %720 = vmatprep.subr.mxu0 0.0
  %721 = vmatpush2.msra.mxu0 0.0
  %722 = vmatprep.mubr.f32.mxu0 0.0
  %723 = vmatmul.mubr.f32.gmra.mxu0 %v635
  %v724 = vpop.f32.mrf.mxu0
  %v725 = vadd.f32 0.0, %v724
  %v726 = vpop.f32.mrf.mxu0
  %727 = vmatprep.mubr.f32.mxu0 0.0
  %728 = vmatmul.mubr.f32.gmra.mxu0 %v638
  %v729 = vpop.f32.mrf.mxu0
  %v730 = vadd.f32 0.0, %v729
  %v731 = vpop.f32.mrf.mxu0
  %732 = vmatprep.mubr.f32.mxu0 0.0
  %733 = vmatmul.mubr.f32.gmra.mxu0 %v641
  %v734 = vpop.f32.mrf.mxu0
  %v735 = vadd.f32 0.0, %v734
  %v736 = vpop.f32.mrf.mxu0
  %737 = vmatprep.mubr.f32.mxu0 0.0
  %738 = vmatmul.mubr.f32.gmra.mxu0 %v644
  %v739 = vpop.f32.mrf.mxu0
  %v740 = vadd.f32 0.0, %v739
  %v741 = vpop.f32.mrf.mxu0
  %742 = vmatprep.mubr.f32.mxu0 0.0
  %743 = vmatmul.mubr.f32.gmra.mxu0 %v647
  %v744 = vpop.f32.mrf.mxu0
  %v745 = vadd.f32 0.0, %v744
  %v746 = vpop.f32.mrf.mxu0
  %747 = vmatprep.mubr.f32.mxu0 0.0
  %748 = vmatmul.mubr.f32.gmra.mxu0 %v650
  %v749 = vpop.f32.mrf.mxu0
  %v750 = vadd.f32 0.0, %v749
  %v751 = vpop.f32.mrf.mxu0
  %752 = vmatprep.mubr.f32.mxu0 0.0
  %753 = vmatmul.mubr.f32.gmra.mxu0 %v653
  %v754 = vpop.f32.mrf.mxu0
  %v755 = vadd.f32 0.0, %v754
  %v756 = vpop.f32.mrf.mxu0
  %757 = vmatprep.mubr.f32.mxu0 0.0
  %758 = vmatmul.mubr.f32.gmra.mxu0 %v656
  %v759 = vpop.f32.mrf.mxu0
  %v760 = vadd.f32 0.0, %v759
  %v761 = vpop.f32.mrf.mxu0
  %762 = vdwg.mxu0
  %v764 = vsel %vm447, %v439, 0
  %v767 = vsel %vm447, %v440, 0
  %v770 = vsel %vm447, %v441, 0
  %v773 = vsel %vm447, %v442, 0
  %v776 = vsel %vm447, %v443, 0
  %v779 = vsel %vm447, %v444, 0
  %v782 = vsel %vm447, %v445, 0
  %v785 = vsel %vm447, %v446, 0
  %787 = vmatprep.subr.mxu0 0.0
  %788 = vmatpush1.msra.mxu0 0.0
  %789 = vmatprep.subr.mxu0 0.0
  %790 = vmatpush1.msra.mxu0 0.0
  %791 = vmatprep.subr.mxu0 0.0
  %792 = vmatpush1.msra.mxu0 0.0
  %793 = vmatprep.subr.mxu0 0.0
  %794 = vmatpush1.msra.mxu0 0.0
  %795 = vmatprep.subr.mxu0 0.0
  %796 = vmatpush1.msra.mxu0 0.0
  %797 = vmatprep.subr.mxu0 0.0
  %798 = vmatpush1.msra.mxu0 0.0
  %799 = vmatprep.subr.mxu0 0.0
  %800 = vmatpush1.msra.mxu0 0.0
  %801 = vmatprep.subr.mxu0 0.0
  %802 = vmatpush1.msra.mxu0 0.0
  %803 = vmatprep.subr.mxu0 0.0
  %804 = vmatpush1.msra.mxu0 0.0
  %805 = vmatprep.subr.mxu0 0.0
  %806 = vmatpush1.msra.mxu0 0.0
  %807 = vmatprep.subr.mxu0 0.0
  %808 = vmatpush1.msra.mxu0 0.0
  %809 = vmatprep.subr.mxu0 0.0
  %810 = vmatpush1.msra.mxu0 0.0
  %811 = vmatprep.subr.mxu0 0.0
  %812 = vmatpush1.msra.mxu0 %v565
  %813 = vmatprep.subr.mxu0 0.0
  %814 = vmatpush1.msra.mxu0 %v564
  %815 = vmatprep.subr.mxu0 0.0
  %816 = vmatpush1.msra.mxu0 %v563
  %817 = vmatprep.subr.mxu0 0.0
  %818 = vmatpush1.msra.mxu0 %v562
  %819 = vmatprep.subr.mxu0 0.0
  %820 = vmatpush2.msra.mxu0 0.0
  %821 = vmatprep.subr.mxu0 0.0
  %822 = vmatpush2.msra.mxu0 0.0
  %823 = vmatprep.subr.mxu0 0.0
  %824 = vmatpush2.msra.mxu0 0.0
  %825 = vmatprep.subr.mxu0 0.0
  %826 = vmatpush2.msra.mxu0 0.0
  %827 = vmatprep.subr.mxu0 0.0
  %828 = vmatpush2.msra.mxu0 0.0
  %829 = vmatprep.subr.mxu0 0.0
  %830 = vmatpush2.msra.mxu0 0.0
  %831 = vmatprep.subr.mxu0 0.0
  %832 = vmatpush2.msra.mxu0 0.0
  %833 = vmatprep.subr.mxu0 0.0
  %834 = vmatpush2.msra.mxu0 0.0
  %835 = vmatprep.subr.mxu0 0.0
  %836 = vmatpush2.msra.mxu0 0.0
  %837 = vmatprep.subr.mxu0 0.0
  %838 = vmatpush2.msra.mxu0 0.0
  %839 = vmatprep.subr.mxu0 0.0
  %840 = vmatpush2.msra.mxu0 0.0
  %841 = vmatprep.subr.mxu0 0.0
  %842 = vmatpush2.msra.mxu0 0.0
  %843 = vmatprep.subr.mxu0 0.0
  %844 = vmatpush2.msra.mxu0 0.0
  %845 = vmatprep.subr.mxu0 0.0
  %846 = vmatpush2.msra.mxu0 0.0
  %847 = vmatprep.subr.mxu0 0.0
  %848 = vmatpush2.msra.mxu0 0.0
  %849 = vmatprep.subr.mxu0 0.0
  %850 = vmatpush2.msra.mxu0 0.0
  %851 = vmatprep.mubr.f32.mxu0 0.0
  %852 = vmatmul.mubr.f32.gmra.mxu0 %v764
  %v853 = vpop.f32.mrf.mxu0
  %v854 = vadd.f32 %v725, %v853
  %v855 = vpop.f32.mrf.mxu0
  %856 = vmatprep.mubr.f32.mxu0 0.0
  %857 = vmatmul.mubr.f32.gmra.mxu0 %v767
  %v858 = vpop.f32.mrf.mxu0
  %v859 = vadd.f32 %v730, %v858
  %v860 = vpop.f32.mrf.mxu0
  %861 = vmatprep.mubr.f32.mxu0 0.0
  %862 = vmatmul.mubr.f32.gmra.mxu0 %v770
  %v863 = vpop.f32.mrf.mxu0
  %v864 = vadd.f32 %v735, %v863
  %v865 = vpop.f32.mrf.mxu0
  %866 = vmatprep.mubr.f32.mxu0 0.0
  %867 = vmatmul.mubr.f32.gmra.mxu0 %v773
  %v868 = vpop.f32.mrf.mxu0
  %v869 = vadd.f32 %v740, %v868
  %v870 = vpop.f32.mrf.mxu0
  %871 = vmatprep.mubr.f32.mxu0 0.0
  %872 = vmatmul.mubr.f32.gmra.mxu0 %v776
  %v873 = vpop.f32.mrf.mxu0
  %v874 = vadd.f32 %v745, %v873
  %v875 = vpop.f32.mrf.mxu0
  %876 = vmatprep.mubr.f32.mxu0 0.0
  %877 = vmatmul.mubr.f32.gmra.mxu0 %v779
  %v878 = vpop.f32.mrf.mxu0
  %v879 = vadd.f32 %v750, %v878
  %v880 = vpop.f32.mrf.mxu0
  %881 = vmatprep.mubr.f32.mxu0 0.0
  %882 = vmatmul.mubr.f32.gmra.mxu0 %v782
  %v883 = vpop.f32.mrf.mxu0
  %v884 = vadd.f32 %v755, %v883
  %v885 = vpop.f32.mrf.mxu0
  %886 = vmatprep.mubr.f32.mxu0 0.0
  %887 = vmatmul.mubr.f32.gmra.mxu0 %v785
  %v888 = vpop.f32.mrf.mxu0
  %v889 = vadd.f32 %v760, %v888
  %v890 = vpop.f32.mrf.mxu0
  %891 = vdwg.mxu0
  %v892 = vadd.s32 %v553, 4294967295
  %v893 = vadd.s32 %v554, 4294967295
  %v894 = vadd.s32 %v555, 4294967295
  %v895 = vadd.s32 %v556, 4294967295
  %v896 = vadd.s32 %v557, 4294967295
  %v897 = vadd.s32 %v558, 4294967295
  %v898 = vadd.s32 %v559, 4294967295
  %v899 = vadd.s32 %v560, 4294967295
  %vm900 = vcmp.ge.s32.totalorder %v892, 0
  %vm901 = vcmp.ge.s32.totalorder %v893, 0
  %vm902 = vcmp.ge.s32.totalorder %v894, 0
  %vm903 = vcmp.ge.s32.totalorder %v895, 0
  %vm904 = vcmp.ge.s32.totalorder %v896, 0
  %vm905 = vcmp.ge.s32.totalorder %v897, 0
  %vm906 = vcmp.ge.s32.totalorder %v898, 0
  %vm907 = vcmp.ge.s32.totalorder %v899, 0
  %vm908 = vcmp.lt.s32.totalorder %v892, 8
  %vm909 = vcmp.lt.s32.totalorder %v893, 8
  %vm910 = vcmp.lt.s32.totalorder %v894, 8
  %vm911 = vcmp.lt.s32.totalorder %v895, 8
  %vm912 = vcmp.lt.s32.totalorder %v896, 8
  %vm913 = vcmp.lt.s32.totalorder %v897, 8
  %vm914 = vcmp.lt.s32.totalorder %v898, 8
  %vm915 = vcmp.lt.s32.totalorder %v899, 8
  %vm916 = vmand %vm900, %vm908
  %vm917 = vmand %vm901, %vm909
  %vm918 = vmand %vm902, %vm910
  %vm919 = vmand %vm903, %vm911
  %vm920 = vmand %vm904, %vm912
  %vm921 = vmand %vm905, %vm913
  %vm922 = vmand %vm906, %vm914
  %vm923 = vmand %vm907, %vm915
  %v924 = vld [vmem:[#allocation2 + $0x1] sm:$0xff]
  %v925 = vld [vmem:[#allocation2 + $0x9] sm:$0xff]
  %v926 = vld [vmem:[#allocation2 + $0x11] sm:$0xff]
  %v927 = vld [vmem:[#allocation2 + $0x19] sm:$0xff]
  %v928 = vld [vmem:[#allocation2 + $0x21] sm:$0xff]
  %v929 = vld [vmem:[#allocation2 + $0x29] sm:$0xff]
  %v930 = vld [vmem:[#allocation2 + $0x31] sm:$0xff]
  %v931 = vld [vmem:[#allocation2 + $0x39] sm:$0xff]
  %v932 = vsel %vm916, 1, 0
  %v933 = vsel %vm917, 1, 0
  %v934 = vsel %vm918, 1, 0
  %v935 = vsel %vm919, 1, 0
  %v936 = vsel %vm920, 1, 0
  %v937 = vsel %vm921, 1, 0
  %v938 = vsel %vm922, 1, 0
  %v939 = vsel %vm923, 1, 0
  %vm940 = vcmp.eq.s32.totalorder %v932, 1
  %vm941 = vcmp.eq.s32.totalorder %v933, 1
  %vm942 = vcmp.eq.s32.totalorder %v934, 1
  %vm943 = vcmp.eq.s32.totalorder %v935, 1
  %vm944 = vcmp.eq.s32.totalorder %v936, 1
  %vm945 = vcmp.eq.s32.totalorder %v937, 1
  %vm946 = vcmp.eq.s32.totalorder %v938, 1
  %vm947 = vcmp.eq.s32.totalorder %v939, 1
  %v948 = vsel %vm940, %v924, 0.0
  %v949 = vsel %vm941, %v925, 0.0
  %v950 = vsel %vm942, %v926, 0.0
  %v951 = vsel %vm943, %v927, 0.0
  %v952 = vsel %vm944, %v928, 0.0
  %v953 = vsel %vm945, %v929, 0.0
  %v954 = vsel %vm946, %v930, 0.0
  %v955 = vsel %vm947, %v931, 0.0
  %s956 = scalar_lea.vmem %s3, 32
  %v957 = vld [vmem:[%s956] sm:$0xff]
  %v958 = vld [vmem:[%s956 + $0x8] sm:$0xff]
  %v959 = vld [vmem:[%s956 + $0x10] sm:$0xff]
  %v960 = vld [vmem:[%s956 + $0x18] sm:$0xff]
  %v962 = vsel %vm447, %v948, 0
  %v965 = vsel %vm447, %v949, 0
  %v968 = vsel %vm447, %v950, 0
  %v971 = vsel %vm447, %v951, 0
  %v974 = vsel %vm447, %v952, 0
  %v977 = vsel %vm447, %v953, 0
  %v980 = vsel %vm447, %v954, 0
  %v983 = vsel %vm447, %v955, 0
  %985 = vmatprep.subr.mxu0 0.0
  %986 = vmatpush1.msra.mxu0 0.0
  %987 = vmatprep.subr.mxu0 0.0
  %988 = vmatpush1.msra.mxu0 0.0
  %989 = vmatprep.subr.mxu0 0.0
  %990 = vmatpush1.msra.mxu0 0.0
  %991 = vmatprep.subr.mxu0 0.0
  %992 = vmatpush1.msra.mxu0 0.0
  %993 = vmatprep.subr.mxu0 0.0
  %994 = vmatpush1.msra.mxu0 0.0
  %995 = vmatprep.subr.mxu0 0.0
  %996 = vmatpush1.msra.mxu0 0.0
  %997 = vmatprep.subr.mxu0 0.0
  %998 = vmatpush1.msra.mxu0 0.0
  %999 = vmatprep.subr.mxu0 0.0
  %1000 = vmatpush1.msra.mxu0 0.0
  %1001 = vmatprep.subr.mxu0 0.0
  %1002 = vmatpush1.msra.mxu0 0.0
  %1003 = vmatprep.subr.mxu0 0.0
  %1004 = vmatpush1.msra.mxu0 0.0
  %1005 = vmatprep.subr.mxu0 0.0
  %1006 = vmatpush1.msra.mxu0 0.0
  %1007 = vmatprep.subr.mxu0 0.0
  %1008 = vmatpush1.msra.mxu0 0.0
  %1009 = vmatprep.subr.mxu0 0.0
  %1010 = vmatpush1.msra.mxu0 %v960
  %1011 = vmatprep.subr.mxu0 0.0
  %1012 = vmatpush1.msra.mxu0 %v959
  %1013 = vmatprep.subr.mxu0 0.0
  %1014 = vmatpush1.msra.mxu0 %v958
  %1015 = vmatprep.subr.mxu0 0.0
  %1016 = vmatpush1.msra.mxu0 %v957
  %1017 = vmatprep.subr.mxu0 0.0
  %1018 = vmatpush2.msra.mxu0 0.0
  %1019 = vmatprep.subr.mxu0 0.0
  %1020 = vmatpush2.msra.mxu0 0.0
  %1021 = vmatprep.subr.mxu0 0.0
  %1022 = vmatpush2.msra.mxu0 0.0
  %1023 = vmatprep.subr.mxu0 0.0
  %1024 = vmatpush2.msra.mxu0 0.0
  %1025 = vmatprep.subr.mxu0 0.0
  %1026 = vmatpush2.msra.mxu0 0.0
  %1027 = vmatprep.subr.mxu0 0.0
  %1028 = vmatpush2.msra.mxu0 0.0
  %1029 = vmatprep.subr.mxu0 0.0
  %1030 = vmatpush2.msra.mxu0 0.0
  %1031 = vmatprep.subr.mxu0 0.0
  %1032 = vmatpush2.msra.mxu0 0.0
  %1033 = vmatprep.subr.mxu0 0.0
  %1034 = vmatpush2.msra.mxu0 0.0
  %1035 = vmatprep.subr.mxu0 0.0
  %1036 = vmatpush2.msra.mxu0 0.0
  %1037 = vmatprep.subr.mxu0 0.0
  %1038 = vmatpush2.msra.mxu0 0.0
  %1039 = vmatprep.subr.mxu0 0.0
  %1040 = vmatpush2.msra.mxu0 0.0
  %1041 = vmatprep.subr.mxu0 0.0
  %1042 = vmatpush2.msra.mxu0 0.0
  %1043 = vmatprep.subr.mxu0 0.0
  %1044 = vmatpush2.msra.mxu0 0.0
  %1045 = vmatprep.subr.mxu0 0.0
  %1046 = vmatpush2.msra.mxu0 0.0
  %1047 = vmatprep.subr.mxu0 0.0
  %1048 = vmatpush2.msra.mxu0 0.0
  %1049 = vmatprep.mubr.f32.mxu0 0.0
  %1050 = vmatmul.mubr.f32.gmra.mxu0 %v962
  %v1051 = vpop.f32.mrf.mxu0
  %v1052 = vadd.f32 0.0, %v1051
  %v1053 = vpop.f32.mrf.mxu0
  %1054 = vmatprep.mubr.f32.mxu0 0.0
  %1055 = vmatmul.mubr.f32.gmra.mxu0 %v965
  %v1056 = vpop.f32.mrf.mxu0
  %v1057 = vadd.f32 0.0, %v1056
  %v1058 = vpop.f32.mrf.mxu0
  %1059 = vmatprep.mubr.f32.mxu0 0.0
  %1060 = vmatmul.mubr.f32.gmra.mxu0 %v968
  %v1061 = vpop.f32.mrf.mxu0
  %v1062 = vadd.f32 0.0, %v1061
  %v1063 = vpop.f32.mrf.mxu0
  %1064 = vmatprep.mubr.f32.mxu0 0.0
  %1065 = vmatmul.mubr.f32.gmra.mxu0 %v971
  %v1066 = vpop.f32.mrf.mxu0
  %v1067 = vadd.f32 0.0, %v1066
  %v1068 = vpop.f32.mrf.mxu0
  %1069 = vmatprep.mubr.f32.mxu0 0.0
  %1070 = vmatmul.mubr.f32.gmra.mxu0 %v974
  %v1071 = vpop.f32.mrf.mxu0
  %v1072 = vadd.f32 0.0, %v1071
  %v1073 = vpop.f32.mrf.mxu0
  %1074 = vmatprep.mubr.f32.mxu0 0.0
  %1075 = vmatmul.mubr.f32.gmra.mxu0 %v977
  %v1076 = vpop.f32.mrf.mxu0
  %v1077 = vadd.f32 0.0, %v1076
  %v1078 = vpop.f32.mrf.mxu0
  %1079 = vmatprep.mubr.f32.mxu0 0.0
  %1080 = vmatmul.mubr.f32.gmra.mxu0 %v980
  %v1081 = vpop.f32.mrf.mxu0
  %v1082 = vadd.f32 0.0, %v1081
  %v1083 = vpop.f32.mrf.mxu0
  %1084 = vmatprep.mubr.f32.mxu0 0.0
  %1085 = vmatmul.mubr.f32.gmra.mxu0 %v983
  %v1086 = vpop.f32.mrf.mxu0
  %v1087 = vadd.f32 0.0, %v1086
  %v1088 = vpop.f32.mrf.mxu0
  %1089 = vdwg.mxu0
  %v1090 = vadd.f32 %v854, %v1052
  %v1091 = vadd.f32 %v859, %v1057
  %v1092 = vadd.f32 %v864, %v1062
  %v1093 = vadd.f32 %v869, %v1067
  %v1094 = vadd.f32 %v874, %v1072
  %v1095 = vadd.f32 %v879, %v1077
  %v1096 = vadd.f32 %v884, %v1082
  %v1097 = vadd.f32 %v889, %v1087
  %v1098 = vadd.s32 %v553, 1
  %v1099 = vadd.s32 %v554, 1
  %v1100 = vadd.s32 %v555, 1
  %v1101 = vadd.s32 %v556, 1
  %v1102 = vadd.s32 %v557, 1
  %v1103 = vadd.s32 %v558, 1
  %v1104 = vadd.s32 %v559, 1
  %v1105 = vadd.s32 %v560, 1
  %vm1106 = vcmp.ge.s32.totalorder %v1098, 0
  %vm1107 = vcmp.ge.s32.totalorder %v1099, 0
  %vm1108 = vcmp.ge.s32.totalorder %v1100, 0
  %vm1109 = vcmp.ge.s32.totalorder %v1101, 0
  %vm1110 = vcmp.ge.s32.totalorder %v1102, 0
  %vm1111 = vcmp.ge.s32.totalorder %v1103, 0
  %vm1112 = vcmp.ge.s32.totalorder %v1104, 0
  %vm1113 = vcmp.ge.s32.totalorder %v1105, 0
  %vm1114 = vcmp.lt.s32.totalorder %v1098, 8
  %vm1115 = vcmp.lt.s32.totalorder %v1099, 8
  %vm1116 = vcmp.lt.s32.totalorder %v1100, 8
  %vm1117 = vcmp.lt.s32.totalorder %v1101, 8
  %vm1118 = vcmp.lt.s32.totalorder %v1102, 8
  %vm1119 = vcmp.lt.s32.totalorder %v1103, 8
  %vm1120 = vcmp.lt.s32.totalorder %v1104, 8
  %vm1121 = vcmp.lt.s32.totalorder %v1105, 8
  %vm1122 = vmand %vm1106, %vm1114
  %vm1123 = vmand %vm1107, %vm1115
  %vm1124 = vmand %vm1108, %vm1116
  %vm1125 = vmand %vm1109, %vm1117
  %vm1126 = vmand %vm1110, %vm1118
  %vm1127 = vmand %vm1111, %vm1119
  %vm1128 = vmand %vm1112, %vm1120
  %vm1129 = vmand %vm1113, %vm1121
  %v1130 = vld [vmem:[#allocation2 + $0x3] sm:$0xff]
  %v1131 = vld [vmem:[#allocation2 + $0xb] sm:$0xff]
  %v1132 = vld [vmem:[#allocation2 + $0x13] sm:$0xff]
  %v1133 = vld [vmem:[#allocation2 + $0x1b] sm:$0xff]
  %v1134 = vld [vmem:[#allocation2 + $0x23] sm:$0xff]
  %v1135 = vld [vmem:[#allocation2 + $0x2b] sm:$0xff]
  %v1136 = vld [vmem:[#allocation2 + $0x33] sm:$0xff]
  %v1137 = vld [vmem:[#allocation2 + $0x3b] sm:$0xff]
  %v1138 = vsel %vm1122, 1, 0
  %v1139 = vsel %vm1123, 1, 0
  %v1140 = vsel %vm1124, 1, 0
  %v1141 = vsel %vm1125, 1, 0
  %v1142 = vsel %vm1126, 1, 0
  %v1143 = vsel %vm1127, 1, 0
  %v1144 = vsel %vm1128, 1, 0
  %v1145 = vsel %vm1129, 1, 0
  %vm1146 = vcmp.eq.s32.totalorder %v1138, 1
  %vm1147 = vcmp.eq.s32.totalorder %v1139, 1
  %vm1148 = vcmp.eq.s32.totalorder %v1140, 1
  %vm1149 = vcmp.eq.s32.totalorder %v1141, 1
  %vm1150 = vcmp.eq.s32.totalorder %v1142, 1
  %vm1151 = vcmp.eq.s32.totalorder %v1143, 1
  %vm1152 = vcmp.eq.s32.totalorder %v1144, 1
  %vm1153 = vcmp.eq.s32.totalorder %v1145, 1
  %v1154 = vsel %vm1146, %v1130, 0.0
  %v1155 = vsel %vm1147, %v1131, 0.0
  %v1156 = vsel %vm1148, %v1132, 0.0
  %v1157 = vsel %vm1149, %v1133, 0.0
  %v1158 = vsel %vm1150, %v1134, 0.0
  %v1159 = vsel %vm1151, %v1135, 0.0
  %v1160 = vsel %vm1152, %v1136, 0.0
  %v1161 = vsel %vm1153, %v1137, 0.0
  %s1162 = scalar_lea.vmem %s3, 96
  %v1163 = vld [vmem:[%s1162] sm:$0xff]
  %v1164 = vld [vmem:[%s1162 + $0x8] sm:$0xff]
  %v1165 = vld [vmem:[%s1162 + $0x10] sm:$0xff]
  %v1166 = vld [vmem:[%s1162 + $0x18] sm:$0xff]
  %v1168 = vsel %vm447, %v1154, 0
  %v1171 = vsel %vm447, %v1155, 0
  %v1174 = vsel %vm447, %v1156, 0
  %v1177 = vsel %vm447, %v1157, 0
  %v1180 = vsel %vm447, %v1158, 0
  %v1183 = vsel %vm447, %v1159, 0
  %v1186 = vsel %vm447, %v1160, 0
  %v1189 = vsel %vm447, %v1161, 0
  %1191 = vmatprep.subr.mxu0 0.0
  %1192 = vmatpush1.msra.mxu0 0.0
  %1193 = vmatprep.subr.mxu0 0.0
  %1194 = vmatpush1.msra.mxu0 0.0
  %1195 = vmatprep.subr.mxu0 0.0
  %1196 = vmatpush1.msra.mxu0 0.0
  %1197 = vmatprep.subr.mxu0 0.0
  %1198 = vmatpush1.msra.mxu0 0.0
  %1199 = vmatprep.subr.mxu0 0.0
  %1200 = vmatpush1.msra.mxu0 0.0
  %1201 = vmatprep.subr.mxu0 0.0
  %1202 = vmatpush1.msra.mxu0 0.0
  %1203 = vmatprep.subr.mxu0 0.0
  %1204 = vmatpush1.msra.mxu0 0.0
  %1205 = vmatprep.subr.mxu0 0.0
  %1206 = vmatpush1.msra.mxu0 0.0
  %1207 = vmatprep.subr.mxu0 0.0
  %1208 = vmatpush1.msra.mxu0 0.0
  %1209 = vmatprep.subr.mxu0 0.0
  %1210 = vmatpush1.msra.mxu0 0.0
  %1211 = vmatprep.subr.mxu0 0.0
  %1212 = vmatpush1.msra.mxu0 0.0
  %1213 = vmatprep.subr.mxu0 0.0
  %1214 = vmatpush1.msra.mxu0 0.0
  %1215 = vmatprep.subr.mxu0 0.0
  %1216 = vmatpush1.msra.mxu0 %v1166
  %1217 = vmatprep.subr.mxu0 0.0
  %1218 = vmatpush1.msra.mxu0 %v1165
  %1219 = vmatprep.subr.mxu0 0.0
  %1220 = vmatpush1.msra.mxu0 %v1164
  %1221 = vmatprep.subr.mxu0 0.0
  %1222 = vmatpush1.msra.mxu0 %v1163
  %1223 = vmatprep.subr.mxu0 0.0
  %1224 = vmatpush2.msra.mxu0 0.0
  %1225 = vmatprep.subr.mxu0 0.0
  %1226 = vmatpush2.msra.mxu0 0.0
  %1227 = vmatprep.subr.mxu0 0.0
  %1228 = vmatpush2.msra.mxu0 0.0
  %1229 = vmatprep.subr.mxu0 0.0
  %1230 = vmatpush2.msra.mxu0 0.0
  %1231 = vmatprep.subr.mxu0 0.0
  %1232 = vmatpush2.msra.mxu0 0.0
  %1233 = vmatprep.subr.mxu0 0.0
  %1234 = vmatpush2.msra.mxu0 0.0
  %1235 = vmatprep.subr.mxu0 0.0
  %1236 = vmatpush2.msra.mxu0 0.0
  %1237 = vmatprep.subr.mxu0 0.0
  %1238 = vmatpush2.msra.mxu0 0.0
  %1239 = vmatprep.subr.mxu0 0.0
  %1240 = vmatpush2.msra.mxu0 0.0
  %1241 = vmatprep.subr.mxu0 0.0
  %1242 = vmatpush2.msra.mxu0 0.0
  %1243 = vmatprep.subr.mxu0 0.0
  %1244 = vmatpush2.msra.mxu0 0.0
  %1245 = vmatprep.subr.mxu0 0.0
  %1246 = vmatpush2.msra.mxu0 0.0
  %1247 = vmatprep.subr.mxu0 0.0
  %1248 = vmatpush2.msra.mxu0 0.0
  %1249 = vmatprep.subr.mxu0 0.0
  %1250 = vmatpush2.msra.mxu0 0.0
  %1251 = vmatprep.subr.mxu0 0.0
  %1252 = vmatpush2.msra.mxu0 0.0
  %1253 = vmatprep.subr.mxu0 0.0
  %1254 = vmatpush2.msra.mxu0 0.0
  %1255 = vmatprep.mubr.f32.mxu0 0.0
  %1256 = vmatmul.mubr.f32.gmra.mxu0 %v1168
  %v1257 = vpop.f32.mrf.mxu0
  %v1258 = vadd.f32 0.0, %v1257
  %v1259 = vpop.f32.mrf.mxu0
  %1260 = vmatprep.mubr.f32.mxu0 0.0
  %1261 = vmatmul.mubr.f32.gmra.mxu0 %v1171
  %v1262 = vpop.f32.mrf.mxu0
  %v1263 = vadd.f32 0.0, %v1262
  %v1264 = vpop.f32.mrf.mxu0
  %1265 = vmatprep.mubr.f32.mxu0 0.0
  %1266 = vmatmul.mubr.f32.gmra.mxu0 %v1174
  %v1267 = vpop.f32.mrf.mxu0
  %v1268 = vadd.f32 0.0, %v1267
  %v1269 = vpop.f32.mrf.mxu0
  %1270 = vmatprep.mubr.f32.mxu0 0.0
  %1271 = vmatmul.mubr.f32.gmra.mxu0 %v1177
  %v1272 = vpop.f32.mrf.mxu0
  %v1273 = vadd.f32 0.0, %v1272
  %v1274 = vpop.f32.mrf.mxu0
  %1275 = vmatprep.mubr.f32.mxu0 0.0
  %1276 = vmatmul.mubr.f32.gmra.mxu0 %v1180
  %v1277 = vpop.f32.mrf.mxu0
  %v1278 = vadd.f32 0.0, %v1277
  %v1279 = vpop.f32.mrf.mxu0
  %1280 = vmatprep.mubr.f32.mxu0 0.0
  %1281 = vmatmul.mubr.f32.gmra.mxu0 %v1183
  %v1282 = vpop.f32.mrf.mxu0
  %v1283 = vadd.f32 0.0, %v1282
  %v1284 = vpop.f32.mrf.mxu0
  %1285 = vmatprep.mubr.f32.mxu0 0.0
  %1286 = vmatmul.mubr.f32.gmra.mxu0 %v1186
  %v1287 = vpop.f32.mrf.mxu0
  %v1288 = vadd.f32 0.0, %v1287
  %v1289 = vpop.f32.mrf.mxu0
  %1290 = vmatprep.mubr.f32.mxu0 0.0
  %1291 = vmatmul.mubr.f32.gmra.mxu0 %v1189
  %v1292 = vpop.f32.mrf.mxu0
  %v1293 = vadd.f32 0.0, %v1292
  %v1294 = vpop.f32.mrf.mxu0
  %1295 = vdwg.mxu0
  %v1296 = vadd.f32 %v1090, %v1258
  %v1297 = vadd.f32 %v1091, %v1263
  %v1298 = vadd.f32 %v1092, %v1268
  %v1299 = vadd.f32 %v1093, %v1273
  %v1300 = vadd.f32 %v1094, %v1278
  %v1301 = vadd.f32 %v1095, %v1283
  %v1302 = vadd.f32 %v1096, %v1288
  %v1303 = vadd.f32 %v1097, %v1293
  %v1304 = vadd.s32 %v553, 2
  %v1305 = vadd.s32 %v554, 2
  %v1306 = vadd.s32 %v555, 2
  %v1307 = vadd.s32 %v556, 2
  %v1308 = vadd.s32 %v557, 2
  %v1309 = vadd.s32 %v558, 2
  %v1310 = vadd.s32 %v559, 2
  %v1311 = vadd.s32 %v560, 2
  %vm1312 = vcmp.ge.s32.totalorder %v1304, 0
  %vm1313 = vcmp.ge.s32.totalorder %v1305, 0
  %vm1314 = vcmp.ge.s32.totalorder %v1306, 0
  %vm1315 = vcmp.ge.s32.totalorder %v1307, 0
  %vm1316 = vcmp.ge.s32.totalorder %v1308, 0
  %vm1317 = vcmp.ge.s32.totalorder %v1309, 0
  %vm1318 = vcmp.ge.s32.totalorder %v1310, 0
  %vm1319 = vcmp.ge.s32.totalorder %v1311, 0
  %vm1320 = vcmp.lt.s32.totalorder %v1304, 8
  %vm1321 = vcmp.lt.s32.totalorder %v1305, 8
  %vm1322 = vcmp.lt.s32.totalorder %v1306, 8
  %vm1323 = vcmp.lt.s32.totalorder %v1307, 8
  %vm1324 = vcmp.lt.s32.totalorder %v1308, 8
  %vm1325 = vcmp.lt.s32.totalorder %v1309, 8
  %vm1326 = vcmp.lt.s32.totalorder %v1310, 8
  %vm1327 = vcmp.lt.s32.totalorder %v1311, 8
  %vm1328 = vmand %vm1312, %vm1320
  %vm1329 = vmand %vm1313, %vm1321
  %vm1330 = vmand %vm1314, %vm1322
  %vm1331 = vmand %vm1315, %vm1323
  %vm1332 = vmand %vm1316, %vm1324
  %vm1333 = vmand %vm1317, %vm1325
  %vm1334 = vmand %vm1318, %vm1326
  %vm1335 = vmand %vm1319, %vm1327
  %v1336 = vld [vmem:[#allocation2 + $0x4] sm:$0xff]
  %v1337 = vld [vmem:[#allocation2 + $0xc] sm:$0xff]
  %v1338 = vld [vmem:[#allocation2 + $0x14] sm:$0xff]
  %v1339 = vld [vmem:[#allocation2 + $0x1c] sm:$0xff]
  %v1340 = vld [vmem:[#allocation2 + $0x24] sm:$0xff]
  %v1341 = vld [vmem:[#allocation2 + $0x2c] sm:$0xff]
  %v1342 = vld [vmem:[#allocation2 + $0x34] sm:$0xff]
  %v1343 = vld [vmem:[#allocation2 + $0x3c] sm:$0xff]
  %v1344 = vsel %vm1328, 1, 0
  %v1345 = vsel %vm1329, 1, 0
  %v1346 = vsel %vm1330, 1, 0
  %v1347 = vsel %vm1331, 1, 0
  %v1348 = vsel %vm1332, 1, 0
  %v1349 = vsel %vm1333, 1, 0
  %v1350 = vsel %vm1334, 1, 0
  %v1351 = vsel %vm1335, 1, 0
  %vm1352 = vcmp.eq.s32.totalorder %v1344, 1
  %vm1353 = vcmp.eq.s32.totalorder %v1345, 1
  %vm1354 = vcmp.eq.s32.totalorder %v1346, 1
  %vm1355 = vcmp.eq.s32.totalorder %v1347, 1
  %vm1356 = vcmp.eq.s32.totalorder %v1348, 1
  %vm1357 = vcmp.eq.s32.totalorder %v1349, 1
  %vm1358 = vcmp.eq.s32.totalorder %v1350, 1
  %vm1359 = vcmp.eq.s32.totalorder %v1351, 1
  %v1360 = vsel %vm1352, %v1336, 0.0
  %v1361 = vsel %vm1353, %v1337, 0.0
  %v1362 = vsel %vm1354, %v1338, 0.0
  %v1363 = vsel %vm1355, %v1339, 0.0
  %v1364 = vsel %vm1356, %v1340, 0.0
  %v1365 = vsel %vm1357, %v1341, 0.0
  %v1366 = vsel %vm1358, %v1342, 0.0
  %v1367 = vsel %vm1359, %v1343, 0.0
  %s1368 = scalar_lea.vmem %s3, 128
  %v1369 = vld [vmem:[%s1368] sm:$0xff]
  %v1370 = vld [vmem:[%s1368 + $0x8] sm:$0xff]
  %v1371 = vld [vmem:[%s1368 + $0x10] sm:$0xff]
  %v1372 = vld [vmem:[%s1368 + $0x18] sm:$0xff]
  %v1374 = vsel %vm447, %v1360, 0
  %v1377 = vsel %vm447, %v1361, 0
  %v1380 = vsel %vm447, %v1362, 0
  %v1383 = vsel %vm447, %v1363, 0
  %v1386 = vsel %vm447, %v1364, 0
  %v1389 = vsel %vm447, %v1365, 0
  %v1392 = vsel %vm447, %v1366, 0
  %v1395 = vsel %vm447, %v1367, 0
  %1397 = vmatprep.subr.mxu0 0.0
  %1398 = vmatpush1.msra.mxu0 0.0
  %1399 = vmatprep.subr.mxu0 0.0
  %1400 = vmatpush1.msra.mxu0 0.0
  %1401 = vmatprep.subr.mxu0 0.0
  %1402 = vmatpush1.msra.mxu0 0.0
  %1403 = vmatprep.subr.mxu0 0.0
  %1404 = vmatpush1.msra.mxu0 0.0
  %1405 = vmatprep.subr.mxu0 0.0
  %1406 = vmatpush1.msra.mxu0 0.0
  %1407 = vmatprep.subr.mxu0 0.0
  %1408 = vmatpush1.msra.mxu0 0.0
  %1409 = vmatprep.subr.mxu0 0.0
  %1410 = vmatpush1.msra.mxu0 0.0
  %1411 = vmatprep.subr.mxu0 0.0
  %1412 = vmatpush1.msra.mxu0 0.0
  %1413 = vmatprep.subr.mxu0 0.0
  %1414 = vmatpush1.msra.mxu0 0.0
  %1415 = vmatprep.subr.mxu0 0.0
  %1416 = vmatpush1.msra.mxu0 0.0
  %1417 = vmatprep.subr.mxu0 0.0
  %1418 = vmatpush1.msra.mxu0 0.0
  %1419 = vmatprep.subr.mxu0 0.0
  %1420 = vmatpush1.msra.mxu0 0.0
  %1421 = vmatprep.subr.mxu0 0.0
  %1422 = vmatpush1.msra.mxu0 %v1372
  %1423 = vmatprep.subr.mxu0 0.0
  %1424 = vmatpush1.msra.mxu0 %v1371
  %1425 = vmatprep.subr.mxu0 0.0
  %1426 = vmatpush1.msra.mxu0 %v1370
  %1427 = vmatprep.subr.mxu0 0.0
  %1428 = vmatpush1.msra.mxu0 %v1369
  %1429 = vmatprep.subr.mxu0 0.0
  %1430 = vmatpush2.msra.mxu0 0.0
  %1431 = vmatprep.subr.mxu0 0.0
  %1432 = vmatpush2.msra.mxu0 0.0
  %1433 = vmatprep.subr.mxu0 0.0
  %1434 = vmatpush2.msra.mxu0 0.0
  %1435 = vmatprep.subr.mxu0 0.0
  %1436 = vmatpush2.msra.mxu0 0.0
  %1437 = vmatprep.subr.mxu0 0.0
  %1438 = vmatpush2.msra.mxu0 0.0
  %1439 = vmatprep.subr.mxu0 0.0
  %1440 = vmatpush2.msra.mxu0 0.0
  %1441 = vmatprep.subr.mxu0 0.0
  %1442 = vmatpush2.msra.mxu0 0.0
  %1443 = vmatprep.subr.mxu0 0.0
  %1444 = vmatpush2.msra.mxu0 0.0
  %1445 = vmatprep.subr.mxu0 0.0
  %1446 = vmatpush2.msra.mxu0 0.0
  %1447 = vmatprep.subr.mxu0 0.0
  %1448 = vmatpush2.msra.mxu0 0.0
  %1449 = vmatprep.subr.mxu0 0.0
  %1450 = vmatpush2.msra.mxu0 0.0
  %1451 = vmatprep.subr.mxu0 0.0
  %1452 = vmatpush2.msra.mxu0 0.0
  %1453 = vmatprep.subr.mxu0 0.0
  %1454 = vmatpush2.msra.mxu0 0.0
  %1455 = vmatprep.subr.mxu0 0.0
  %1456 = vmatpush2.msra.mxu0 0.0
  %1457 = vmatprep.subr.mxu0 0.0
  %1458 = vmatpush2.msra.mxu0 0.0
  %1459 = vmatprep.subr.mxu0 0.0
  %1460 = vmatpush2.msra.mxu0 0.0
  %1461 = vmatprep.mubr.f32.mxu0 0.0
  %1462 = vmatmul.mubr.f32.gmra.mxu0 %v1374
  %v1463 = vpop.f32.mrf.mxu0
  %v1464 = vadd.f32 0.0, %v1463
  %v1465 = vpop.f32.mrf.mxu0
  %1466 = vmatprep.mubr.f32.mxu0 0.0
  %1467 = vmatmul.mubr.f32.gmra.mxu0 %v1377
  %v1468 = vpop.f32.mrf.mxu0
  %v1469 = vadd.f32 0.0, %v1468
  %v1470 = vpop.f32.mrf.mxu0
  %1471 = vmatprep.mubr.f32.mxu0 0.0
  %1472 = vmatmul.mubr.f32.gmra.mxu0 %v1380
  %v1473 = vpop.f32.mrf.mxu0
  %v1474 = vadd.f32 0.0, %v1473
  %v1475 = vpop.f32.mrf.mxu0
  %1476 = vmatprep.mubr.f32.mxu0 0.0
  %1477 = vmatmul.mubr.f32.gmra.mxu0 %v1383
  %v1478 = vpop.f32.mrf.mxu0
  %v1479 = vadd.f32 0.0, %v1478
  %v1480 = vpop.f32.mrf.mxu0
  %1481 = vmatprep.mubr.f32.mxu0 0.0
  %1482 = vmatmul.mubr.f32.gmra.mxu0 %v1386
  %v1483 = vpop.f32.mrf.mxu0
  %v1484 = vadd.f32 0.0, %v1483
  %v1485 = vpop.f32.mrf.mxu0
  %1486 = vmatprep.mubr.f32.mxu0 0.0
  %1487 = vmatmul.mubr.f32.gmra.mxu0 %v1389
  %v1488 = vpop.f32.mrf.mxu0
  %v1489 = vadd.f32 0.0, %v1488
  %v1490 = vpop.f32.mrf.mxu0
  %1491 = vmatprep.mubr.f32.mxu0 0.0
  %1492 = vmatmul.mubr.f32.gmra.mxu0 %v1392
  %v1493 = vpop.f32.mrf.mxu0
  %v1494 = vadd.f32 0.0, %v1493
  %v1495 = vpop.f32.mrf.mxu0
  %1496 = vmatprep.mubr.f32.mxu0 0.0
  %1497 = vmatmul.mubr.f32.gmra.mxu0 %v1395
  %v1498 = vpop.f32.mrf.mxu0
  %v1499 = vadd.f32 0.0, %v1498
  %v1500 = vpop.f32.mrf.mxu0
  %1501 = vdwg.mxu0
  %v1502 = vadd.f32 %v1296, %v1464
  %v1503 = vadd.f32 %v1297, %v1469
  %v1504 = vadd.f32 %v1298, %v1474
  %v1505 = vadd.f32 %v1299, %v1479
  %v1506 = vadd.f32 %v1300, %v1484
  %v1507 = vadd.f32 %v1301, %v1489
  %v1508 = vadd.f32 %v1302, %v1494
  %v1509 = vadd.f32 %v1303, %v1499
  %v1510 = vld [vmem:[%s4] sm:$0x1]
  %v1512 = vlaneseq
  %v1513 = vshrl.u32 %v1512, 7
  %v1514 = vsub.s32 0, %v1513
  %v1515 = vrot.slane %v1510, %v1514
  %v1517 = vadd.f32 %v1502, %v1515
  %v1518 = vadd.f32 %v1503, %v1515
  %v1519 = vadd.f32 %v1504, %v1515
  %v1520 = vadd.f32 %v1505, %v1515
  %v1521 = vadd.f32 %v1506, %v1515
  %v1522 = vadd.f32 %v1507, %v1515
  %v1523 = vadd.f32 %v1508, %v1515
  %v1524 = vadd.f32 %v1509, %v1515
  %v1525 = vmul.f32 %v1517, 0.5
  %v1526 = vmul.f32 %v1518, 0.5
  %v1527 = vmul.f32 %v1519, 0.5
  %v1528 = vmul.f32 %v1520, 0.5
  %v1529 = vmul.f32 %v1521, 0.5
  %v1530 = vmul.f32 %v1522, 0.5
  %v1531 = vmul.f32 %v1523, 0.5
  %v1532 = vmul.f32 %v1524, 0.5
  %v1533 = vmul.f32 %v1517, 0.70710677
  %v1534 = vmul.f32 %v1518, 0.70710677
  %v1535 = vmul.f32 %v1519, 0.70710677
  %v1536 = vmul.f32 %v1520, 0.70710677
  %v1537 = vmul.f32 %v1521, 0.70710677
  %v1538 = vmul.f32 %v1522, 0.70710677
  %v1539 = vmul.f32 %v1523, 0.70710677
  %v1540 = vmul.f32 %v1524, 0.70710677
  %vm1541 = vcmp.ge.f32.partialorder %v1533, 0.0
  %vm1542 = vcmp.ge.f32.partialorder %v1534, 0.0
  %vm1543 = vcmp.ge.f32.partialorder %v1535, 0.0
  %vm1544 = vcmp.ge.f32.partialorder %v1536, 0.0
  %vm1545 = vcmp.ge.f32.partialorder %v1537, 0.0
  %vm1546 = vcmp.ge.f32.partialorder %v1538, 0.0
  %vm1547 = vcmp.ge.f32.partialorder %v1539, 0.0
  %vm1548 = vcmp.ge.f32.partialorder %v1540, 0.0
  %v1549 = vsel %vm1541, 1.0, -1.0
  %v1550 = vsel %vm1542, 1.0, -1.0
  %v1551 = vsel %vm1543, 1.0, -1.0
  %v1552 = vsel %vm1544, 1.0, -1.0
  %v1553 = vsel %vm1545, 1.0, -1.0
  %v1554 = vsel %vm1546, 1.0, -1.0
  %v1555 = vsel %vm1547, 1.0, -1.0
  %v1556 = vsel %vm1548, 1.0, -1.0
  %v1557 = vand.u32 2147483647, %v1533
  %v1558 = vand.u32 2147483647, %v1534
  %v1559 = vand.u32 2147483647, %v1535
  %v1560 = vand.u32 2147483647, %v1536
  %v1561 = vand.u32 2147483647, %v1537
  %v1562 = vand.u32 2147483647, %v1538
  %v1563 = vand.u32 2147483647, %v1539
  %v1564 = vand.u32 2147483647, %v1540
  %v1565 = vmul.f32 %v1557, 0.3275911
  %v1566 = vmul.f32 %v1558, 0.3275911
  %v1567 = vmul.f32 %v1559, 0.3275911
  %v1568 = vmul.f32 %v1560, 0.3275911
  %v1569 = vmul.f32 %v1561, 0.3275911
  %v1570 = vmul.f32 %v1562, 0.3275911
  %v1571 = vmul.f32 %v1563, 0.3275911
  %v1572 = vmul.f32 %v1564, 0.3275911
  %v1573 = vadd.f32 %v1565, 1.0
  %v1574 = vadd.f32 %v1566, 1.0
  %v1575 = vadd.f32 %v1567, 1.0
  %v1576 = vadd.f32 %v1568, 1.0
  %v1577 = vadd.f32 %v1569, 1.0
  %v1578 = vadd.f32 %v1570, 1.0
  %v1579 = vadd.f32 %v1571, 1.0
  %v1580 = vadd.f32 %v1572, 1.0
  %v1581 = vrcp.pop %v1573
  %v1582 = vmul.f32 1.0, %v1581
  %v1583 = vrcp.pop %v1574
  %v1584 = vmul.f32 1.0, %v1583
  %v1585 = vrcp.pop %v1575
  %v1586 = vmul.f32 1.0, %v1585
  %v1587 = vrcp.pop %v1576
  %v1588 = vmul.f32 1.0, %v1587
  %v1589 = vrcp.pop %v1577
  %v1590 = vmul.f32 1.0, %v1589
  %v1591 = vrcp.pop %v1578
  %v1592 = vmul.f32 1.0, %v1591
  %v1593 = vrcp.pop %v1579
  %v1594 = vmul.f32 1.0, %v1593
  %v1595 = vrcp.pop %v1580
  %v1596 = vmul.f32 1.0, %v1595
  %v1597 = vmul.f32 %v1582, 1.0614054
  %v1598 = vmul.f32 %v1584, 1.0614054
  %v1599 = vmul.f32 %v1586, 1.0614054
  %v1600 = vmul.f32 %v1588, 1.0614054
  %v1601 = vmul.f32 %v1590, 1.0614054
  %v1602 = vmul.f32 %v1592, 1.0614054
  %v1603 = vmul.f32 %v1594, 1.0614054
  %v1604 = vmul.f32 %v1596, 1.0614054
  %v1605 = vadd.f32 %v1597, -1.4531521
  %v1606 = vadd.f32 %v1598, -1.4531521
  %v1607 = vadd.f32 %v1599, -1.4531521
  %v1608 = vadd.f32 %v1600, -1.4531521
  %v1609 = vadd.f32 %v1601, -1.4531521
  %v1610 = vadd.f32 %v1602, -1.4531521
  %v1611 = vadd.f32 %v1603, -1.4531521
  %v1612 = vadd.f32 %v1604, -1.4531521
  %v1613 = vmul.f32 %v1605, %v1582
  %v1614 = vmul.f32 %v1606, %v1584
  %v1615 = vmul.f32 %v1607, %v1586
  %v1616 = vmul.f32 %v1608, %v1588
  %v1617 = vmul.f32 %v1609, %v1590
  %v1618 = vmul.f32 %v1610, %v1592
  %v1619 = vmul.f32 %v1611, %v1594
  %v1620 = vmul.f32 %v1612, %v1596
  %v1621 = vadd.f32 %v1613, 1.4214138
  %v1622 = vadd.f32 %v1614, 1.4214138
  %v1623 = vadd.f32 %v1615, 1.4214138
  %v1624 = vadd.f32 %v1616, 1.4214138
  %v1625 = vadd.f32 %v1617, 1.4214138
  %v1626 = vadd.f32 %v1618, 1.4214138
  %v1627 = vadd.f32 %v1619, 1.4214138
  %v1628 = vadd.f32 %v1620, 1.4214138
  %v1629 = vmul.f32 %v1621, %v1582
  %v1630 = vmul.f32 %v1622, %v1584
  %v1631 = vmul.f32 %v1623, %v1586
  %v1632 = vmul.f32 %v1624, %v1588
  %v1633 = vmul.f32 %v1625, %v1590
  %v1634 = vmul.f32 %v1626, %v1592
  %v1635 = vmul.f32 %v1627, %v1594
  %v1636 = vmul.f32 %v1628, %v1596
  %v1637 = vadd.f32 %v1629, -0.28449672
  %v1638 = vadd.f32 %v1630, -0.28449672
  %v1639 = vadd.f32 %v1631, -0.28449672
  %v1640 = vadd.f32 %v1632, -0.28449672
  %v1641 = vadd.f32 %v1633, -0.28449672
  %v1642 = vadd.f32 %v1634, -0.28449672
  %v1643 = vadd.f32 %v1635, -0.28449672
  %v1644 = vadd.f32 %v1636, -0.28449672
  %v1645 = vmul.f32 %v1637, %v1582
  %v1646 = vmul.f32 %v1638, %v1584
  %v1647 = vmul.f32 %v1639, %v1586
  %v1648 = vmul.f32 %v1640, %v1588
  %v1649 = vmul.f32 %v1641, %v1590
  %v1650 = vmul.f32 %v1642, %v1592
  %v1651 = vmul.f32 %v1643, %v1594
  %v1652 = vmul.f32 %v1644, %v1596
  %v1653 = vadd.f32 %v1645, 0.2548296
  %v1654 = vadd.f32 %v1646, 0.2548296
  %v1655 = vadd.f32 %v1647, 0.2548296
  %v1656 = vadd.f32 %v1648, 0.2548296
  %v1657 = vadd.f32 %v1649, 0.2548296
  %v1658 = vadd.f32 %v1650, 0.2548296
  %v1659 = vadd.f32 %v1651, 0.2548296
  %v1660 = vadd.f32 %v1652, 0.2548296
  %v1661 = vmul.f32 %v1653, %v1582
  %v1662 = vmul.f32 %v1654, %v1584
  %v1663 = vmul.f32 %v1655, %v1586
  %v1664 = vmul.f32 %v1656, %v1588
  %v1665 = vmul.f32 %v1657, %v1590
  %v1666 = vmul.f32 %v1658, %v1592
  %v1667 = vmul.f32 %v1659, %v1594
  %v1668 = vmul.f32 %v1660, %v1596
  %v1669 = vsub.f32 0.0, %v1557
  %v1670 = vsub.f32 0.0, %v1558
  %v1671 = vsub.f32 0.0, %v1559
  %v1672 = vsub.f32 0.0, %v1560
  %v1673 = vsub.f32 0.0, %v1561
  %v1674 = vsub.f32 0.0, %v1562
  %v1675 = vsub.f32 0.0, %v1563
  %v1676 = vsub.f32 0.0, %v1564
  %v1677 = vmul.f32 %v1669, %v1557
  %v1678 = vmul.f32 %v1670, %v1558
  %v1679 = vmul.f32 %v1671, %v1559
  %v1680 = vmul.f32 %v1672, %v1560
  %v1681 = vmul.f32 %v1673, %v1561
  %v1682 = vmul.f32 %v1674, %v1562
  %v1683 = vmul.f32 %v1675, %v1563
  %v1684 = vmul.f32 %v1676, %v1564
  %v1685 = vmul.f32 %v1677, 1.442695
  %v1686 = vpow.pop %v1685
  %v1687 = vmul.f32 %v1678, 1.442695
  %v1688 = vpow.pop %v1687
  %v1689 = vmul.f32 %v1679, 1.442695
  %v1690 = vpow.pop %v1689
  %v1691 = vmul.f32 %v1680, 1.442695
  %v1692 = vpow.pop %v1691
  %v1693 = vmul.f32 %v1681, 1.442695
  %v1694 = vpow.pop %v1693
  %v1695 = vmul.f32 %v1682, 1.442695
  %v1696 = vpow.pop %v1695
  %v1697 = vmul.f32 %v1683, 1.442695
  %v1698 = vpow.pop %v1697
  %v1699 = vmul.f32 %v1684, 1.442695
  %v1700 = vpow.pop %v1699
  %v1701 = vmul.f32 %v1661, %v1686
  %v1702 = vmul.f32 %v1662, %v1688
  %v1703 = vmul.f32 %v1663, %v1690
  %v1704 = vmul.f32 %v1664, %v1692
  %v1705 = vmul.f32 %v1665, %v1694
  %v1706 = vmul.f32 %v1666, %v1696
  %v1707 = vmul.f32 %v1667, %v1698
  %v1708 = vmul.f32 %v1668, %v1700
  %v1709 = vsub.f32 1.0, %v1701
  %v1710 = vsub.f32 1.0, %v1702
  %v1711 = vsub.f32 1.0, %v1703
  %v1712 = vsub.f32 1.0, %v1704
  %v1713 = vsub.f32 1.0, %v1705
  %v1714 = vsub.f32 1.0, %v1706
  %v1715 = vsub.f32 1.0, %v1707
  %v1716 = vsub.f32 1.0, %v1708
  %v1717 = vmul.f32 %v1549, %v1709
  %v1718 = vmul.f32 %v1550, %v1710
  %v1719 = vmul.f32 %v1551, %v1711
  %v1720 = vmul.f32 %v1552, %v1712
  %v1721 = vmul.f32 %v1553, %v1713
  %v1722 = vmul.f32 %v1554, %v1714
  %v1723 = vmul.f32 %v1555, %v1715
  %v1724 = vmul.f32 %v1556, %v1716
  %v1725 = vadd.f32 %v1717, 1.0
  %v1726 = vadd.f32 %v1718, 1.0
  %v1727 = vadd.f32 %v1719, 1.0
  %v1728 = vadd.f32 %v1720, 1.0
  %v1729 = vadd.f32 %v1721, 1.0
  %v1730 = vadd.f32 %v1722, 1.0
  %v1731 = vadd.f32 %v1723, 1.0
  %v1732 = vadd.f32 %v1724, 1.0
  %v1733 = vmul.f32 %v1525, %v1725
  %v1734 = vmul.f32 %v1526, %v1726
  %v1735 = vmul.f32 %v1527, %v1727
  %v1736 = vmul.f32 %v1528, %v1728
  %v1737 = vmul.f32 %v1529, %v1729
  %v1738 = vmul.f32 %v1530, %v1730
  %v1739 = vmul.f32 %v1531, %v1731
  %v1740 = vmul.f32 %v1532, %v1732
  %1741 = vst.msk [vmem:[#allocation3] sm:$0xff] %vm447, %v1733
  %1742 = vst.msk [vmem:[#allocation3 + $0x8] sm:$0xff] %vm447, %v1734
  %1743 = vst.msk [vmem:[#allocation3 + $0x10] sm:$0xff] %vm447, %v1735
  %1744 = vst.msk [vmem:[#allocation3 + $0x18] sm:$0xff] %vm447, %v1736
  %1745 = vst.msk [vmem:[#allocation3 + $0x20] sm:$0xff] %vm447, %v1737
  %1746 = vst.msk [vmem:[#allocation3 + $0x28] sm:$0xff] %vm447, %v1738
  %1747 = vst.msk [vmem:[#allocation3 + $0x30] sm:$0xff] %vm447, %v1739
  %1748 = vst.msk [vmem:[#allocation3 + $0x38] sm:$0xff] %vm447, %v1740
  %v1749 = vld [vmem:[#allocation3] ss:$2 sm:$0xff]
  %s1750 = scalar_lea.vmem [#allocation3], 16
  %v1751 = vld [vmem:[%s1750] ss:$2 sm:$0xff]
  %s1752 = scalar_lea.vmem [#allocation3], 32
  %v1753 = vld [vmem:[%s1752] ss:$2 sm:$0xff]
  %s1754 = scalar_lea.vmem [#allocation3], 48
  %v1755 = vld [vmem:[%s1754] ss:$2 sm:$0xff]
  %s1756 = scalar_lea.vmem [#allocation3], 1
  %v1757 = vld [vmem:[%s1756] ss:$2 sm:$0xff]
  %s1758 = scalar_lea.vmem [#allocation3], 17
  %v1759 = vld [vmem:[%s1758] ss:$2 sm:$0xff]
  %s1760 = scalar_lea.vmem [#allocation3], 33
  %v1761 = vld [vmem:[%s1760] ss:$2 sm:$0xff]
  %s1762 = scalar_lea.vmem [#allocation3], 49
  %v1763 = vld [vmem:[%s1762] ss:$2 sm:$0xff]
  %v1764 = vmax.f32 %v1749, %v1757
  %v1765 = vmax.f32 %v1751, %v1759
  %v1766 = vmax.f32 %v1753, %v1761
  %v1767 = vmax.f32 %v1755, %v1763
  %1768 = vst.msk [vmem:[#allocation4] sm:$0xff] %vm447, %v1764
  %1769 = vst.msk [vmem:[#allocation4 + $0x8] sm:$0xff] %vm447, %v1765
  %1770 = vst.msk [vmem:[#allocation4 + $0x10] sm:$0xff] %vm447, %v1766
  %1771 = vst.msk [vmem:[#allocation4 + $0x18] sm:$0xff] %vm447, %v1767
  %v1772 = vld [vmem:[%s5] sm:$0xff]
  %v1773 = vld [vmem:[%s5 + $0x8] sm:$0xff]
  %v1774 = vld [vmem:[%s5 + $0x10] sm:$0xff]
  %v1775 = vld [vmem:[%s5 + $0x18] sm:$0xff]
  %v1776 = vld [vmem:[%s7] sm:$0x1]
  %v1778 = vlaneseq
  %v1779 = vshrl.u32 %v1778, 7
  %v1780 = vsub.s32 0, %v1779
  %v1781 = vrot.slane %v1776, %v1780
  %v1784 = vsel %vm447, %v1764, 0
  %v1787 = vsel %vm447, %v1765, 0
  %v1790 = vsel %vm447, %v1766, 0
  %v1793 = vsel %vm447, %v1767, 0
  %1795 = vmatprep.subr.mxu0 0.0
  %1796 = vmatpush1.msra.mxu0 0.0
  %1797 = vmatprep.subr.mxu0 0.0
  %1798 = vmatpush1.msra.mxu0 0.0
  %1799 = vmatprep.subr.mxu0 0.0
  %1800 = vmatpush1.msra.mxu0 0.0
  %1801 = vmatprep.subr.mxu0 0.0
  %1802 = vmatpush1.msra.mxu0 0.0
  %1803 = vmatprep.subr.mxu0 0.0
  %1804 = vmatpush1.msra.mxu0 0.0
  %1805 = vmatprep.subr.mxu0 0.0
  %1806 = vmatpush1.msra.mxu0 0.0
  %1807 = vmatprep.subr.mxu0 0.0
  %1808 = vmatpush1.msra.mxu0 0.0
  %1809 = vmatprep.subr.mxu0 0.0
  %1810 = vmatpush1.msra.mxu0 0.0
  %1811 = vmatprep.subr.mxu0 0.0
  %1812 = vmatpush1.msra.mxu0 0.0
  %1813 = vmatprep.subr.mxu0 0.0
  %1814 = vmatpush1.msra.mxu0 0.0
  %1815 = vmatprep.subr.mxu0 0.0
  %1816 = vmatpush1.msra.mxu0 0.0
  %1817 = vmatprep.subr.mxu0 0.0
  %1818 = vmatpush1.msra.mxu0 0.0
  %1819 = vmatprep.subr.mxu0 0.0
  %1820 = vmatpush1.msra.mxu0 %v1775
  %1821 = vmatprep.subr.mxu0 0.0
  %1822 = vmatpush1.msra.mxu0 %v1774
  %1823 = vmatprep.subr.mxu0 0.0
  %1824 = vmatpush1.msra.mxu0 %v1773
  %1825 = vmatprep.subr.mxu0 0.0
  %1826 = vmatpush1.msra.mxu0 %v1772
  %1827 = vmatprep.subr.mxu0 0.0
  %1828 = vmatpush2.msra.mxu0 0.0
  %1829 = vmatprep.subr.mxu0 0.0
  %1830 = vmatpush2.msra.mxu0 0.0
  %1831 = vmatprep.subr.mxu0 0.0
  %1832 = vmatpush2.msra.mxu0 0.0
  %1833 = vmatprep.subr.mxu0 0.0
  %1834 = vmatpush2.msra.mxu0 0.0
  %1835 = vmatprep.subr.mxu0 0.0
  %1836 = vmatpush2.msra.mxu0 0.0
  %1837 = vmatprep.subr.mxu0 0.0
  %1838 = vmatpush2.msra.mxu0 0.0
  %1839 = vmatprep.subr.mxu0 0.0
  %1840 = vmatpush2.msra.mxu0 0.0
  %1841 = vmatprep.subr.mxu0 0.0
  %1842 = vmatpush2.msra.mxu0 0.0
  %1843 = vmatprep.subr.mxu0 0.0
  %1844 = vmatpush2.msra.mxu0 0.0
  %1845 = vmatprep.subr.mxu0 0.0
  %1846 = vmatpush2.msra.mxu0 0.0
  %1847 = vmatprep.subr.mxu0 0.0
  %1848 = vmatpush2.msra.mxu0 0.0
  %1849 = vmatprep.subr.mxu0 0.0
  %1850 = vmatpush2.msra.mxu0 0.0
  %1851 = vmatprep.subr.mxu0 0.0
  %1852 = vmatpush2.msra.mxu0 0.0
  %1853 = vmatprep.subr.mxu0 0.0
  %1854 = vmatpush2.msra.mxu0 0.0
  %1855 = vmatprep.subr.mxu0 0.0
  %1856 = vmatpush2.msra.mxu0 0.0
  %1857 = vmatprep.subr.mxu0 0.0
  %1858 = vmatpush2.msra.mxu0 0.0
  %1859 = vmatprep.mubr.f32.mxu0 0.0
  %1860 = vmatmul.mubr.f32.gmra.mxu0 %v1784
  %v1861 = vpop.f32.mrf.mxu0
  %v1862 = vadd.f32 %v1781, %v1861
  %v1863 = vpop.f32.mrf.mxu0
  %1864 = vmatprep.mubr.f32.mxu0 0.0
  %1865 = vmatmul.mubr.f32.gmra.mxu0 %v1787
  %v1866 = vpop.f32.mrf.mxu0
  %v1867 = vadd.f32 %v1781, %v1866
  %v1868 = vpop.f32.mrf.mxu0
  %1869 = vmatprep.mubr.f32.mxu0 0.0
  %1870 = vmatmul.mubr.f32.gmra.mxu0 %v1790
  %v1871 = vpop.f32.mrf.mxu0
  %v1872 = vadd.f32 %v1781, %v1871
  %v1873 = vpop.f32.mrf.mxu0
  %1874 = vmatprep.mubr.f32.mxu0 0.0
  %1875 = vmatmul.mubr.f32.gmra.mxu0 %v1793
  %v1876 = vpop.f32.mrf.mxu0
  %v1877 = vadd.f32 %v1781, %v1876
  %v1878 = vpop.f32.mrf.mxu0
  %1879 = vdwg.mxu0
  %1880 = vst [vmem:[#allocation5] sm:$0xff] %v1862
  %1881 = vst [vmem:[#allocation5 + $0x8] sm:$0xff] %v1867
  %1882 = vst [vmem:[#allocation5 + $0x10] sm:$0xff] %v1872
  %1883 = vst [vmem:[#allocation5 + $0x18] sm:$0xff] %v1877
  %v1884 = vld [vmem:[%s6] sm:$0xff]
  %v1885 = vld [vmem:[%s6 + $0x8] sm:$0xff]
  %v1886 = vld [vmem:[%s6 + $0x10] sm:$0xff]
  %v1887 = vld [vmem:[%s6 + $0x18] sm:$0xff]
  %v1888 = vld [vmem:[#allocation5] ss:$4 sm:$0xff]
  %v1889 = vmul.f32 %v1888, 0.5
  %v1890 = vtanh.pop %v1889
  %v1891 = vadd.f32 %v1890, 1.0
  %v1892 = vmul.f32 %v1891, 0.5
  %v1893 = vtanh.pop %v1888
  %v1894 = vmul.f32 %v1892, 0.0
  %1896 = vrot.lane.b32.xlu0 %v1893, 64
  %v1897 = vpop.permute.xlu0 %1896
  %v1899 = vmul.f32 %v1892, %v1897
  %1901 = vrot.lane.b32.xlu0 %v1899, 32
  %v1902 = vpop.permute.xlu0 %1901
  %v1904 = vadd.f32 %v1894, %v1902
  %v1905 = vtanh.pop %v1904
  %1907 = vrot.lane.b32.xlu0 %v1905, 64
  %v1908 = vpop.permute.xlu0 %1907
  %v1910 = vmul.f32 %v1892, %v1908
  %s1911 = scalar_lea.vmem [#allocation5], 1
  %v1912 = vld [vmem:[%s1911] ss:$4 sm:$0xff]
  %1914 = vrot.lane.b32.xlu0 %v1910, 32
  %v1915 = vpop.permute.xlu0 %1914
  %v1916 = vsel %vm447, %v1915, 0
  %1918 = vmatprep.subr.mxu0 0.0
  %1919 = vmatpush1.msra.mxu0 0.0
  %1920 = vmatprep.subr.mxu0 0.0
  %1921 = vmatpush1.msra.mxu0 0.0
  %1922 = vmatprep.subr.mxu0 0.0
  %1923 = vmatpush1.msra.mxu0 0.0
  %1924 = vmatprep.subr.mxu0 0.0
  %1925 = vmatpush1.msra.mxu0 0.0
  %1926 = vmatprep.subr.mxu0 0.0
  %1927 = vmatpush1.msra.mxu0 0.0
  %1928 = vmatprep.subr.mxu0 0.0
  %1929 = vmatpush1.msra.mxu0 0.0
  %1930 = vmatprep.subr.mxu0 0.0
  %1931 = vmatpush1.msra.mxu0 0.0
  %1932 = vmatprep.subr.mxu0 0.0
  %1933 = vmatpush1.msra.mxu0 0.0
  %1934 = vmatprep.subr.mxu0 0.0
  %1935 = vmatpush1.msra.mxu0 0.0
  %1936 = vmatprep.subr.mxu0 0.0
  %1937 = vmatpush1.msra.mxu0 0.0
  %1938 = vmatprep.subr.mxu0 0.0
  %1939 = vmatpush1.msra.mxu0 0.0
  %1940 = vmatprep.subr.mxu0 0.0
  %1941 = vmatpush1.msra.mxu0 0.0
  %1942 = vmatprep.subr.mxu0 0.0
  %1943 = vmatpush1.msra.mxu0 %v1887
  %1944 = vmatprep.subr.mxu0 0.0
  %1945 = vmatpush1.msra.mxu0 %v1886
  %1946 = vmatprep.subr.mxu0 0.0
  %1947 = vmatpush1.msra.mxu0 %v1885
  %1948 = vmatprep.subr.mxu0 0.0
  %1949 = vmatpush1.msra.mxu0 %v1884
  %1950 = vmatprep.subr.mxu0 0.0
  %1951 = vmatpush2.msra.mxu0 0.0
  %1952 = vmatprep.subr.mxu0 0.0
  %1953 = vmatpush2.msra.mxu0 0.0
  %1954 = vmatprep.subr.mxu0 0.0
  %1955 = vmatpush2.msra.mxu0 0.0
  %1956 = vmatprep.subr.mxu0 0.0
  %1957 = vmatpush2.msra.mxu0 0.0
  %1958 = vmatprep.subr.mxu0 0.0
  %1959 = vmatpush2.msra.mxu0 0.0
  %1960 = vmatprep.subr.mxu0 0.0
  %1961 = vmatpush2.msra.mxu0 0.0
  %1962 = vmatprep.subr.mxu0 0.0
  %1963 = vmatpush2.msra.mxu0 0.0
  %1964 = vmatprep.subr.mxu0 0.0
  %1965 = vmatpush2.msra.mxu0 0.0
  %1966 = vmatprep.subr.mxu0 0.0
  %1967 = vmatpush2.msra.mxu0 0.0
  %1968 = vmatprep.subr.mxu0 0.0
  %1969 = vmatpush2.msra.mxu0 0.0
  %1970 = vmatprep.subr.mxu0 0.0
  %1971 = vmatpush2.msra.mxu0 0.0
  %1972 = vmatprep.subr.mxu0 0.0
  %1973 = vmatpush2.msra.mxu0 0.0
  %1974 = vmatprep.subr.mxu0 0.0
  %1975 = vmatpush2.msra.mxu0 0.0
  %1976 = vmatprep.subr.mxu0 0.0
  %1977 = vmatpush2.msra.mxu0 0.0
  %1978 = vmatprep.subr.mxu0 0.0
  %1979 = vmatpush2.msra.mxu0 0.0
  %1980 = vmatprep.subr.mxu0 0.0
  %1981 = vmatpush2.msra.mxu0 0.0
  %1982 = vmatprep.mubr.f32.mxu0 0.0
  %1983 = vmatmul.mubr.f32.gmra.mxu0 %v1916
  %v1984 = vpop.f32.mrf.mxu0
  %v1985 = vadd.f32 0.0, %v1984
  %v1986 = vpop.f32.mrf.mxu0
  %1987 = vdwg.mxu0
  %v1988 = vadd.f32 %v1912, %v1985
  %v1989 = vmul.f32 %v1988, 0.5
  %v1990 = vtanh.pop %v1989
  %v1991 = vadd.f32 %v1990, 1.0
  %v1992 = vmul.f32 %v1991, 0.5
  %v1993 = vtanh.pop %v1988
  %v1994 = vmul.f32 %v1992, %v1904
  %1996 = vrot.lane.b32.xlu0 %v1993, 64
  %v1997 = vpop.permute.xlu0 %1996
  %v1999 = vmul.f32 %v1992, %v1997
  %2001 = vrot.lane.b32.xlu0 %v1999, 32
  %v2002 = vpop.permute.xlu0 %2001
  %v2004 = vadd.f32 %v1994, %v2002
  %v2005 = vtanh.pop %v2004
  %2007 = vrot.lane.b32.xlu0 %v2005, 64
  %v2008 = vpop.permute.xlu0 %2007
  %v2010 = vmul.f32 %v1992, %v2008
  %s2011 = scalar_lea.vmem [#allocation5], 2
  %v2012 = vld [vmem:[%s2011] ss:$4 sm:$0xff]
  %2014 = vrot.lane.b32.xlu0 %v2010, 32
  %v2015 = vpop.permute.xlu0 %2014
  %v2016 = vsel %vm447, %v2015, 0
  %2018 = vmatprep.subr.mxu0 0.0
  %2019 = vmatpush1.msra.mxu0 0.0
  %2020 = vmatprep.subr.mxu0 0.0
  %2021 = vmatpush1.msra.mxu0 0.0
  %2022 = vmatprep.subr.mxu0 0.0
  %2023 = vmatpush1.msra.mxu0 0.0
  %2024 = vmatprep.subr.mxu0 0.0
  %2025 = vmatpush1.msra.mxu0 0.0
  %2026 = vmatprep.subr.mxu0 0.0
  %2027 = vmatpush1.msra.mxu0 0.0
  %2028 = vmatprep.subr.mxu0 0.0
  %2029 = vmatpush1.msra.mxu0 0.0
  %2030 = vmatprep.subr.mxu0 0.0
  %2031 = vmatpush1.msra.mxu0 0.0
  %2032 = vmatprep.subr.mxu0 0.0
  %2033 = vmatpush1.msra.mxu0 0.0
  %2034 = vmatprep.subr.mxu0 0.0
  %2035 = vmatpush1.msra.mxu0 0.0
  %2036 = vmatprep.subr.mxu0 0.0
  %2037 = vmatpush1.msra.mxu0 0.0
  %2038 = vmatprep.subr.mxu0 0.0
  %2039 = vmatpush1.msra.mxu0 0.0
  %2040 = vmatprep.subr.mxu0 0.0
  %2041 = vmatpush1.msra.mxu0 0.0
  %2042 = vmatprep.subr.mxu0 0.0
  %2043 = vmatpush1.msra.mxu0 %v1887
  %2044 = vmatprep.subr.mxu0 0.0
  %2045 = vmatpush1.msra.mxu0 %v1886
  %2046 = vmatprep.subr.mxu0 0.0
  %2047 = vmatpush1.msra.mxu0 %v1885
  %2048 = vmatprep.subr.mxu0 0.0
  %2049 = vmatpush1.msra.mxu0 %v1884
  %2050 = vmatprep.subr.mxu0 0.0
  %2051 = vmatpush2.msra.mxu0 0.0
  %2052 = vmatprep.subr.mxu0 0.0
  %2053 = vmatpush2.msra.mxu0 0.0
  %2054 = vmatprep.subr.mxu0 0.0
  %2055 = vmatpush2.msra.mxu0 0.0
  %2056 = vmatprep.subr.mxu0 0.0
  %2057 = vmatpush2.msra.mxu0 0.0
  %2058 = vmatprep.subr.mxu0 0.0
  %2059 = vmatpush2.msra.mxu0 0.0
  %2060 = vmatprep.subr.mxu0 0.0
  %2061 = vmatpush2.msra.mxu0 0.0
  %2062 = vmatprep.subr.mxu0 0.0
  %2063 = vmatpush2.msra.mxu0 0.0
  %2064 = vmatprep.subr.mxu0 0.0
  %2065 = vmatpush2.msra.mxu0 0.0
  %2066 = vmatprep.subr.mxu0 0.0
  %2067 = vmatpush2.msra.mxu0 0.0
  %2068 = vmatprep.subr.mxu0 0.0
  %2069 = vmatpush2.msra.mxu0 0.0
  %2070 = vmatprep.subr.mxu0 0.0
  %2071 = vmatpush2.msra.mxu0 0.0
  %2072 = vmatprep.subr.mxu0 0.0
  %2073 = vmatpush2.msra.mxu0 0.0
  %2074 = vmatprep.subr.mxu0 0.0
  %2075 = vmatpush2.msra.mxu0 0.0
  %2076 = vmatprep.subr.mxu0 0.0
  %2077 = vmatpush2.msra.mxu0 0.0
  %2078 = vmatprep.subr.mxu0 0.0
  %2079 = vmatpush2.msra.mxu0 0.0
  %2080 = vmatprep.subr.mxu0 0.0
  %2081 = vmatpush2.msra.mxu0 0.0
  %2082 = vmatprep.mubr.f32.mxu0 0.0
  %2083 = vmatmul.mubr.f32.gmra.mxu0 %v2016
  %v2084 = vpop.f32.mrf.mxu0
  %v2085 = vadd.f32 0.0, %v2084
  %v2086 = vpop.f32.mrf.mxu0
  %2087 = vdwg.mxu0
  %v2088 = vadd.f32 %v2012, %v2085
  %v2089 = vmul.f32 %v2088, 0.5
  %v2090 = vtanh.pop %v2089
  %v2091 = vadd.f32 %v2090, 1.0
  %v2092 = vmul.f32 %v2091, 0.5
  %v2093 = vtanh.pop %v2088
  %v2094 = vmul.f32 %v2092, %v2004
  %2096 = vrot.lane.b32.xlu0 %v2093, 64
  %v2097 = vpop.permute.xlu0 %2096
  %v2099 = vmul.f32 %v2092, %v2097
  %2101 = vrot.lane.b32.xlu0 %v2099, 32
  %v2102 = vpop.permute.xlu0 %2101
  %v2104 = vadd.f32 %v2094, %v2102
  %v2105 = vtanh.pop %v2104
  %2107 = vrot.lane.b32.xlu0 %v2105, 64
  %v2108 = vpop.permute.xlu0 %2107
  %v2110 = vmul.f32 %v2092, %v2108
  %s2111 = scalar_lea.vmem [#allocation5], 3
  %v2112 = vld [vmem:[%s2111] ss:$4 sm:$0xff]
  %2114 = vrot.lane.b32.xlu0 %v2110, 32
  %v2115 = vpop.permute.xlu0 %2114
  %v2116 = vsel %vm447, %v2115, 0
  %2118 = vmatprep.subr.mxu0 0.0
  %2119 = vmatpush1.msra.mxu0 0.0
  %2120 = vmatprep.subr.mxu0 0.0
  %2121 = vmatpush1.msra.mxu0 0.0
  %2122 = vmatprep.subr.mxu0 0.0
  %2123 = vmatpush1.msra.mxu0 0.0
  %2124 = vmatprep.subr.mxu0 0.0
  %2125 = vmatpush1.msra.mxu0 0.0
  %2126 = vmatprep.subr.mxu0 0.0
  %2127 = vmatpush1.msra.mxu0 0.0
  %2128 = vmatprep.subr.mxu0 0.0
  %2129 = vmatpush1.msra.mxu0 0.0
  %2130 = vmatprep.subr.mxu0 0.0
  %2131 = vmatpush1.msra.mxu0 0.0
  %2132 = vmatprep.subr.mxu0 0.0
  %2133 = vmatpush1.msra.mxu0 0.0
  %2134 = vmatprep.subr.mxu0 0.0
  %2135 = vmatpush1.msra.mxu0 0.0
  %2136 = vmatprep.subr.mxu0 0.0
  %2137 = vmatpush1.msra.mxu0 0.0
  %2138 = vmatprep.subr.mxu0 0.0
  %2139 = vmatpush1.msra.mxu0 0.0
  %2140 = vmatprep.subr.mxu0 0.0
  %2141 = vmatpush1.msra.mxu0 0.0
  %2142 = vmatprep.subr.mxu0 0.0
  %2143 = vmatpush1.msra.mxu0 %v1887
  %2144 = vmatprep.subr.mxu0 0.0
  %2145 = vmatpush1.msra.mxu0 %v1886
  %2146 = vmatprep.subr.mxu0 0.0
  %2147 = vmatpush1.msra.mxu0 %v1885
  %2148 = vmatprep.subr.mxu0 0.0
  %2149 = vmatpush1.msra.mxu0 %v1884
  %2150 = vmatprep.subr.mxu0 0.0
  %2151 = vmatpush2.msra.mxu0 0.0
  %2152 = vmatprep.subr.mxu0 0.0
  %2153 = vmatpush2.msra.mxu0 0.0
  %2154 = vmatprep.subr.mxu0 0.0
  %2155 = vmatpush2.msra.mxu0 0.0
  %2156 = vmatprep.subr.mxu0 0.0
  %2157 = vmatpush2.msra.mxu0 0.0
  %2158 = vmatprep.subr.mxu0 0.0
  %2159 = vmatpush2.msra.mxu0 0.0
  %2160 = vmatprep.subr.mxu0 0.0
  %2161 = vmatpush2.msra.mxu0 0.0
  %2162 = vmatprep.subr.mxu0 0.0
  %2163 = vmatpush2.msra.mxu0 0.0
  %2164 = vmatprep.subr.mxu0 0.0
  %2165 = vmatpush2.msra.mxu0 0.0
  %2166 = vmatprep.subr.mxu0 0.0
  %2167 = vmatpush2.msra.mxu0 0.0
  %2168 = vmatprep.subr.mxu0 0.0
  %2169 = vmatpush2.msra.mxu0 0.0
  %2170 = vmatprep.subr.mxu0 0.0
  %2171 = vmatpush2.msra.mxu0 0.0
  %2172 = vmatprep.subr.mxu0 0.0
  %2173 = vmatpush2.msra.mxu0 0.0
  %2174 = vmatprep.subr.mxu0 0.0
  %2175 = vmatpush2.msra.mxu0 0.0
  %2176 = vmatprep.subr.mxu0 0.0
  %2177 = vmatpush2.msra.mxu0 0.0
  %2178 = vmatprep.subr.mxu0 0.0
  %2179 = vmatpush2.msra.mxu0 0.0
  %2180 = vmatprep.subr.mxu0 0.0
  %2181 = vmatpush2.msra.mxu0 0.0
  %2182 = vmatprep.mubr.f32.mxu0 0.0
  %2183 = vmatmul.mubr.f32.gmra.mxu0 %v2116
  %v2184 = vpop.f32.mrf.mxu0
  %v2185 = vadd.f32 0.0, %v2184
  %v2186 = vpop.f32.mrf.mxu0
  %2187 = vdwg.mxu0
  %v2188 = vadd.f32 %v2112, %v2185
  %v2189 = vmul.f32 %v2188, 0.5
  %v2190 = vtanh.pop %v2189
  %v2191 = vadd.f32 %v2190, 1.0
  %v2192 = vmul.f32 %v2191, 0.5
  %v2193 = vtanh.pop %v2188
  %v2194 = vmul.f32 %v2192, %v2104
  %2196 = vrot.lane.b32.xlu0 %v2193, 64
  %v2197 = vpop.permute.xlu0 %2196
  %v2199 = vmul.f32 %v2192, %v2197
  %2201 = vrot.lane.b32.xlu0 %v2199, 32
  %v2202 = vpop.permute.xlu0 %2201
  %v2204 = vadd.f32 %v2194, %v2202
  %v2205 = vtanh.pop %v2204
  %2207 = vrot.lane.b32.xlu0 %v2205, 64
  %v2208 = vpop.permute.xlu0 %2207
  %v2210 = vmul.f32 %v2192, %v2208
  %s2211 = scalar_lea.vmem [#allocation4], 3
  %v2212 = vld [vmem:[%s2211] ss:$4 sm:$0xff]
  %v2213 = vld [vmem:[%s8] sm:$0xff]
  %v2214 = vld [vmem:[%s8 + $0x8] sm:$0xff]
  %v2215 = vld [vmem:[%s8 + $0x10] sm:$0xff]
  %v2216 = vld [vmem:[%s8 + $0x18] sm:$0xff]
  %v2217 = vld [vmem:[%s9] sm:$0x1]
  %v2219 = vlaneseq
  %v2220 = vshrl.u32 %v2219, 7
  %v2221 = vsub.s32 0, %v2220
  %v2222 = vrot.slane %v2217, %v2221
  %v2225 = vsel %vm447, %v2212, 0
  %2227 = vmatprep.subr.mxu0 0.0
  %2228 = vmatpush1.msra.mxu0 0.0
  %2229 = vmatprep.subr.mxu0 0.0
  %2230 = vmatpush1.msra.mxu0 0.0
  %2231 = vmatprep.subr.mxu0 0.0
  %2232 = vmatpush1.msra.mxu0 0.0
  %2233 = vmatprep.subr.mxu0 0.0
  %2234 = vmatpush1.msra.mxu0 0.0
  %2235 = vmatprep.subr.mxu0 0.0
  %2236 = vmatpush1.msra.mxu0 0.0
  %2237 = vmatprep.subr.mxu0 0.0
  %2238 = vmatpush1.msra.mxu0 0.0
  %2239 = vmatprep.subr.mxu0 0.0
  %2240 = vmatpush1.msra.mxu0 0.0
  %2241 = vmatprep.subr.mxu0 0.0
  %2242 = vmatpush1.msra.mxu0 0.0
  %2243 = vmatprep.subr.mxu0 0.0
  %2244 = vmatpush1.msra.mxu0 0.0
  %2245 = vmatprep.subr.mxu0 0.0
  %2246 = vmatpush1.msra.mxu0 0.0
  %2247 = vmatprep.subr.mxu0 0.0
  %2248 = vmatpush1.msra.mxu0 0.0
  %2249 = vmatprep.subr.mxu0 0.0
  %2250 = vmatpush1.msra.mxu0 0.0
  %2251 = vmatprep.subr.mxu0 0.0
  %2252 = vmatpush1.msra.mxu0 %v2216
  %2253 = vmatprep.subr.mxu0 0.0
  %2254 = vmatpush1.msra.mxu0 %v2215
  %2255 = vmatprep.subr.mxu0 0.0
  %2256 = vmatpush1.msra.mxu0 %v2214
  %2257 = vmatprep.subr.mxu0 0.0
  %2258 = vmatpush1.msra.mxu0 %v2213
  %2259 = vmatprep.subr.mxu0 0.0
  %2260 = vmatpush2.msra.mxu0 0.0
  %2261 = vmatprep.subr.mxu0 0.0
  %2262 = vmatpush2.msra.mxu0 0.0
  %2263 = vmatprep.subr.mxu0 0.0
  %2264 = vmatpush2.msra.mxu0 0.0
  %2265 = vmatprep.subr.mxu0 0.0
  %2266 = vmatpush2.msra.mxu0 0.0
  %2267 = vmatprep.subr.mxu0 0.0
  %2268 = vmatpush2.msra.mxu0 0.0
  %2269 = vmatprep.subr.mxu0 0.0
  %2270 = vmatpush2.msra.mxu0 0.0
  %2271 = vmatprep.subr.mxu0 0.0
  %2272 = vmatpush2.msra.mxu0 0.0
  %2273 = vmatprep.subr.mxu0 0.0
  %2274 = vmatpush2.msra.mxu0 0.0
  %2275 = vmatprep.subr.mxu0 0.0
  %2276 = vmatpush2.msra.mxu0 0.0
  %2277 = vmatprep.subr.mxu0 0.0
  %2278 = vmatpush2.msra.mxu0 0.0
  %2279 = vmatprep.subr.mxu0 0.0
  %2280 = vmatpush2.msra.mxu0 0.0
  %2281 = vmatprep.subr.mxu0 0.0
  %2282 = vmatpush2.msra.mxu0 0.0
  %2283 = vmatprep.subr.mxu0 0.0
  %2284 = vmatpush2.msra.mxu0 0.0
  %2285 = vmatprep.subr.mxu0 0.0
  %2286 = vmatpush2.msra.mxu0 0.0
  %2287 = vmatprep.subr.mxu0 0.0
  %2288 = vmatpush2.msra.mxu0 0.0
  %2289 = vmatprep.subr.mxu0 0.0
  %2290 = vmatpush2.msra.mxu0 0.0
  %2291 = vmatprep.mubr.f32.mxu0 0.0
  %2292 = vmatmul.mubr.f32.gmra.mxu0 %v2225
  %v2293 = vpop.f32.mrf.mxu0
  %v2294 = vadd.f32 %v2222, %v2293
  %v2295 = vpop.f32.mrf.mxu0
  %2296 = vdwg.mxu0
  %v2297 = vmul.f32 %v2294, 0.5
  %v2298 = vtanh.pop %v2297
  %v2299 = vadd.f32 %v2298, 1.0
  %v2300 = vmul.f32 %v2299, 0.5
  %v2301 = vtanh.pop %v2294
  %2303 = vrot.lane.b32.xlu0 %v2301, 64
  %v2304 = vpop.permute.xlu0 %2303
  %v2306 = vmul.f32 %v2300, %v2304
  %v2307 = vtanh.pop %v2306
  %2309 = vrot.lane.b32.xlu0 %v2307, 96
  %v2310 = vpop.permute.xlu0 %2309
  %v2312 = vmul.f32 %v2300, %v2310
  %2314 = vrot.lane.b32.xlu0 %v2210, 32
  %v2315 = vpop.permute.xlu0 %2314
  %2318 = vrot.lane.b32.xlu0 %v2312, 64
  %v2319 = vpop.permute.xlu0 %2318
  %v2321 = vsel %vm447, %v2315, %v2319
  %v2322 = vld [vmem:[%s10] sm:$0xff]
  %v2323 = vld [vmem:[%s10 + $0x8] sm:$0xff]
  %v2324 = vld [vmem:[%s10 + $0x10] sm:$0xff]
  %v2325 = vld [vmem:[%s10 + $0x18] sm:$0xff]
  %v2326 = vld [vmem:[%s10 + $0x20] sm:$0xff]
  %v2327 = vld [vmem:[%s10 + $0x28] sm:$0xff]
  %v2328 = vld [vmem:[%s10 + $0x30] sm:$0xff]
  %v2329 = vld [vmem:[%s10 + $0x38] sm:$0xff]
  %v2330 = vld [vmem:[%s11] sm:$0x1]
  %v2332 = vlaneseq
  %v2333 = vshrl.u32 %v2332, 7
  %v2334 = vsub.s32 0, %v2333
  %v2335 = vrot.slane %v2330, %v2334
  %vm2337 = vcmask 523264
  %v2339 = vsel %vm2337, %v2321, 0
  %2341 = vmatprep.subr.mxu0 0.0
  %2342 = vmatpush1.msra.mxu0 0.0
  %2343 = vmatprep.subr.mxu0 0.0
  %2344 = vmatpush1.msra.mxu0 0.0
  %2345 = vmatprep.subr.mxu0 0.0
  %2346 = vmatpush1.msra.mxu0 0.0
  %2347 = vmatprep.subr.mxu0 0.0
  %2348 = vmatpush1.msra.mxu0 0.0
  %2349 = vmatprep.subr.mxu0 0.0
  %2350 = vmatpush1.msra.mxu0 0.0
  %2351 = vmatprep.subr.mxu0 0.0
  %2352 = vmatpush1.msra.mxu0 0.0
  %2353 = vmatprep.subr.mxu0 0.0
  %2354 = vmatpush1.msra.mxu0 0.0
  %2355 = vmatprep.subr.mxu0 0.0
  %2356 = vmatpush1.msra.mxu0 0.0
  %2357 = vmatprep.subr.mxu0 0.0
  %2358 = vmatpush1.msra.mxu0 %v2329
  %2359 = vmatprep.subr.mxu0 0.0
  %2360 = vmatpush1.msra.mxu0 %v2328
  %2361 = vmatprep.subr.mxu0 0.0
  %2362 = vmatpush1.msra.mxu0 %v2327
  %2363 = vmatprep.subr.mxu0 0.0
  %2364 = vmatpush1.msra.mxu0 %v2326
  %2365 = vmatprep.subr.mxu0 0.0
  %2366 = vmatpush1.msra.mxu0 %v2325
  %2367 = vmatprep.subr.mxu0 0.0
  %2368 = vmatpush1.msra.mxu0 %v2324
  %2369 = vmatprep.subr.mxu0 0.0
  %2370 = vmatpush1.msra.mxu0 %v2323
  %2371 = vmatprep.subr.mxu0 0.0
  %2372 = vmatpush1.msra.mxu0 %v2322
  %2373 = vmatprep.subr.mxu0 0.0
  %2374 = vmatpush2.msra.mxu0 0.0
  %2375 = vmatprep.subr.mxu0 0.0
  %2376 = vmatpush2.msra.mxu0 0.0
  %2377 = vmatprep.subr.mxu0 0.0
  %2378 = vmatpush2.msra.mxu0 0.0
  %2379 = vmatprep.subr.mxu0 0.0
  %2380 = vmatpush2.msra.mxu0 0.0
  %2381 = vmatprep.subr.mxu0 0.0
  %2382 = vmatpush2.msra.mxu0 0.0
  %2383 = vmatprep.subr.mxu0 0.0
  %2384 = vmatpush2.msra.mxu0 0.0
  %2385 = vmatprep.subr.mxu0 0.0
  %2386 = vmatpush2.msra.mxu0 0.0
  %2387 = vmatprep.subr.mxu0 0.0
  %2388 = vmatpush2.msra.mxu0 0.0
  %2389 = vmatprep.subr.mxu0 0.0
  %2390 = vmatpush2.msra.mxu0 0.0
  %2391 = vmatprep.subr.mxu0 0.0
  %2392 = vmatpush2.msra.mxu0 0.0
  %2393 = vmatprep.subr.mxu0 0.0
  %2394 = vmatpush2.msra.mxu0 0.0
  %2395 = vmatprep.subr.mxu0 0.0
  %2396 = vmatpush2.msra.mxu0 0.0
  %2397 = vmatprep.subr.mxu0 0.0
  %2398 = vmatpush2.msra.mxu0 0.0
  %2399 = vmatprep.subr.mxu0 0.0
  %2400 = vmatpush2.msra.mxu0 0.0
  %2401 = vmatprep.subr.mxu0 0.0
  %2402 = vmatpush2.msra.mxu0 0.0
  %2403 = vmatprep.subr.mxu0 0.0
  %2404 = vmatpush2.msra.mxu0 0.0
  %2405 = vmatprep.mubr.f32.mxu0 0.0
  %2406 = vmatmul.mubr.f32.gmra.mxu0 %v2339
  %v2407 = vpop.f32.mrf.mxu0
  %v2408 = vadd.f32 %v2335, %v2407
  %v2409 = vpop.f32.mrf.mxu0
  %2410 = vdwg.mxu0
  %2411 = vst.msk [vmem:[%s12] sm:$0xff] %vm447, %v2408
  // Predicated region
  $region50: #{asset_encoder_forward.1} parent=0 // pred_check
    _
  $region51: #{asset_encoder_forward.1} parent=0 // pred_check_branch
    %2413 = sbr.rel (0) target = $region53
  $region52: #{asset_encoder_forward.1} parent=0 // pred_region
    _
  $region53: #{asset_encoder_forward.1} parent=0 // pred_fallthru
    _
  // Predicated region
  $region54: #{asset_encoder_forward.1} parent=0 // pred_check
    _
  $region55: #{asset_encoder_forward.1} parent=0 // pred_check_branch
    %2415 = sbr.rel (0) target = $region57
  $region56: #{asset_encoder_forward.1} parent=0 // pred_region
    _
  $region57: #{asset_encoder_forward.1} parent=0 // pred_fallthru
    _

</llo_original>
